<compile_context>
chip_gen: v7x
topology: tpu7x:2x2x1
jax: 0.10.0
libtpu: 0.0.40
codegen_flags: <defaults>
</compile_context>

<pallas_src>
import jax
import jax.numpy as jnp
from jax.experimental import pallas as pl
from jax.experimental.pallas import tpu as pltpu

BN_EPS = 1e-5
NUM_CLASSES = 2
NUM_CLASSES_PAD = 128   # lane-dense padded classifier width (sliced to 2 outside)


# ---------------------------------------------------------------------------
# Per-view BatchNorm on a folded [2B, N] activation (training mode, biased var)
# ---------------------------------------------------------------------------

def _bn_per_view(h, b, gamma=None, beta=None):
    """h: [2B, N] f32, rows [0:b] are view 1, rows [b:2b] are view 2.
    Batch statistics are computed per view; normalization applied row-wise via
    a broadcast select, so the matmul-folded layout is preserved."""
    inv_b = jnp.float32(1.0 / b)

    def stats(hv):
        mean = jnp.sum(hv, axis=0, keepdims=True) * inv_b
        ex2 = jnp.sum(hv * hv, axis=0, keepdims=True) * inv_b
        var = jnp.maximum(ex2 - mean * mean, 0.0)
        return mean, var

    m1, v1 = stats(h[:b])
    m2, v2 = stats(h[b:])

    row = jax.lax.broadcasted_iota(jnp.int32, (h.shape[0], 1), 0)
    in_view2 = row >= b
    mean = jnp.where(in_view2, m2, m1)          # [2B, N]
    var = jnp.where(in_view2, v2, v1)           # [2B, N]

    scale = jax.lax.rsqrt(var + BN_EPS)
    if gamma is not None:
        scale = scale * gamma
    y = (h - mean) * scale
    if beta is not None:
        y = y + beta
    return y


# ---------------------------------------------------------------------------
# Fused kernel: encoder -> projector -> predictor, both views in one pass
# ---------------------------------------------------------------------------

def simsiam_kernel(
        x1_ref, x2_ref,                           # [B, F] f32 (one view each)
        w_feat_ref, w_cls_ref, b_cls_ref,         # synthetic encoder
        pw1_ref, pg1_ref, pb1_ref,                # projector block 1
        pw2_ref, pg2_ref, pb2_ref,                # projector block 2
        pw3_ref,                                  # projector block 3 (bias is a
                                                  #  fwd no-op before BN(affine=False))
        qw1_ref, qg1_ref, qb1_ref,                # predictor block 1
        qw2_ref, qb2_ref,                         # predictor block 2
        out_ref, p_ref, z_ref,                    # [2B,128] f32, [2B,dim] f32, [2B,dim] bf16
        xbuf_ref):                                # VMEM scratch [2B, F] bf16
    b = x1_ref.shape[0]

    # Fold both views into one [2B, F] bf16 operand (full MXU row occupancy);
    # the f32->bf16 input cast happens here, hidden under the first matmul.
    xbuf_ref[:b, :] = x1_ref[...].astype(jnp.bfloat16)
    xbuf_ref[b:, :] = x2_ref[...].astype(jnp.bfloat16)
    x = xbuf_ref[...]

    # ---- encoder (synthetic stand-in; see TODO at top of file) ----
    feat = jnp.maximum(
        jnp.dot(x, w_feat_ref[...], preferred_element_type=jnp.float32), 0.0)
    feat_bf = feat.astype(jnp.bfloat16)            # hoisted cast, reused twice
    out_ref[...] = (
        jnp.dot(feat_bf, w_cls_ref[...], preferred_element_type=jnp.float32)
        + b_cls_ref[...])                          # [2B, 128] (padded, lane-dense)

    # ---- projector: Lin(no bias) BN ReLU | Lin(no bias) BN ReLU | Lin BN(no affine)
    h = jnp.dot(feat_bf, pw1_ref[...], preferred_element_type=jnp.float32)
    h = jnp.maximum(_bn_per_view(h, b, pg1_ref[...], pb1_ref[...]), 0.0)
    h = jnp.dot(h.astype(jnp.bfloat16), pw2_ref[...],
                preferred_element_type=jnp.float32)
    h = jnp.maximum(_bn_per_view(h, b, pg2_ref[...], pb2_ref[...]), 0.0)
    h = jnp.dot(h.astype(jnp.bfloat16), pw3_ref[...],
                preferred_element_type=jnp.float32)
    z = _bn_per_view(h, b)                         # BatchNorm1d(affine=False)
    z_bf = z.astype(jnp.bfloat16)                  # single cast: writeback + next dot
    z_ref[...] = z_bf

    # ---- predictor: Lin(no bias) BN ReLU | Lin(+bias)
    h = jnp.dot(z_bf, qw1_ref[...], preferred_element_type=jnp.float32)
    h = jnp.maximum(_bn_per_view(h, b, qg1_ref[...], qb1_ref[...]), 0.0)
    p_ref[...] = (
        jnp.dot(h.astype(jnp.bfloat16), qw2_ref[...],
                preferred_element_type=jnp.float32)
        + qb2_ref[...])


# ---------------------------------------------------------------------------
# Wrapper
# ---------------------------------------------------------------------------

def prepare_weights(params):
    """One-time preparation OUTSIDE the per-call path: bf16 master copies of the
    matmul weights (halves HBM/VMEM traffic) and lane-dense padding of the
    2-class classifier to 128 output lanes.  BN params / biases stay f32."""
    bf16 = lambda a: a.astype(jnp.bfloat16)
    w_cls = jnp.pad(params["enc_w_cls"],
                    ((0, 0), (0, NUM_CLASSES_PAD - NUM_CLASSES)))
    b_cls = jnp.pad(params["enc_b_cls"],
                    ((0, 0), (0, NUM_CLASSES_PAD - NUM_CLASSES)))
    return (
        bf16(params["enc_w_feat"]), bf16(w_cls), b_cls,
        bf16(params["proj_w1"]), params["proj_g1"], params["proj_b1"],
        bf16(params["proj_w2"]), params["proj_g2"], params["proj_b2"],
        bf16(params["proj_w3"]),
        bf16(params["pred_w1"]), params["pred_g1"], params["pred_b1"],
        bf16(params["pred_w2"]), params["pred_b2"],
    )


def simsiam_forward(x1_nchw, x2_nchw, weights):
    b = x1_nchw.shape[0]
    f = x1_nchw.shape[1] * x1_nchw.shape[2] * x1_nchw.shape[3]
    dim = weights[9].shape[-1]              # proj_w3: [prev_dim, dim]

    # f32 views, reshape only (no stack / cast HBM pass before the kernel).
    x1 = x1_nchw.reshape(b, f)
    x2 = x2_nchw.reshape(b, f)

    vmem_spec = pl.BlockSpec(memory_space=pltpu.MemorySpace.VMEM)
    n_in = 2 + len(weights)

    out_pad, p_all, z_all = pl.pallas_call(
        simsiam_kernel,
        out_shape=(
            jax.ShapeDtypeStruct((2 * b, NUM_CLASSES_PAD), jnp.float32),  # out (padded)
            jax.ShapeDtypeStruct((2 * b, dim), jnp.float32),              # p
            jax.ShapeDtypeStruct((2 * b, dim), jnp.bfloat16),             # z (stop-grad)
        ),
        in_specs=[vmem_spec] * n_in,
        out_specs=(vmem_spec, vmem_spec, vmem_spec),
        scratch_shapes=[pltpu.VMEM((2 * b, f), jnp.bfloat16)],
        compiler_params=pltpu.CompilerParams(
            vmem_limit_bytes=32 * 1024 * 1024),
    )(x1, x2, *weights)

    out1 = out_pad[:b, :NUM_CLASSES]
    out2 = out_pad[b:, :NUM_CLASSES]
    p1, p2 = p_all[:b], p_all[b:]
    # z1 / z2 are detached in PyTorch; forward values identical.
    z1 = jax.lax.stop_gradient(z_all[:b])
    z2 = jax.lax.stop_gradient(z_all[b:])
    return out1, out2, p1, p2, z1, z2


# ---------------------------------------------------------------------------
# Deterministic parameter construction (f32 master copies)
# ---------------------------------------------------------------------------

def init_params(key, in_features, prev_dim, dim, pred_dim, num_classes=NUM_CLASSES):
    ks = jax.random.split(key, 8)

    def w(k, fan_in, fan_out):
        scale = 1.0 / jnp.sqrt(jnp.float32(fan_in))
        return jax.random.normal(k, (fan_in, fan_out), jnp.float32) * scale

    return {
        # synthetic encoder
        "enc_w_feat": w(ks[0], in_features, prev_dim),
        "enc_w_cls": w(ks[1], prev_dim, num_classes),
        "enc_b_cls": jnp.zeros((1, num_classes), jnp.float32),
        # projector
        "proj_w1": w(ks[2], prev_dim, prev_dim),
        "proj_g1": jnp.ones((1, prev_dim), jnp.float32),
        "proj_b1": jnp.zeros((1, prev_dim), jnp.float32),
        "proj_w2": w(ks[3], prev_dim, prev_dim),
        "proj_g2": jnp.ones((1, prev_dim), jnp.float32),
        "proj_b2": jnp.zeros((1, prev_dim), jnp.float32),
        "proj_w3": w(ks[4], prev_dim, dim),
        # proj_b3 exists in PyTorch (grad frozen) but is a forward no-op before
        # BatchNorm1d(affine=False); kept only for parameter parity.
        "proj_b3": jnp.zeros((1, dim), jnp.float32),
        # predictor
        "pred_w1": w(ks[5], dim, pred_dim),
        "pred_g1": jnp.ones((1, pred_dim), jnp.float32),
        "pred_b1": jnp.zeros((1, pred_dim), jnp.float32),
        "pred_w2": w(ks[6], pred_dim, dim),
        "pred_b2": jnp.zeros((1, dim), jnp.float32),
    }


# ---------------------------------------------------------------------------
# Main
# ---------------------------------------------------------------------------

if __name__ == "__main__":
    B, C, H, W = 2, 4, 16, 16                 # small image views (F = 1024)
    PREV_DIM, DIM, PRED_DIM = 256, 256, 256   # multiples of 256 (v6e/v7x MXU friendly)

    key = jax.random.PRNGKey(0)
    k_x1, k_x2, k_p = jax.random.split(key, 3)
    x1 = jax.random.normal(k_x1, (B, C, H, W), jnp.float32)   # NCHW
    x2 = jax.random.normal(k_x2, (B, C, H, W), jnp.float32)   # NCHW

    params = init_params(k_p, C * H * W, PREV_DIM, DIM, PRED_DIM)
    weights = prepare_weights(params)          # one-time bf16 cast / padding

    fwd = jax.jit(simsiam_forward)
    out1, out2, p1, p2, z1, z2 = fwd(x1, x2, weights)
    jax.block_until_ready((out1, out2, p1, p2, z1, z2))

    assert out1.shape == (B, NUM_CLASSES) and out2.shape == (B, NUM_CLASSES)
    assert p1.shape == (B, DIM) and p2.shape == (B, DIM)
    assert z1.shape == (B, DIM) and z2.shape == (B, DIM)
    assert all(bool(jnp.all(jnp.isfinite(t))) for t in (out1, out2, p1, p2, z1, z2))
    print("KERNEL_OK")
</pallas_src>

<mosaic_0001>
module attributes {stable_mosaic.version = 11 : i64} {
  func.func @simsiam_kernel(%arg0: memref<2x1024xf32, #tpu.memory_space<vmem>>, %arg1: memref<2x1024xf32, #tpu.memory_space<vmem>>, %arg2: memref<1024x256xbf16, #tpu.memory_space<vmem>>, %arg3: memref<256x128xbf16, #tpu.memory_space<vmem>>, %arg4: memref<1x128xf32, #tpu.memory_space<vmem>>, %arg5: memref<256x256xbf16, #tpu.memory_space<vmem>>, %arg6: memref<1x256xf32, #tpu.memory_space<vmem>>, %arg7: memref<1x256xf32, #tpu.memory_space<vmem>>, %arg8: memref<256x256xbf16, #tpu.memory_space<vmem>>, %arg9: memref<1x256xf32, #tpu.memory_space<vmem>>, %arg10: memref<1x256xf32, #tpu.memory_space<vmem>>, %arg11: memref<256x256xbf16, #tpu.memory_space<vmem>>, %arg12: memref<256x256xbf16, #tpu.memory_space<vmem>>, %arg13: memref<1x256xf32, #tpu.memory_space<vmem>>, %arg14: memref<1x256xf32, #tpu.memory_space<vmem>>, %arg15: memref<256x256xbf16, #tpu.memory_space<vmem>>, %arg16: memref<1x256xf32, #tpu.memory_space<vmem>>, %arg17: memref<4x128xf32, #tpu.memory_space<vmem>>, %arg18: memref<4x256xf32, #tpu.memory_space<vmem>>, %arg19: memref<4x256xbf16, #tpu.memory_space<vmem>>, %arg20: memref<4x1024xbf16, #tpu.memory_space<vmem>>) attributes {dimension_semantics = [], scalar_prefetch = 0 : i64, scratch_operands = 1 : i64, tpu.core_type = #tpu.core_type<tc>} {
    %c0 = arith.constant 0 : index
    %c0_0 = arith.constant 0 : index
    %0 = vector.load %arg0[%c0, %c0_0] : memref<2x1024xf32, #tpu.memory_space<vmem>>, vector<2x1024xf32>
    %1 = arith.truncf %0 : vector<2x1024xf32> to vector<2x1024xbf16>
    %c0_1 = arith.constant 0 : index
    %c0_2 = arith.constant 0 : index
    %2 = vector.load %arg20[%c0_1, %c0_2] : memref<4x1024xbf16, #tpu.memory_space<vmem>>, vector<2x1024xbf16>
    tpu.vector_store %arg20[%c0_1, %c0_2], %1 {strides = array<i32>} : memref<4x1024xbf16, #tpu.memory_space<vmem>>, vector<2x1024xbf16>,
    %c0_3 = arith.constant 0 : index
    %c0_4 = arith.constant 0 : index
    %3 = vector.load %arg1[%c0_3, %c0_4] : memref<2x1024xf32, #tpu.memory_space<vmem>>, vector<2x1024xf32>
    %4 = arith.truncf %3 : vector<2x1024xf32> to vector<2x1024xbf16>
    %c2 = arith.constant 2 : index
    %c0_5 = arith.constant 0 : index
    %5 = vector.load %arg20[%c2, %c0_5] : memref<4x1024xbf16, #tpu.memory_space<vmem>>, vector<2x1024xbf16>
    tpu.vector_store %arg20[%c2, %c0_5], %4 {strides = array<i32>} : memref<4x1024xbf16, #tpu.memory_space<vmem>>, vector<2x1024xbf16>,
    %c0_6 = arith.constant 0 : index
    %c0_7 = arith.constant 0 : index
    %6 = vector.load %arg20[%c0_6, %c0_7] : memref<4x1024xbf16, #tpu.memory_space<vmem>>, vector<4x1024xbf16>
    %c0_8 = arith.constant 0 : index
    %c0_9 = arith.constant 0 : index
    %7 = vector.load %arg2[%c0_8, %c0_9] : memref<1024x256xbf16, #tpu.memory_space<vmem>>, vector<1024x256xbf16>
    %cst = arith.constant dense<0.000000e+00> : vector<4x256xf32>
    %8 = tpu.matmul %6, %7, %cst {dimension_numbers = #tpu.dot_dimension_numbers<[1], [0], [0], [1], [0, 0, 1, 1], [], []>} : vector<4x1024xbf16>, vector<1024x256xbf16>, vector<4x256xf32> -> vector<4x256xf32>
    %cst_10 = arith.constant 0.000000e+00 : f32
    %9 = vector.broadcast %cst_10 : f32 to vector<4x256xf32>
    %10 = arith.maximumf %8, %9 : vector<4x256xf32>
    %11 = arith.truncf %10 : vector<4x256xf32> to vector<4x256xbf16>
    %c0_11 = arith.constant 0 : index
    %c0_12 = arith.constant 0 : index
    %12 = vector.load %arg3[%c0_11, %c0_12] : memref<256x128xbf16, #tpu.memory_space<vmem>>, vector<256x128xbf16>
    %cst_13 = arith.constant dense<0.000000e+00> : vector<4x128xf32>
    %13 = tpu.matmul %11, %12, %cst_13 {dimension_numbers = #tpu.dot_dimension_numbers<[1], [0], [0], [1], [0, 0, 1, 1], [], []>} : vector<4x256xbf16>, vector<256x128xbf16>, vector<4x128xf32> -> vector<4x128xf32>
    %c0_14 = arith.constant 0 : index
    %c0_15 = arith.constant 0 : index
    %14 = vector.load %arg4[%c0_14, %c0_15] : memref<1x128xf32, #tpu.memory_space<vmem>>, vector<1x128xf32>
    %15 = vector.broadcast %14 : vector<1x128xf32> to vector<4x128xf32>
    %16 = arith.addf %13, %15 : vector<4x128xf32>
    %c0_16 = arith.constant 0 : index
    %c0_17 = arith.constant 0 : index
    %17 = vector.load %arg17[%c0_16, %c0_17] : memref<4x128xf32, #tpu.memory_space<vmem>>, vector<4x128xf32>
    tpu.vector_store %arg17[%c0_16, %c0_17], %16 {strides = array<i32>} : memref<4x128xf32, #tpu.memory_space<vmem>>, vector<4x128xf32>,
    %c0_18 = arith.constant 0 : index
    %c0_19 = arith.constant 0 : index
    %18 = vector.load %arg5[%c0_18, %c0_19] : memref<256x256xbf16, #tpu.memory_space<vmem>>, vector<256x256xbf16>
    %cst_20 = arith.constant dense<0.000000e+00> : vector<4x256xf32>
    %19 = tpu.matmul %11, %18, %cst_20 {dimension_numbers = #tpu.dot_dimension_numbers<[1], [0], [0], [1], [0, 0, 1, 1], [], []>} : vector<4x256xbf16>, vector<256x256xbf16>, vector<4x256xf32> -> vector<4x256xf32>
    %c0_21 = arith.constant 0 : index
    %c0_22 = arith.constant 0 : index
    %20 = vector.load %arg6[%c0_21, %c0_22] : memref<1x256xf32, #tpu.memory_space<vmem>>, vector<1x256xf32>
    %c0_23 = arith.constant 0 : index
    %c0_24 = arith.constant 0 : index
    %21 = vector.load %arg7[%c0_23, %c0_24] : memref<1x256xf32, #tpu.memory_space<vmem>>, vector<1x256xf32>
    %22 = vector.extract_strided_slice %19 {offsets = [0, 0], sizes = [2, 256], strides = [1, 1]} : vector<4x256xf32> to vector<2x256xf32>
    %cst_25 = arith.constant dense<0.000000e+00> : vector<256xf32>
    %23 = vector.multi_reduction <add>, %22, %cst_25 [0] : vector<2x256xf32> to vector<256xf32>
    %24 = vector.shape_cast %23 : vector<256xf32> to vector<1x256xf32>
    %cst_26 = arith.constant 5.000000e-01 : f32
    %25 = vector.broadcast %cst_26 : f32 to vector<1x256xf32>
    %26 = arith.mulf %24, %25 : vector<1x256xf32>
    %27 = arith.mulf %22, %22 : vector<2x256xf32>
    %cst_27 = arith.constant dense<0.000000e+00> : vector<256xf32>
    %28 = vector.multi_reduction <add>, %27, %cst_27 [0] : vector<2x256xf32> to vector<256xf32>
    %29 = vector.shape_cast %28 : vector<256xf32> to vector<1x256xf32>
    %cst_28 = arith.constant 5.000000e-01 : f32
    %30 = vector.broadcast %cst_28 : f32 to vector<1x256xf32>
    %31 = arith.mulf %29, %30 : vector<1x256xf32>
    %32 = arith.mulf %26, %26 : vector<1x256xf32>
    %33 = arith.subf %31, %32 : vector<1x256xf32>
    %cst_29 = arith.constant 0.000000e+00 : f32
    %34 = vector.broadcast %cst_29 : f32 to vector<1x256xf32>
    %35 = arith.maximumf %33, %34 : vector<1x256xf32>
    %36 = vector.extract_strided_slice %19 {offsets = [2, 0], sizes = [2, 256], strides = [1, 1]} : vector<4x256xf32> to vector<2x256xf32>
    %cst_30 = arith.constant dense<0.000000e+00> : vector<256xf32>
    %37 = vector.multi_reduction <add>, %36, %cst_30 [0] : vector<2x256xf32> to vector<256xf32>
    %38 = vector.shape_cast %37 : vector<256xf32> to vector<1x256xf32>
    %cst_31 = arith.constant 5.000000e-01 : f32
    %39 = vector.broadcast %cst_31 : f32 to vector<1x256xf32>
    %40 = arith.mulf %38, %39 : vector<1x256xf32>
    %41 = arith.mulf %36, %36 : vector<2x256xf32>
    %cst_32 = arith.constant dense<0.000000e+00> : vector<256xf32>
    %42 = vector.multi_reduction <add>, %41, %cst_32 [0] : vector<2x256xf32> to vector<256xf32>
    %43 = vector.shape_cast %42 : vector<256xf32> to vector<1x256xf32>
    %cst_33 = arith.constant 5.000000e-01 : f32
    %44 = vector.broadcast %cst_33 : f32 to vector<1x256xf32>
    %45 = arith.mulf %43, %44 : vector<1x256xf32>
    %46 = arith.mulf %40, %40 : vector<1x256xf32>
    %47 = arith.subf %45, %46 : vector<1x256xf32>
    %cst_34 = arith.constant 0.000000e+00 : f32
    %48 = vector.broadcast %cst_34 : f32 to vector<1x256xf32>
    %49 = arith.maximumf %47, %48 : vector<1x256xf32>
    %50 = tpu.iota {dimensions = array<i32: 0>} : vector<4x1xi32>
    %c2_i32 = arith.constant 2 : i32
    %51 = vector.broadcast %c2_i32 : i32 to vector<4x1xi32>
    %52 = arith.cmpi sge, %50, %51 : vector<4x1xi32>
    %53 = vector.shape_cast %52 : vector<4x1xi1> to vector<4x1xi1>
    %54 = vector.broadcast %53 : vector<4x1xi1> to vector<4x256xi1>
    %55 = vector.shape_cast %40 : vector<1x256xf32> to vector<1x256xf32>
    %56 = vector.broadcast %55 : vector<1x256xf32> to vector<4x256xf32>
    %57 = vector.shape_cast %26 : vector<1x256xf32> to vector<1x256xf32>
    %58 = vector.broadcast %57 : vector<1x256xf32> to vector<4x256xf32>
    %59 = arith.select %54, %56, %58 : vector<4x256xi1>, vector<4x256xf32>
    %60 = vector.shape_cast %52 : vector<4x1xi1> to vector<4x1xi1>
    %61 = vector.broadcast %60 : vector<4x1xi1> to vector<4x256xi1>
    %62 = vector.shape_cast %49 : vector<1x256xf32> to vector<1x256xf32>
    %63 = vector.broadcast %62 : vector<1x256xf32> to vector<4x256xf32>
    %64 = vector.shape_cast %35 : vector<1x256xf32> to vector<1x256xf32>
    %65 = vector.broadcast %64 : vector<1x256xf32> to vector<4x256xf32>
    %66 = arith.select %61, %63, %65 : vector<4x256xi1>, vector<4x256xf32>
    %cst_35 = arith.constant 9.99999974E-6 : f32
    %67 = vector.broadcast %cst_35 : f32 to vector<4x256xf32>
    %68 = arith.addf %66, %67 : vector<4x256xf32>
    %69 = math.rsqrt %68 : vector<4x256xf32>
    %70 = vector.broadcast %20 : vector<1x256xf32> to vector<4x256xf32>
    %71 = arith.mulf %69, %70 : vector<4x256xf32>
    %72 = arith.subf %19, %59 : vector<4x256xf32>
    %73 = arith.mulf %72, %71 : vector<4x256xf32>
    %74 = vector.broadcast %21 : vector<1x256xf32> to vector<4x256xf32>
    %75 = arith.addf %73, %74 : vector<4x256xf32>
    %cst_36 = arith.constant 0.000000e+00 : f32
    %76 = vector.broadcast %cst_36 : f32 to vector<4x256xf32>
    %77 = arith.maximumf %75, %76 : vector<4x256xf32>
    %78 = arith.truncf %77 : vector<4x256xf32> to vector<4x256xbf16>
    %c0_37 = arith.constant 0 : index
    %c0_38 = arith.constant 0 : index
    %79 = vector.load %arg8[%c0_37, %c0_38] : memref<256x256xbf16, #tpu.memory_space<vmem>>, vector<256x256xbf16>
    %cst_39 = arith.constant dense<0.000000e+00> : vector<4x256xf32>
    %80 = tpu.matmul %78, %79, %cst_39 {dimension_numbers = #tpu.dot_dimension_numbers<[1], [0], [0], [1], [0, 0, 1, 1], [], []>} : vector<4x256xbf16>, vector<256x256xbf16>, vector<4x256xf32> -> vector<4x256xf32>
    %c0_40 = arith.constant 0 : index
    %c0_41 = arith.constant 0 : index
    %81 = vector.load %arg9[%c0_40, %c0_41] : memref<1x256xf32, #tpu.memory_space<vmem>>, vector<1x256xf32>
    %c0_42 = arith.constant 0 : index
    %c0_43 = arith.constant 0 : index
    %82 = vector.load %arg10[%c0_42, %c0_43] : memref<1x256xf32, #tpu.memory_space<vmem>>, vector<1x256xf32>
    %83 = vector.extract_strided_slice %80 {offsets = [0, 0], sizes = [2, 256], strides = [1, 1]} : vector<4x256xf32> to vector<2x256xf32>
    %cst_44 = arith.constant dense<0.000000e+00> : vector<256xf32>
    %84 = vector.multi_reduction <add>, %83, %cst_44 [0] : vector<2x256xf32> to vector<256xf32>
    %85 = vector.shape_cast %84 : vector<256xf32> to vector<1x256xf32>
    %cst_45 = arith.constant 5.000000e-01 : f32
    %86 = vector.broadcast %cst_45 : f32 to vector<1x256xf32>
    %87 = arith.mulf %85, %86 : vector<1x256xf32>
    %88 = arith.mulf %83, %83 : vector<2x256xf32>
    %cst_46 = arith.constant dense<0.000000e+00> : vector<256xf32>
    %89 = vector.multi_reduction <add>, %88, %cst_46 [0] : vector<2x256xf32> to vector<256xf32>
    %90 = vector.shape_cast %89 : vector<256xf32> to vector<1x256xf32>
    %cst_47 = arith.constant 5.000000e-01 : f32
    %91 = vector.broadcast %cst_47 : f32 to vector<1x256xf32>
    %92 = arith.mulf %90, %91 : vector<1x256xf32>
    %93 = arith.mulf %87, %87 : vector<1x256xf32>
    %94 = arith.subf %92, %93 : vector<1x256xf32>
    %cst_48 = arith.constant 0.000000e+00 : f32
    %95 = vector.broadcast %cst_48 : f32 to vector<1x256xf32>
    %96 = arith.maximumf %94, %95 : vector<1x256xf32>
    %97 = vector.extract_strided_slice %80 {offsets = [2, 0], sizes = [2, 256], strides = [1, 1]} : vector<4x256xf32> to vector<2x256xf32>
    %cst_49 = arith.constant dense<0.000000e+00> : vector<256xf32>
    %98 = vector.multi_reduction <add>, %97, %cst_49 [0] : vector<2x256xf32> to vector<256xf32>
    %99 = vector.shape_cast %98 : vector<256xf32> to vector<1x256xf32>
    %cst_50 = arith.constant 5.000000e-01 : f32
    %100 = vector.broadcast %cst_50 : f32 to vector<1x256xf32>
    %101 = arith.mulf %99, %100 : vector<1x256xf32>
    %102 = arith.mulf %97, %97 : vector<2x256xf32>
    %cst_51 = arith.constant dense<0.000000e+00> : vector<256xf32>
    %103 = vector.multi_reduction <add>, %102, %cst_51 [0] : vector<2x256xf32> to vector<256xf32>
    %104 = vector.shape_cast %103 : vector<256xf32> to vector<1x256xf32>
    %cst_52 = arith.constant 5.000000e-01 : f32
    %105 = vector.broadcast %cst_52 : f32 to vector<1x256xf32>
    %106 = arith.mulf %104, %105 : vector<1x256xf32>
    %107 = arith.mulf %101, %101 : vector<1x256xf32>
    %108 = arith.subf %106, %107 : vector<1x256xf32>
    %cst_53 = arith.constant 0.000000e+00 : f32
    %109 = vector.broadcast %cst_53 : f32 to vector<1x256xf32>
    %110 = arith.maximumf %108, %109 : vector<1x256xf32>
    %111 = tpu.iota {dimensions = array<i32: 0>} : vector<4x1xi32>
    %c2_i32_54 = arith.constant 2 : i32
    %112 = vector.broadcast %c2_i32_54 : i32 to vector<4x1xi32>
    %113 = arith.cmpi sge, %111, %112 : vector<4x1xi32>
    %114 = vector.shape_cast %113 : vector<4x1xi1> to vector<4x1xi1>
    %115 = vector.broadcast %114 : vector<4x1xi1> to vector<4x256xi1>
    %116 = vector.shape_cast %101 : vector<1x256xf32> to vector<1x256xf32>
    %117 = vector.broadcast %116 : vector<1x256xf32> to vector<4x256xf32>
    %118 = vector.shape_cast %87 : vector<1x256xf32> to vector<1x256xf32>
    %119 = vector.broadcast %118 : vector<1x256xf32> to vector<4x256xf32>
    %120 = arith.select %115, %117, %119 : vector<4x256xi1>, vector<4x256xf32>
    %121 = vector.shape_cast %113 : vector<4x1xi1> to vector<4x1xi1>
    %122 = vector.broadcast %121 : vector<4x1xi1> to vector<4x256xi1>
    %123 = vector.shape_cast %110 : vector<1x256xf32> to vector<1x256xf32>
    %124 = vector.broadcast %123 : vector<1x256xf32> to vector<4x256xf32>
    %125 = vector.shape_cast %96 : vector<1x256xf32> to vector<1x256xf32>
    %126 = vector.broadcast %125 : vector<1x256xf32> to vector<4x256xf32>
    %127 = arith.select %122, %124, %126 : vector<4x256xi1>, vector<4x256xf32>
    %cst_55 = arith.constant 9.99999974E-6 : f32
    %128 = vector.broadcast %cst_55 : f32 to vector<4x256xf32>
    %129 = arith.addf %127, %128 : vector<4x256xf32>
    %130 = math.rsqrt %129 : vector<4x256xf32>
    %131 = vector.broadcast %81 : vector<1x256xf32> to vector<4x256xf32>
    %132 = arith.mulf %130, %131 : vector<4x256xf32>
    %133 = arith.subf %80, %120 : vector<4x256xf32>
    %134 = arith.mulf %133, %132 : vector<4x256xf32>
    %135 = vector.broadcast %82 : vector<1x256xf32> to vector<4x256xf32>
    %136 = arith.addf %134, %135 : vector<4x256xf32>
    %cst_56 = arith.constant 0.000000e+00 : f32
    %137 = vector.broadcast %cst_56 : f32 to vector<4x256xf32>
    %138 = arith.maximumf %136, %137 : vector<4x256xf32>
    %139 = arith.truncf %138 : vector<4x256xf32> to vector<4x256xbf16>
    %c0_57 = arith.constant 0 : index
    %c0_58 = arith.constant 0 : index
    %140 = vector.load %arg11[%c0_57, %c0_58] : memref<256x256xbf16, #tpu.memory_space<vmem>>, vector<256x256xbf16>
    %cst_59 = arith.constant dense<0.000000e+00> : vector<4x256xf32>
    %141 = tpu.matmul %139, %140, %cst_59 {dimension_numbers = #tpu.dot_dimension_numbers<[1], [0], [0], [1], [0, 0, 1, 1], [], []>} : vector<4x256xbf16>, vector<256x256xbf16>, vector<4x256xf32> -> vector<4x256xf32>
    %142 = vector.extract_strided_slice %141 {offsets = [0, 0], sizes = [2, 256], strides = [1, 1]} : vector<4x256xf32> to vector<2x256xf32>
    %cst_60 = arith.constant dense<0.000000e+00> : vector<256xf32>
    %143 = vector.multi_reduction <add>, %142, %cst_60 [0] : vector<2x256xf32> to vector<256xf32>
    %144 = vector.shape_cast %143 : vector<256xf32> to vector<1x256xf32>
    %cst_61 = arith.constant 5.000000e-01 : f32
    %145 = vector.broadcast %cst_61 : f32 to vector<1x256xf32>
    %146 = arith.mulf %144, %145 : vector<1x256xf32>
    %147 = arith.mulf %142, %142 : vector<2x256xf32>
    %cst_62 = arith.constant dense<0.000000e+00> : vector<256xf32>
    %148 = vector.multi_reduction <add>, %147, %cst_62 [0] : vector<2x256xf32> to vector<256xf32>
    %149 = vector.shape_cast %148 : vector<256xf32> to vector<1x256xf32>
    %cst_63 = arith.constant 5.000000e-01 : f32
    %150 = vector.broadcast %cst_63 : f32 to vector<1x256xf32>
    %151 = arith.mulf %149, %150 : vector<1x256xf32>
    %152 = arith.mulf %146, %146 : vector<1x256xf32>
    %153 = arith.subf %151, %152 : vector<1x256xf32>
    %cst_64 = arith.constant 0.000000e+00 : f32
    %154 = vector.broadcast %cst_64 : f32 to vector<1x256xf32>
    %155 = arith.maximumf %153, %154 : vector<1x256xf32>
    %156 = vector.extract_strided_slice %141 {offsets = [2, 0], sizes = [2, 256], strides = [1, 1]} : vector<4x256xf32> to vector<2x256xf32>
    %cst_65 = arith.constant dense<0.000000e+00> : vector<256xf32>
    %157 = vector.multi_reduction <add>, %156, %cst_65 [0] : vector<2x256xf32> to vector<256xf32>
    %158 = vector.shape_cast %157 : vector<256xf32> to vector<1x256xf32>
    %cst_66 = arith.constant 5.000000e-01 : f32
    %159 = vector.broadcast %cst_66 : f32 to vector<1x256xf32>
    %160 = arith.mulf %158, %159 : vector<1x256xf32>
    %161 = arith.mulf %156, %156 : vector<2x256xf32>
    %cst_67 = arith.constant dense<0.000000e+00> : vector<256xf32>
    %162 = vector.multi_reduction <add>, %161, %cst_67 [0] : vector<2x256xf32> to vector<256xf32>
    %163 = vector.shape_cast %162 : vector<256xf32> to vector<1x256xf32>
    %cst_68 = arith.constant 5.000000e-01 : f32
    %164 = vector.broadcast %cst_68 : f32 to vector<1x256xf32>
    %165 = arith.mulf %163, %164 : vector<1x256xf32>
    %166 = arith.mulf %160, %160 : vector<1x256xf32>
    %167 = arith.subf %165, %166 : vector<1x256xf32>
    %cst_69 = arith.constant 0.000000e+00 : f32
    %168 = vector.broadcast %cst_69 : f32 to vector<1x256xf32>
    %169 = arith.maximumf %167, %168 : vector<1x256xf32>
    %170 = tpu.iota {dimensions = array<i32: 0>} : vector<4x1xi32>
    %c2_i32_70 = arith.constant 2 : i32
    %171 = vector.broadcast %c2_i32_70 : i32 to vector<4x1xi32>
    %172 = arith.cmpi sge, %170, %171 : vector<4x1xi32>
    %173 = vector.shape_cast %172 : vector<4x1xi1> to vector<4x1xi1>
    %174 = vector.broadcast %173 : vector<4x1xi1> to vector<4x256xi1>
    %175 = vector.shape_cast %160 : vector<1x256xf32> to vector<1x256xf32>
    %176 = vector.broadcast %175 : vector<1x256xf32> to vector<4x256xf32>
    %177 = vector.shape_cast %146 : vector<1x256xf32> to vector<1x256xf32>
    %178 = vector.broadcast %177 : vector<1x256xf32> to vector<4x256xf32>
    %179 = arith.select %174, %176, %178 : vector<4x256xi1>, vector<4x256xf32>
    %180 = vector.shape_cast %172 : vector<4x1xi1> to vector<4x1xi1>
    %181 = vector.broadcast %180 : vector<4x1xi1> to vector<4x256xi1>
    %182 = vector.shape_cast %169 : vector<1x256xf32> to vector<1x256xf32>
    %183 = vector.broadcast %182 : vector<1x256xf32> to vector<4x256xf32>
    %184 = vector.shape_cast %155 : vector<1x256xf32> to vector<1x256xf32>
    %185 = vector.broadcast %184 : vector<1x256xf32> to vector<4x256xf32>
    %186 = arith.select %181, %183, %185 : vector<4x256xi1>, vector<4x256xf32>
    %cst_71 = arith.constant 9.99999974E-6 : f32
    %187 = vector.broadcast %cst_71 : f32 to vector<4x256xf32>
    %188 = arith.addf %186, %187 : vector<4x256xf32>
    %189 = math.rsqrt %188 : vector<4x256xf32>
    %190 = arith.subf %141, %179 : vector<4x256xf32>
    %191 = arith.mulf %190, %189 : vector<4x256xf32>
    %192 = arith.truncf %191 : vector<4x256xf32> to vector<4x256xbf16>
    %c0_72 = arith.constant 0 : index
    %c0_73 = arith.constant 0 : index
    %193 = vector.load %arg19[%c0_72, %c0_73] : memref<4x256xbf16, #tpu.memory_space<vmem>>, vector<4x256xbf16>
    tpu.vector_store %arg19[%c0_72, %c0_73], %192 {strides = array<i32>} : memref<4x256xbf16, #tpu.memory_space<vmem>>, vector<4x256xbf16>,
    %c0_74 = arith.constant 0 : index
    %c0_75 = arith.constant 0 : index
    %194 = vector.load %arg12[%c0_74, %c0_75] : memref<256x256xbf16, #tpu.memory_space<vmem>>, vector<256x256xbf16>
    %cst_76 = arith.constant dense<0.000000e+00> : vector<4x256xf32>
    %195 = tpu.matmul %192, %194, %cst_76 {dimension_numbers = #tpu.dot_dimension_numbers<[1], [0], [0], [1], [0, 0, 1, 1], [], []>} : vector<4x256xbf16>, vector<256x256xbf16>, vector<4x256xf32> -> vector<4x256xf32>
    %c0_77 = arith.constant 0 : index
    %c0_78 = arith.constant 0 : index
    %196 = vector.load %arg13[%c0_77, %c0_78] : memref<1x256xf32, #tpu.memory_space<vmem>>, vector<1x256xf32>
    %c0_79 = arith.constant 0 : index
    %c0_80 = arith.constant 0 : index
    %197 = vector.load %arg14[%c0_79, %c0_80] : memref<1x256xf32, #tpu.memory_space<vmem>>, vector<1x256xf32>
    %198 = vector.extract_strided_slice %195 {offsets = [0, 0], sizes = [2, 256], strides = [1, 1]} : vector<4x256xf32> to vector<2x256xf32>
    %cst_81 = arith.constant dense<0.000000e+00> : vector<256xf32>
    %199 = vector.multi_reduction <add>, %198, %cst_81 [0] : vector<2x256xf32> to vector<256xf32>
    %200 = vector.shape_cast %199 : vector<256xf32> to vector<1x256xf32>
    %cst_82 = arith.constant 5.000000e-01 : f32
    %201 = vector.broadcast %cst_82 : f32 to vector<1x256xf32>
    %202 = arith.mulf %200, %201 : vector<1x256xf32>
    %203 = arith.mulf %198, %198 : vector<2x256xf32>
    %cst_83 = arith.constant dense<0.000000e+00> : vector<256xf32>
    %204 = vector.multi_reduction <add>, %203, %cst_83 [0] : vector<2x256xf32> to vector<256xf32>
    %205 = vector.shape_cast %204 : vector<256xf32> to vector<1x256xf32>
    %cst_84 = arith.constant 5.000000e-01 : f32
    %206 = vector.broadcast %cst_84 : f32 to vector<1x256xf32>
    %207 = arith.mulf %205, %206 : vector<1x256xf32>
    %208 = arith.mulf %202, %202 : vector<1x256xf32>
    %209 = arith.subf %207, %208 : vector<1x256xf32>
    %cst_85 = arith.constant 0.000000e+00 : f32
    %210 = vector.broadcast %cst_85 : f32 to vector<1x256xf32>
    %211 = arith.maximumf %209, %210 : vector<1x256xf32>
    %212 = vector.extract_strided_slice %195 {offsets = [2, 0], sizes = [2, 256], strides = [1, 1]} : vector<4x256xf32> to vector<2x256xf32>
    %cst_86 = arith.constant dense<0.000000e+00> : vector<256xf32>
    %213 = vector.multi_reduction <add>, %212, %cst_86 [0] : vector<2x256xf32> to vector<256xf32>
    %214 = vector.shape_cast %213 : vector<256xf32> to vector<1x256xf32>
    %cst_87 = arith.constant 5.000000e-01 : f32
    %215 = vector.broadcast %cst_87 : f32 to vector<1x256xf32>
    %216 = arith.mulf %214, %215 : vector<1x256xf32>
    %217 = arith.mulf %212, %212 : vector<2x256xf32>
    %cst_88 = arith.constant dense<0.000000e+00> : vector<256xf32>
    %218 = vector.multi_reduction <add>, %217, %cst_88 [0] : vector<2x256xf32> to vector<256xf32>
    %219 = vector.shape_cast %218 : vector<256xf32> to vector<1x256xf32>
    %cst_89 = arith.constant 5.000000e-01 : f32
    %220 = vector.broadcast %cst_89 : f32 to vector<1x256xf32>
    %221 = arith.mulf %219, %220 : vector<1x256xf32>
    %222 = arith.mulf %216, %216 : vector<1x256xf32>
    %223 = arith.subf %221, %222 : vector<1x256xf32>
    %cst_90 = arith.constant 0.000000e+00 : f32
    %224 = vector.broadcast %cst_90 : f32 to vector<1x256xf32>
    %225 = arith.maximumf %223, %224 : vector<1x256xf32>
    %226 = tpu.iota {dimensions = array<i32: 0>} : vector<4x1xi32>
    %c2_i32_91 = arith.constant 2 : i32
    %227 = vector.broadcast %c2_i32_91 : i32 to vector<4x1xi32>
    %228 = arith.cmpi sge, %226, %227 : vector<4x1xi32>
    %229 = vector.shape_cast %228 : vector<4x1xi1> to vector<4x1xi1>
    %230 = vector.broadcast %229 : vector<4x1xi1> to vector<4x256xi1>
    %231 = vector.shape_cast %216 : vector<1x256xf32> to vector<1x256xf32>
    %232 = vector.broadcast %231 : vector<1x256xf32> to vector<4x256xf32>
    %233 = vector.shape_cast %202 : vector<1x256xf32> to vector<1x256xf32>
    %234 = vector.broadcast %233 : vector<1x256xf32> to vector<4x256xf32>
    %235 = arith.select %230, %232, %234 : vector<4x256xi1>, vector<4x256xf32>
    %236 = vector.shape_cast %228 : vector<4x1xi1> to vector<4x1xi1>
    %237 = vector.broadcast %236 : vector<4x1xi1> to vector<4x256xi1>
    %238 = vector.shape_cast %225 : vector<1x256xf32> to vector<1x256xf32>
    %239 = vector.broadcast %238 : vector<1x256xf32> to vector<4x256xf32>
    %240 = vector.shape_cast %211 : vector<1x256xf32> to vector<1x256xf32>
    %241 = vector.broadcast %240 : vector<1x256xf32> to vector<4x256xf32>
    %242 = arith.select %237, %239, %241 : vector<4x256xi1>, vector<4x256xf32>
    %cst_92 = arith.constant 9.99999974E-6 : f32
    %243 = vector.broadcast %cst_92 : f32 to vector<4x256xf32>
    %244 = arith.addf %242, %243 : vector<4x256xf32>
    %245 = math.rsqrt %244 : vector<4x256xf32>
    %246 = vector.broadcast %196 : vector<1x256xf32> to vector<4x256xf32>
    %247 = arith.mulf %245, %246 : vector<4x256xf32>
    %248 = arith.subf %195, %235 : vector<4x256xf32>
    %249 = arith.mulf %248, %247 : vector<4x256xf32>
    %250 = vector.broadcast %197 : vector<1x256xf32> to vector<4x256xf32>
    %251 = arith.addf %249, %250 : vector<4x256xf32>
    %cst_93 = arith.constant 0.000000e+00 : f32
    %252 = vector.broadcast %cst_93 : f32 to vector<4x256xf32>
    %253 = arith.maximumf %251, %252 : vector<4x256xf32>
    %254 = arith.truncf %253 : vector<4x256xf32> to vector<4x256xbf16>
    %c0_94 = arith.constant 0 : index
    %c0_95 = arith.constant 0 : index
    %255 = vector.load %arg15[%c0_94, %c0_95] : memref<256x256xbf16, #tpu.memory_space<vmem>>, vector<256x256xbf16>
    %cst_96 = arith.constant dense<0.000000e+00> : vector<4x256xf32>
    %256 = tpu.matmul %254, %255, %cst_96 {dimension_numbers = #tpu.dot_dimension_numbers<[1], [0], [0], [1], [0, 0, 1, 1], [], []>} : vector<4x256xbf16>, vector<256x256xbf16>, vector<4x256xf32> -> vector<4x256xf32>
    %c0_97 = arith.constant 0 : index
    %c0_98 = arith.constant 0 : index
    %257 = vector.load %arg16[%c0_97, %c0_98] : memref<1x256xf32, #tpu.memory_space<vmem>>, vector<1x256xf32>
    %258 = vector.broadcast %257 : vector<1x256xf32> to vector<4x256xf32>
    %259 = arith.addf %256, %258 : vector<4x256xf32>
    %c0_99 = arith.constant 0 : index
    %c0_100 = arith.constant 0 : index
    %260 = vector.load %arg18[%c0_99, %c0_100] : memref<4x256xf32, #tpu.memory_space<vmem>>, vector<4x256xf32>
    tpu.vector_store %arg18[%c0_99, %c0_100], %259 {strides = array<i32>} : memref<4x256xf32, #tpu.memory_space<vmem>>, vector<4x256xf32>,
    return
  }
}

</mosaic_0001>

<llo_original>
// kernel: simsiam_forward.1
$region0: #{simsiam_forward.1}
  #allocation0 [shape = 'u32[]', space=smem, size = 0x4, offset = 0x4, fixed_abs, tag = 'smem constant byte address 0x4 - core index']
  #allocation1 [shape = 'u32[144,128]{1,0:T(1,128)}', space=vmem, size = 0x12000, scoped, tag = 'internal scratch']
  #allocation2 [shape = 'bf16[4,1024]{1,0:T(4,128)(2,1)}', space=vmem, size = 0x2000, scoped, tag = 'scratch operand']
  %s0 = inlined_call_operand.vmem [shape: f32[2,1024], index: 0, kind: input, shape index: {}]
  %s1 = inlined_call_operand.vmem [shape: f32[2,1024], index: 1, kind: input, shape index: {}]
  %s2 = inlined_call_operand.hbm [shape: bf16[1024,256], index: 2, kind: input, shape index: {}]
  %s3 = inlined_call_operand.hbm [shape: bf16[256,128], index: 3, kind: input, shape index: {}]
  %s4 = inlined_call_operand.vmem [shape: f32[1,128], index: 4, kind: input, shape index: {}]
  %s5 = inlined_call_operand.vmem [shape: bf16[256,256], index: 5, kind: input, shape index: {}]
  %s6 = inlined_call_operand.vmem [shape: f32[1,256], index: 6, kind: input, shape index: {}]
  %s7 = inlined_call_operand.vmem [shape: f32[1,256], index: 7, kind: input, shape index: {}]
  %s8 = inlined_call_operand.hbm [shape: bf16[256,256], index: 8, kind: input, shape index: {}]
  %s9 = inlined_call_operand.vmem [shape: f32[1,256], index: 9, kind: input, shape index: {}]
  %s10 = inlined_call_operand.vmem [shape: f32[1,256], index: 10, kind: input, shape index: {}]
  %s11 = inlined_call_operand.hbm [shape: bf16[256,256], index: 11, kind: input, shape index: {}]
  %s12 = inlined_call_operand.hbm [shape: bf16[256,256], index: 12, kind: input, shape index: {}]
  %s13 = inlined_call_operand.vmem [shape: f32[1,256], index: 13, kind: input, shape index: {}]
  %s14 = inlined_call_operand.vmem [shape: f32[1,256], index: 14, kind: input, shape index: {}]
  %s15 = inlined_call_operand.hbm [shape: bf16[256,256], index: 15, kind: input, shape index: {}]
  %s16 = inlined_call_operand.vmem [shape: f32[1,256], index: 16, kind: input, shape index: {}]
  %s17 = inlined_call_operand.vmem [shape: f32[4,128], index: 17, kind: output, shape index: {0}]
  %s18 = inlined_call_operand.vmem [shape: f32[4,256], index: 18, kind: output, shape index: {1}]
  %s19 = inlined_call_operand.vmem [shape: bf16[4,256], index: 19, kind: output, shape index: {2}]
  %20 = xla_tuple %s17, %s18, %s19
  %s21 = sld [smem:[#allocation0]]
  $region118: #{simsiam_forward.1} parent=0
    _
  %s23 = ssub.s32 1, %s21
  %s24 = scalar_select 0, %s23, %s21
  $region1: #{simsiam_forward.1} parent=0
    #allocation3 [shape = 'u8[524288]{0}', space=vmem, size = 0x80000, scoped, tag = 'input window, operand 2, single buffered']
    #allocation4 [shape = 's32[1]{0}', space=sflag, size = 0x4, scoped, tag = 'scoped memory for simsiam_forward.1']
    #allocation5 [shape = 'u8[65536]{0}', space=vmem, size = 0x10000, scoped, tag = 'input window, operand 3, single buffered']
    #allocation6 [shape = 's32[1]{0}', space=sflag, size = 0x4, scoped, tag = 'scoped memory for simsiam_forward.1']
    #allocation7 [shape = 'u8[131072]{0}', space=vmem, size = 0x20000, scoped, tag = 'input window, operand 8, single buffered']
    #allocation8 [shape = 'u8[131072]{0}', space=vmem, size = 0x20000, scoped, tag = 'input window, operand 11, single buffered']
    #allocation9 [shape = 's32[1]{0}', space=sflag, size = 0x4, scoped, tag = 'scoped memory for simsiam_forward.1']
    #allocation10 [shape = 'u8[131072]{0}', space=vmem, size = 0x20000, scoped, tag = 'input window, operand 12, single buffered']
    #allocation11 [shape = 'u8[131072]{0}', space=vmem, size = 0x20000, scoped, tag = 'input window, operand 15, single buffered']
    #allocation12 [shape = 's32[1]{0}', space=sflag, size = 0x4, scoped, tag = 'scoped memory for simsiam_forward.1']
    %25 = vsyncpa [#allocation4], 0
    %26 = vsyncpa [#allocation6], 0
    %27 = vsyncpa [#allocation9], 0
    %28 = vsyncpa [#allocation12], 0
    // Predicated region
    $region2: #{simsiam_forward.1} parent=1 // pred_check
      _
    $region3: #{simsiam_forward.1} parent=1 // pred_check_branch
      %30 = sbr.rel (0) target = $region5
    $region4: #{simsiam_forward.1} parent=1 // pred_region
      _
    $region5: #{simsiam_forward.1} parent=1 // pred_fallthru
      _
    // Predicated region
    $region6: #{simsiam_forward.1} parent=1 // pred_check
      _
    $region7: #{simsiam_forward.1} parent=1 // pred_check_branch
      %32 = sbr.rel (0) target = $region9
    $region8: #{simsiam_forward.1} parent=1 // pred_region
      _
    $region9: #{simsiam_forward.1} parent=1 // pred_fallthru
      _
    // Predicated region
    $region10: #{simsiam_forward.1} parent=1 // pred_check
      _
    $region11: #{simsiam_forward.1} parent=1 // pred_check_branch
      %34 = sbr.rel (0) target = $region13
    $region12: #{simsiam_forward.1} parent=1 // pred_region
      %s36 = ssub.s32 16384, 16384
      %37 = vsyncadd [#allocation4], %s36
      %s38 = sshll.u32 [#allocation3], 4
      %s39 = int_to_ptr.vmem [resolvable:$true] %s38
      %44 = dma.hbm_to_vmem [thread:$0]  %s2, 16384, %s39, [#allocation4], 128, 128, 8
    $region13: #{simsiam_forward.1} parent=1 // pred_fallthru
      _
    // Predicated region
    $region14: #{simsiam_forward.1} parent=1 // pred_check
      _
    $region15: #{simsiam_forward.1} parent=1 // pred_check_branch
      %46 = sbr.rel (0) target = $region17
    $region16: #{simsiam_forward.1} parent=1 // pred_region
      %s48 = ssub.s32 2048, 2048
      %49 = vsyncadd [#allocation6], %s48
      %s50 = sshll.u32 [#allocation5], 4
      %s51 = int_to_ptr.vmem [resolvable:$true] %s50
      %56 = dma.hbm_to_vmem [thread:$0]  %s3, 2048, %s51, [#allocation6], 64, 64, 4
    $region17: #{simsiam_forward.1} parent=1 // pred_fallthru
      _
    // Predicated region
    $region18: #{simsiam_forward.1} parent=1 // pred_check
      _
    $region19: #{simsiam_forward.1} parent=1 // pred_check_branch
      %58 = sbr.rel (0) target = $region21
    $region20: #{simsiam_forward.1} parent=1 // pred_region
      _
    $region21: #{simsiam_forward.1} parent=1 // pred_fallthru
      _
    // Predicated region
    $region22: #{simsiam_forward.1} parent=1 // pred_check
      _
    $region23: #{simsiam_forward.1} parent=1 // pred_check_branch
      %60 = sbr.rel (0) target = $region25
    $region24: #{simsiam_forward.1} parent=1 // pred_region
      _
    $region25: #{simsiam_forward.1} parent=1 // pred_fallthru
      _
    // Predicated region
    $region26: #{simsiam_forward.1} parent=1 // pred_check
      _
    $region27: #{simsiam_forward.1} parent=1 // pred_check_branch
      %62 = sbr.rel (0) target = $region29
    $region28: #{simsiam_forward.1} parent=1 // pred_region
      _
    $region29: #{simsiam_forward.1} parent=1 // pred_fallthru
      _
    // Predicated region
    $region30: #{simsiam_forward.1} parent=1 // pred_check
      _
    $region31: #{simsiam_forward.1} parent=1 // pred_check_branch
      %64 = sbr.rel (0) target = $region33
    $region32: #{simsiam_forward.1} parent=1 // pred_region
      _
    $region33: #{simsiam_forward.1} parent=1 // pred_fallthru
      _
    // Predicated region
    $region34: #{simsiam_forward.1} parent=1 // pred_check
      _
    $region35: #{simsiam_forward.1} parent=1 // pred_check_branch
      %66 = sbr.rel (0) target = $region37
    $region36: #{simsiam_forward.1} parent=1 // pred_region
      %s68 = ssub.s32 4096, 4096
      %69 = vsyncadd [#allocation6], %s68
      %s70 = sshll.u32 [#allocation7], 4
      %s71 = int_to_ptr.vmem [resolvable:$true] %s70
      %76 = dma.hbm_to_vmem [thread:$0]  %s8, 4096, %s71, [#allocation6], 128, 128, 8
    $region37: #{simsiam_forward.1} parent=1 // pred_fallthru
      _
    // Predicated region
    $region38: #{simsiam_forward.1} parent=1 // pred_check
      _
    $region39: #{simsiam_forward.1} parent=1 // pred_check_branch
      %78 = sbr.rel (0) target = $region41
    $region40: #{simsiam_forward.1} parent=1 // pred_region
      _
    $region41: #{simsiam_forward.1} parent=1 // pred_fallthru
      _
    // Predicated region
    $region42: #{simsiam_forward.1} parent=1 // pred_check
      _
    $region43: #{simsiam_forward.1} parent=1 // pred_check_branch
      %80 = sbr.rel (0) target = $region45
    $region44: #{simsiam_forward.1} parent=1 // pred_region
      _
    $region45: #{simsiam_forward.1} parent=1 // pred_fallthru
      _
    // Predicated region
    $region46: #{simsiam_forward.1} parent=1 // pred_check
      _
    $region47: #{simsiam_forward.1} parent=1 // pred_check_branch
      %82 = sbr.rel (0) target = $region49
    $region48: #{simsiam_forward.1} parent=1 // pred_region
      %s84 = ssub.s32 4096, 4096
      %85 = vsyncadd [#allocation9], %s84
      %s86 = sshll.u32 [#allocation8], 4
      %s87 = int_to_ptr.vmem [resolvable:$true] %s86
      %92 = dma.hbm_to_vmem [thread:$0]  %s11, 4096, %s87, [#allocation9], 128, 128, 8
    $region49: #{simsiam_forward.1} parent=1 // pred_fallthru
      _
    // Predicated region
    $region50: #{simsiam_forward.1} parent=1 // pred_check
      _
    $region51: #{simsiam_forward.1} parent=1 // pred_check_branch
      %94 = sbr.rel (0) target = $region53
    $region52: #{simsiam_forward.1} parent=1 // pred_region
      %s96 = ssub.s32 4096, 4096
      %97 = vsyncadd [#allocation9], %s96
      %s98 = sshll.u32 [#allocation10], 4
      %s99 = int_to_ptr.vmem [resolvable:$true] %s98
      %104 = dma.hbm_to_vmem [thread:$0]  %s12, 4096, %s99, [#allocation9], 128, 128, 8
    $region53: #{simsiam_forward.1} parent=1 // pred_fallthru
      _
    // Predicated region
    $region54: #{simsiam_forward.1} parent=1 // pred_check
      _
    $region55: #{simsiam_forward.1} parent=1 // pred_check_branch
      %106 = sbr.rel (0) target = $region57
    $region56: #{simsiam_forward.1} parent=1 // pred_region
      _
    $region57: #{simsiam_forward.1} parent=1 // pred_fallthru
      _
    // Predicated region
    $region58: #{simsiam_forward.1} parent=1 // pred_check
      _
    $region59: #{simsiam_forward.1} parent=1 // pred_check_branch
      %108 = sbr.rel (0) target = $region61
    $region60: #{simsiam_forward.1} parent=1 // pred_region
      _
    $region61: #{simsiam_forward.1} parent=1 // pred_fallthru
      _
    // Predicated region
    $region62: #{simsiam_forward.1} parent=1 // pred_check
      _
    $region63: #{simsiam_forward.1} parent=1 // pred_check_branch
      %110 = sbr.rel (0) target = $region65
    $region64: #{simsiam_forward.1} parent=1 // pred_region
      %s112 = ssub.s32 4096, 4096
      %113 = vsyncadd [#allocation12], %s112
      %s114 = sshll.u32 [#allocation11], 4
      %s115 = int_to_ptr.vmem [resolvable:$true] %s114
      %120 = dma.hbm_to_vmem [thread:$0]  %s15, 4096, %s115, [#allocation12], 128, 128, 8
    $region65: #{simsiam_forward.1} parent=1 // pred_fallthru
      _
    // Predicated region
    $region66: #{simsiam_forward.1} parent=1 // pred_check
      _
    $region67: #{simsiam_forward.1} parent=1 // pred_check_branch
      %122 = sbr.rel (0) target = $region69
    $region68: #{simsiam_forward.1} parent=1 // pred_region
      _
    $region69: #{simsiam_forward.1} parent=1 // pred_fallthru
      _
    // Predicated region
    $region70: #{simsiam_forward.1} parent=1 // pred_check
      _
    $region71: #{simsiam_forward.1} parent=1 // pred_check_branch
      %124 = sbr.rel (0) target = $region73
    $region72: #{simsiam_forward.1} parent=1 // pred_region
      %125 = dma.done [#allocation4], 16384
    $region73: #{simsiam_forward.1} parent=1 // pred_fallthru
      _
    // Predicated region
    $region74: #{simsiam_forward.1} parent=1 // pred_check
      _
    $region75: #{simsiam_forward.1} parent=1 // pred_check_branch
      %127 = sbr.rel (0) target = $region77
    $region76: #{simsiam_forward.1} parent=1 // pred_region
      %128 = dma.done [#allocation6], 2048
    $region77: #{simsiam_forward.1} parent=1 // pred_fallthru
      _
    // Predicated region
    $region78: #{simsiam_forward.1} parent=1 // pred_check
      _
    $region79: #{simsiam_forward.1} parent=1 // pred_check_branch
      %130 = sbr.rel (0) target = $region81
    $region80: #{simsiam_forward.1} parent=1 // pred_region
      %131 = dma.done [#allocation6], 4096
    $region81: #{simsiam_forward.1} parent=1 // pred_fallthru
      _
    // Predicated region
    $region82: #{simsiam_forward.1} parent=1 // pred_check
      _
    $region83: #{simsiam_forward.1} parent=1 // pred_check_branch
      %133 = sbr.rel (0) target = $region85
    $region84: #{simsiam_forward.1} parent=1 // pred_region
      %134 = dma.done [#allocation9], 4096
    $region85: #{simsiam_forward.1} parent=1 // pred_fallthru
      _
    // Predicated region
    $region86: #{simsiam_forward.1} parent=1 // pred_check
      _
    $region87: #{simsiam_forward.1} parent=1 // pred_check_branch
      %136 = sbr.rel (0) target = $region89
    $region88: #{simsiam_forward.1} parent=1 // pred_region
      %137 = dma.done [#allocation9], 4096
    $region89: #{simsiam_forward.1} parent=1 // pred_fallthru
      _
    // Predicated region
    $region90: #{simsiam_forward.1} parent=1 // pred_check
      _
    $region91: #{simsiam_forward.1} parent=1 // pred_check_branch
      %139 = sbr.rel (0) target = $region93
    $region92: #{simsiam_forward.1} parent=1 // pred_region
      %140 = dma.done [#allocation12], 4096
    $region93: #{simsiam_forward.1} parent=1 // pred_fallthru
      _
    %v142 = vld [vmem:[%s0] sm:$0xff]
    %v143 = vld [vmem:[%s0 + $0x8] sm:$0xff]
    %v146 = vcombine.high %v142, %v142
    %v148 = vunpack.c.l.s4 1983009808
    %v149 = vunpack.c.0.s8 %v148
    %v150 = vlaneseq
    %v151 = vshrl.u32 %v150, 7
    %v152 = vsub.s32 %v149, %v151
    %v153 = vrot.slane %v142, %v152
    %v155 = vunpack.c.l.s4 1983009808
    %v156 = vunpack.c.0.s8 %v155
    %v157 = vlaneseq
    %v158 = vshrl.u32 %v157, 7
    %v159 = vsub.s32 %v156, %v158
    %v160 = vrot.slane %v146, %v159
    %v161 = vcombine.high %v153, %v153
    %v162 = vcombine.high %v160, %v160
    %v163 = vcombine.high %v143, %v143
    %v165 = vunpack.c.l.s4 1983009808
    %v166 = vunpack.c.0.s8 %v165
    %v167 = vlaneseq
    %v168 = vshrl.u32 %v167, 7
    %v169 = vsub.s32 %v166, %v168
    %v170 = vrot.slane %v143, %v169
    %v172 = vunpack.c.l.s4 1983009808
    %v173 = vunpack.c.0.s8 %v172
    %v174 = vlaneseq
    %v175 = vshrl.u32 %v174, 7
    %v176 = vsub.s32 %v173, %v175
    %v177 = vrot.slane %v163, %v176
    %v178 = vcombine.high %v170, %v170
    %v179 = vcombine.high %v177, %v177
    %v188 = vpack.c.bf16 %v153, %v153
    %v189 = vpack.c.bf16 %v161, %v161
    %v190 = vpack.c.bf16 %v160, %v160
    %v191 = vpack.c.bf16 %v162, %v162
    %v192 = vpack.c.bf16 %v170, %v170
    %v193 = vpack.c.bf16 %v178, %v178
    %v194 = vpack.c.bf16 %v177, %v177
    %v195 = vpack.c.bf16 %v179, %v179
    %v204 = vcombine.low %v188, %v189
    %v205 = vcombine.low %v190, %v191
    %v207 = vunpack.c.l.s4 1983009808
    %v208 = vunpack.c.0.s8 %v207
    %v209 = vlaneseq
    %v210 = vshrl.u32 %v209, 7
    %v211 = vsub.s32 %v208, %v210
    %v212 = vrot.slane %v204, %v211
    %v214 = vunpack.c.l.s4 1983009808
    %v215 = vunpack.c.0.s8 %v214
    %v216 = vlaneseq
    %v217 = vshrl.u32 %v216, 7
    %v218 = vsub.s32 %v215, %v217
    %v219 = vrot.slane %v205, %v218
    %v220 = vcombine.low %v212, %v219
    %v221 = vcombine.low %v192, %v193
    %v222 = vcombine.low %v194, %v195
    %v224 = vunpack.c.l.s4 1983009808
    %v225 = vunpack.c.0.s8 %v224
    %v226 = vlaneseq
    %v227 = vshrl.u32 %v226, 7
    %v228 = vsub.s32 %v225, %v227
    %v229 = vrot.slane %v221, %v228
    %v231 = vunpack.c.l.s4 1983009808
    %v232 = vunpack.c.0.s8 %v231
    %v233 = vlaneseq
    %v234 = vshrl.u32 %v233, 7
    %v235 = vsub.s32 %v232, %v234
    %v236 = vrot.slane %v222, %v235
    %v237 = vcombine.low %v229, %v236
    %240 = vst [vmem:[#allocation2] sm:$0x55] %v220
    %241 = vst [vmem:[#allocation2 + $0x8] sm:$0x55] %v237
    %v242 = vld [vmem:[%s1] sm:$0xff]
    %v243 = vld [vmem:[%s1 + $0x8] sm:$0xff]
    %v246 = vcombine.high %v242, %v242
    %v248 = vunpack.c.l.s4 1983009808
    %v249 = vunpack.c.0.s8 %v248
    %v250 = vlaneseq
    %v251 = vshrl.u32 %v250, 7
    %v252 = vsub.s32 %v249, %v251
    %v253 = vrot.slane %v242, %v252
    %v255 = vunpack.c.l.s4 1983009808
    %v256 = vunpack.c.0.s8 %v255
    %v257 = vlaneseq
    %v258 = vshrl.u32 %v257, 7
    %v259 = vsub.s32 %v256, %v258
    %v260 = vrot.slane %v246, %v259
    %v261 = vcombine.high %v253, %v253
    %v262 = vcombine.high %v260, %v260
    %v263 = vcombine.high %v243, %v243
    %v265 = vunpack.c.l.s4 1983009808
    %v266 = vunpack.c.0.s8 %v265
    %v267 = vlaneseq
    %v268 = vshrl.u32 %v267, 7
    %v269 = vsub.s32 %v266, %v268
    %v270 = vrot.slane %v243, %v269
    %v272 = vunpack.c.l.s4 1983009808
    %v273 = vunpack.c.0.s8 %v272
    %v274 = vlaneseq
    %v275 = vshrl.u32 %v274, 7
    %v276 = vsub.s32 %v273, %v275
    %v277 = vrot.slane %v263, %v276
    %v278 = vcombine.high %v270, %v270
    %v279 = vcombine.high %v277, %v277
    %v288 = vpack.c.bf16 %v253, %v253
    %v289 = vpack.c.bf16 %v261, %v261
    %v290 = vpack.c.bf16 %v260, %v260
    %v291 = vpack.c.bf16 %v262, %v262
    %v292 = vpack.c.bf16 %v270, %v270
    %v293 = vpack.c.bf16 %v278, %v278
    %v294 = vpack.c.bf16 %v277, %v277
    %v295 = vpack.c.bf16 %v279, %v279
    %v304 = vcombine.low %v288, %v289
    %v305 = vcombine.low %v290, %v291
    %v307 = vunpack.c.l.s4 1983009808
    %v308 = vunpack.c.0.s8 %v307
    %v309 = vlaneseq
    %v310 = vshrl.u32 %v309, 7
    %v311 = vsub.s32 %v308, %v310
    %v312 = vrot.slane %v304, %v311
    %v314 = vunpack.c.l.s4 1983009808
    %v315 = vunpack.c.0.s8 %v314
    %v316 = vlaneseq
    %v317 = vshrl.u32 %v316, 7
    %v318 = vsub.s32 %v315, %v317
    %v319 = vrot.slane %v305, %v318
    %v320 = vcombine.low %v312, %v319
    %v321 = vcombine.low %v292, %v293
    %v322 = vcombine.low %v294, %v295
    %v324 = vunpack.c.l.s4 1983009808
    %v325 = vunpack.c.0.s8 %v324
    %v326 = vlaneseq
    %v327 = vshrl.u32 %v326, 7
    %v328 = vsub.s32 %v325, %v327
    %v329 = vrot.slane %v321, %v328
    %v331 = vunpack.c.l.s4 1983009808
    %v332 = vunpack.c.0.s8 %v331
    %v333 = vlaneseq
    %v334 = vshrl.u32 %v333, 7
    %v335 = vsub.s32 %v332, %v334
    %v336 = vrot.slane %v322, %v335
    %v337 = vcombine.low %v329, %v336
    %v338 = vrot.slane %v320, 7
    %v339 = vrot.slane %v337, 7
    %342 = vst [vmem:[#allocation2] sm:$0xaa] %v338
    %343 = vst [vmem:[#allocation2 + $0x8] sm:$0xaa] %v339
    %v344 = vld [vmem:[#allocation2] sm:$0xff]
    %v345 = vld [vmem:[#allocation2 + $0x8] sm:$0xff]
    %v346 = vld [vmem:[#allocation3] sm:$0xff]
    %v347 = vld [vmem:[#allocation3 + $0x8] sm:$0xff]
    %v348 = vld [vmem:[#allocation3 + $0x10] sm:$0xff]
    %v349 = vld [vmem:[#allocation3 + $0x18] sm:$0xff]
    %v350 = vld [vmem:[#allocation3 + $0x20] sm:$0xff]
    %v351 = vld [vmem:[#allocation3 + $0x28] sm:$0xff]
    %v352 = vld [vmem:[#allocation3 + $0x30] sm:$0xff]
    %v353 = vld [vmem:[#allocation3 + $0x38] sm:$0xff]
    %v354 = vld [vmem:[#allocation3 + $0x40] sm:$0xff]
    %v355 = vld [vmem:[#allocation3 + $0x48] sm:$0xff]
    %v356 = vld [vmem:[#allocation3 + $0x50] sm:$0xff]
    %v357 = vld [vmem:[#allocation3 + $0x58] sm:$0xff]
    %v358 = vld [vmem:[#allocation3 + $0x60] sm:$0xff]
    %v359 = vld [vmem:[#allocation3 + $0x68] sm:$0xff]
    %v360 = vld [vmem:[#allocation3 + $0x70] sm:$0xff]
    %v361 = vld [vmem:[#allocation3 + $0x78] sm:$0xff]
    %v362 = vld [vmem:[#allocation3 + $0x80] sm:$0xff]
    %v363 = vld [vmem:[#allocation3 + $0x88] sm:$0xff]
    %v364 = vld [vmem:[#allocation3 + $0x90] sm:$0xff]
    %v365 = vld [vmem:[#allocation3 + $0x98] sm:$0xff]
    %v366 = vld [vmem:[#allocation3 + $0xa0] sm:$0xff]
    %v367 = vld [vmem:[#allocation3 + $0xa8] sm:$0xff]
    %v368 = vld [vmem:[#allocation3 + $0xb0] sm:$0xff]
    %v369 = vld [vmem:[#allocation3 + $0xb8] sm:$0xff]
    %v370 = vld [vmem:[#allocation3 + $0xc0] sm:$0xff]
    %v371 = vld [vmem:[#allocation3 + $0xc8] sm:$0xff]
    %v372 = vld [vmem:[#allocation3 + $0xd0] sm:$0xff]
    %v373 = vld [vmem:[#allocation3 + $0xd8] sm:$0xff]
    %v374 = vld [vmem:[#allocation3 + $0xe0] sm:$0xff]
    %v375 = vld [vmem:[#allocation3 + $0xe8] sm:$0xff]
    %v376 = vld [vmem:[#allocation3 + $0xf0] sm:$0xff]
    %v377 = vld [vmem:[#allocation3 + $0xf8] sm:$0xff]
    %v378 = vld [vmem:[#allocation3 + $0x100] sm:$0xff]
    %v379 = vld [vmem:[#allocation3 + $0x108] sm:$0xff]
    %v380 = vld [vmem:[#allocation3 + $0x110] sm:$0xff]
    %v381 = vld [vmem:[#allocation3 + $0x118] sm:$0xff]
    %v382 = vld [vmem:[#allocation3 + $0x120] sm:$0xff]
    %v383 = vld [vmem:[#allocation3 + $0x128] sm:$0xff]
    %v384 = vld [vmem:[#allocation3 + $0x130] sm:$0xff]
    %v385 = vld [vmem:[#allocation3 + $0x138] sm:$0xff]
    %v386 = vld [vmem:[#allocation3 + $0x140] sm:$0xff]
    %v387 = vld [vmem:[#allocation3 + $0x148] sm:$0xff]
    %v388 = vld [vmem:[#allocation3 + $0x150] sm:$0xff]
    %v389 = vld [vmem:[#allocation3 + $0x158] sm:$0xff]
    %v390 = vld [vmem:[#allocation3 + $0x160] sm:$0xff]
    %v391 = vld [vmem:[#allocation3 + $0x168] sm:$0xff]
    %v392 = vld [vmem:[#allocation3 + $0x170] sm:$0xff]
    %v393 = vld [vmem:[#allocation3 + $0x178] sm:$0xff]
    %v394 = vld [vmem:[#allocation3 + $0x180] sm:$0xff]
    %v395 = vld [vmem:[#allocation3 + $0x188] sm:$0xff]
    %v396 = vld [vmem:[#allocation3 + $0x190] sm:$0xff]
    %v397 = vld [vmem:[#allocation3 + $0x198] sm:$0xff]
    %v398 = vld [vmem:[#allocation3 + $0x1a0] sm:$0xff]
    %v399 = vld [vmem:[#allocation3 + $0x1a8] sm:$0xff]
    %v400 = vld [vmem:[#allocation3 + $0x1b0] sm:$0xff]
    %v401 = vld [vmem:[#allocation3 + $0x1b8] sm:$0xff]
    %v402 = vld [vmem:[#allocation3 + $0x1c0] sm:$0xff]
    %v403 = vld [vmem:[#allocation3 + $0x1c8] sm:$0xff]
    %v404 = vld [vmem:[#allocation3 + $0x1d0] sm:$0xff]
    %v405 = vld [vmem:[#allocation3 + $0x1d8] sm:$0xff]
    %v406 = vld [vmem:[#allocation3 + $0x1e0] sm:$0xff]
    %v407 = vld [vmem:[#allocation3 + $0x1e8] sm:$0xff]
    %v408 = vld [vmem:[#allocation3 + $0x1f0] sm:$0xff]
    %v409 = vld [vmem:[#allocation3 + $0x1f8] sm:$0xff]
    %v410 = vld [vmem:[#allocation3 + $0x200] sm:$0xff]
    %v411 = vld [vmem:[#allocation3 + $0x208] sm:$0xff]
    %v412 = vld [vmem:[#allocation3 + $0x210] sm:$0xff]
    %v413 = vld [vmem:[#allocation3 + $0x218] sm:$0xff]
    %v414 = vld [vmem:[#allocation3 + $0x220] sm:$0xff]
    %v415 = vld [vmem:[#allocation3 + $0x228] sm:$0xff]
    %v416 = vld [vmem:[#allocation3 + $0x230] sm:$0xff]
    %v417 = vld [vmem:[#allocation3 + $0x238] sm:$0xff]
    %v418 = vld [vmem:[#allocation3 + $0x240] sm:$0xff]
    %v419 = vld [vmem:[#allocation3 + $0x248] sm:$0xff]
    %v420 = vld [vmem:[#allocation3 + $0x250] sm:$0xff]
    %v421 = vld [vmem:[#allocation3 + $0x258] sm:$0xff]
    %v422 = vld [vmem:[#allocation3 + $0x260] sm:$0xff]
    %v423 = vld [vmem:[#allocation3 + $0x268] sm:$0xff]
    %v424 = vld [vmem:[#allocation3 + $0x270] sm:$0xff]
    %v425 = vld [vmem:[#allocation3 + $0x278] sm:$0xff]
    %v426 = vld [vmem:[#allocation3 + $0x280] sm:$0xff]
    %v427 = vld [vmem:[#allocation3 + $0x288] sm:$0xff]
    %v428 = vld [vmem:[#allocation3 + $0x290] sm:$0xff]
    %v429 = vld [vmem:[#allocation3 + $0x298] sm:$0xff]
    %v430 = vld [vmem:[#allocation3 + $0x2a0] sm:$0xff]
    %v431 = vld [vmem:[#allocation3 + $0x2a8] sm:$0xff]
    %v432 = vld [vmem:[#allocation3 + $0x2b0] sm:$0xff]
    %v433 = vld [vmem:[#allocation3 + $0x2b8] sm:$0xff]
    %v434 = vld [vmem:[#allocation3 + $0x2c0] sm:$0xff]
    %v435 = vld [vmem:[#allocation3 + $0x2c8] sm:$0xff]
    %v436 = vld [vmem:[#allocation3 + $0x2d0] sm:$0xff]
    %v437 = vld [vmem:[#allocation3 + $0x2d8] sm:$0xff]
    %v438 = vld [vmem:[#allocation3 + $0x2e0] sm:$0xff]
    %v439 = vld [vmem:[#allocation3 + $0x2e8] sm:$0xff]
    %v440 = vld [vmem:[#allocation3 + $0x2f0] sm:$0xff]
    %v441 = vld [vmem:[#allocation3 + $0x2f8] sm:$0xff]
    %v442 = vld [vmem:[#allocation3 + $0x300] sm:$0xff]
    %v443 = vld [vmem:[#allocation3 + $0x308] sm:$0xff]
    %v444 = vld [vmem:[#allocation3 + $0x310] sm:$0xff]
    %v445 = vld [vmem:[#allocation3 + $0x318] sm:$0xff]
    %v446 = vld [vmem:[#allocation3 + $0x320] sm:$0xff]
    %v447 = vld [vmem:[#allocation3 + $0x328] sm:$0xff]
    %v448 = vld [vmem:[#allocation3 + $0x330] sm:$0xff]
    %v449 = vld [vmem:[#allocation3 + $0x338] sm:$0xff]
    %v450 = vld [vmem:[#allocation3 + $0x340] sm:$0xff]
    %v451 = vld [vmem:[#allocation3 + $0x348] sm:$0xff]
    %v452 = vld [vmem:[#allocation3 + $0x350] sm:$0xff]
    %v453 = vld [vmem:[#allocation3 + $0x358] sm:$0xff]
    %v454 = vld [vmem:[#allocation3 + $0x360] sm:$0xff]
    %v455 = vld [vmem:[#allocation3 + $0x368] sm:$0xff]
    %v456 = vld [vmem:[#allocation3 + $0x370] sm:$0xff]
    %v457 = vld [vmem:[#allocation3 + $0x378] sm:$0xff]
    %v458 = vld [vmem:[#allocation3 + $0x380] sm:$0xff]
    %v459 = vld [vmem:[#allocation3 + $0x388] sm:$0xff]
    %v460 = vld [vmem:[#allocation3 + $0x390] sm:$0xff]
    %v461 = vld [vmem:[#allocation3 + $0x398] sm:$0xff]
    %v462 = vld [vmem:[#allocation3 + $0x3a0] sm:$0xff]
    %v463 = vld [vmem:[#allocation3 + $0x3a8] sm:$0xff]
    %v464 = vld [vmem:[#allocation3 + $0x3b0] sm:$0xff]
    %v465 = vld [vmem:[#allocation3 + $0x3b8] sm:$0xff]
    %v466 = vld [vmem:[#allocation3 + $0x3c0] sm:$0xff]
    %v467 = vld [vmem:[#allocation3 + $0x3c8] sm:$0xff]
    %v468 = vld [vmem:[#allocation3 + $0x3d0] sm:$0xff]
    %v469 = vld [vmem:[#allocation3 + $0x3d8] sm:$0xff]
    %v470 = vld [vmem:[#allocation3 + $0x3e0] sm:$0xff]
    %v471 = vld [vmem:[#allocation3 + $0x3e8] sm:$0xff]
    %v472 = vld [vmem:[#allocation3 + $0x3f0] sm:$0xff]
    %v473 = vld [vmem:[#allocation3 + $0x3f8] sm:$0xff]
    %v476 = vcombine.high %v344, %v344
    %v478 = vunpack.c.l.s4 1983009808
    %v479 = vunpack.c.0.s8 %v478
    %v480 = vlaneseq
    %v481 = vshrl.u32 %v480, 7
    %v482 = vsub.s32 %v479, %v481
    %v483 = vrot.slane %v344, %v482
    %v485 = vunpack.c.l.s4 1983009808
    %v486 = vunpack.c.0.s8 %v485
    %v487 = vlaneseq
    %v488 = vshrl.u32 %v487, 7
    %v489 = vsub.s32 %v486, %v488
    %v490 = vrot.slane %v476, %v489
    %v491 = vcombine.high %v483, %v483
    %v492 = vcombine.high %v490, %v490
    %v493 = vcombine.high %v345, %v345
    %v495 = vunpack.c.l.s4 1983009808
    %v496 = vunpack.c.0.s8 %v495
    %v497 = vlaneseq
    %v498 = vshrl.u32 %v497, 7
    %v499 = vsub.s32 %v496, %v498
    %v500 = vrot.slane %v345, %v499
    %v502 = vunpack.c.l.s4 1983009808
    %v503 = vunpack.c.0.s8 %v502
    %v504 = vlaneseq
    %v505 = vshrl.u32 %v504, 7
    %v506 = vsub.s32 %v503, %v505
    %v507 = vrot.slane %v493, %v506
    %v508 = vcombine.high %v500, %v500
    %v509 = vcombine.high %v507, %v507
    %v646 = vunpack.c.l.b16 %v346
    %v647 = vunpack.c.h.b16 %v346
    %v648 = vunpack.c.l.b16 %v347
    %v649 = vunpack.c.h.b16 %v347
    %v650 = vunpack.c.l.b16 %v348
    %v651 = vunpack.c.h.b16 %v348
    %v652 = vunpack.c.l.b16 %v349
    %v653 = vunpack.c.h.b16 %v349
    %v654 = vunpack.c.l.b16 %v350
    %v655 = vunpack.c.h.b16 %v350
    %v656 = vunpack.c.l.b16 %v351
    %v657 = vunpack.c.h.b16 %v351
    %v658 = vunpack.c.l.b16 %v352
    %v659 = vunpack.c.h.b16 %v352
    %v660 = vunpack.c.l.b16 %v353
    %v661 = vunpack.c.h.b16 %v353
    %v662 = vunpack.c.l.b16 %v354
    %v663 = vunpack.c.h.b16 %v354
    %v664 = vunpack.c.l.b16 %v355
    %v665 = vunpack.c.h.b16 %v355
    %v666 = vunpack.c.l.b16 %v356
    %v667 = vunpack.c.h.b16 %v356
    %v668 = vunpack.c.l.b16 %v357
    %v669 = vunpack.c.h.b16 %v357
    %v670 = vunpack.c.l.b16 %v358
    %v671 = vunpack.c.h.b16 %v358
    %v672 = vunpack.c.l.b16 %v359
    %v673 = vunpack.c.h.b16 %v359
    %v674 = vunpack.c.l.b16 %v360
    %v675 = vunpack.c.h.b16 %v360
    %v676 = vunpack.c.l.b16 %v361
    %v677 = vunpack.c.h.b16 %v361
    %v678 = vunpack.c.l.b16 %v362
    %v679 = vunpack.c.h.b16 %v362
    %v680 = vunpack.c.l.b16 %v363
    %v681 = vunpack.c.h.b16 %v363
    %v682 = vunpack.c.l.b16 %v364
    %v683 = vunpack.c.h.b16 %v364
    %v684 = vunpack.c.l.b16 %v365
    %v685 = vunpack.c.h.b16 %v365
    %v686 = vunpack.c.l.b16 %v366
    %v687 = vunpack.c.h.b16 %v366
    %v688 = vunpack.c.l.b16 %v367
    %v689 = vunpack.c.h.b16 %v367
    %v690 = vunpack.c.l.b16 %v368
    %v691 = vunpack.c.h.b16 %v368
    %v692 = vunpack.c.l.b16 %v369
    %v693 = vunpack.c.h.b16 %v369
    %v694 = vunpack.c.l.b16 %v370
    %v695 = vunpack.c.h.b16 %v370
    %v696 = vunpack.c.l.b16 %v371
    %v697 = vunpack.c.h.b16 %v371
    %v698 = vunpack.c.l.b16 %v372
    %v699 = vunpack.c.h.b16 %v372
    %v700 = vunpack.c.l.b16 %v373
    %v701 = vunpack.c.h.b16 %v373
    %v702 = vunpack.c.l.b16 %v374
    %v703 = vunpack.c.h.b16 %v374
    %v704 = vunpack.c.l.b16 %v375
    %v705 = vunpack.c.h.b16 %v375
    %v706 = vunpack.c.l.b16 %v376
    %v707 = vunpack.c.h.b16 %v376
    %v708 = vunpack.c.l.b16 %v377
    %v709 = vunpack.c.h.b16 %v377
    %v710 = vunpack.c.l.b16 %v378
    %v711 = vunpack.c.h.b16 %v378
    %v712 = vunpack.c.l.b16 %v379
    %v713 = vunpack.c.h.b16 %v379
    %v714 = vunpack.c.l.b16 %v380
    %v715 = vunpack.c.h.b16 %v380
    %v716 = vunpack.c.l.b16 %v381
    %v717 = vunpack.c.h.b16 %v381
    %v718 = vunpack.c.l.b16 %v382
    %v719 = vunpack.c.h.b16 %v382
    %v720 = vunpack.c.l.b16 %v383
    %v721 = vunpack.c.h.b16 %v383
    %v722 = vunpack.c.l.b16 %v384
    %v723 = vunpack.c.h.b16 %v384
    %v724 = vunpack.c.l.b16 %v385
    %v725 = vunpack.c.h.b16 %v385
    %v726 = vunpack.c.l.b16 %v386
    %v727 = vunpack.c.h.b16 %v386
    %v728 = vunpack.c.l.b16 %v387
    %v729 = vunpack.c.h.b16 %v387
    %v730 = vunpack.c.l.b16 %v388
    %v731 = vunpack.c.h.b16 %v388
    %v732 = vunpack.c.l.b16 %v389
    %v733 = vunpack.c.h.b16 %v389
    %v734 = vunpack.c.l.b16 %v390
    %v735 = vunpack.c.h.b16 %v390
    %v736 = vunpack.c.l.b16 %v391
    %v737 = vunpack.c.h.b16 %v391
    %v738 = vunpack.c.l.b16 %v392
    %v739 = vunpack.c.h.b16 %v392
    %v740 = vunpack.c.l.b16 %v393
    %v741 = vunpack.c.h.b16 %v393
    %v742 = vunpack.c.l.b16 %v394
    %v743 = vunpack.c.h.b16 %v394
    %v744 = vunpack.c.l.b16 %v395
    %v745 = vunpack.c.h.b16 %v395
    %v746 = vunpack.c.l.b16 %v396
    %v747 = vunpack.c.h.b16 %v396
    %v748 = vunpack.c.l.b16 %v397
    %v749 = vunpack.c.h.b16 %v397
    %v750 = vunpack.c.l.b16 %v398
    %v751 = vunpack.c.h.b16 %v398
    %v752 = vunpack.c.l.b16 %v399
    %v753 = vunpack.c.h.b16 %v399
    %v754 = vunpack.c.l.b16 %v400
    %v755 = vunpack.c.h.b16 %v400
    %v756 = vunpack.c.l.b16 %v401
    %v757 = vunpack.c.h.b16 %v401
    %v758 = vunpack.c.l.b16 %v402
    %v759 = vunpack.c.h.b16 %v402
    %v760 = vunpack.c.l.b16 %v403
    %v761 = vunpack.c.h.b16 %v403
    %v762 = vunpack.c.l.b16 %v404
    %v763 = vunpack.c.h.b16 %v404
    %v764 = vunpack.c.l.b16 %v405
    %v765 = vunpack.c.h.b16 %v405
    %v766 = vunpack.c.l.b16 %v406
    %v767 = vunpack.c.h.b16 %v406
    %v768 = vunpack.c.l.b16 %v407
    %v769 = vunpack.c.h.b16 %v407
    %v770 = vunpack.c.l.b16 %v408
    %v771 = vunpack.c.h.b16 %v408
    %v772 = vunpack.c.l.b16 %v409
    %v773 = vunpack.c.h.b16 %v409
    %v774 = vunpack.c.l.b16 %v410
    %v775 = vunpack.c.h.b16 %v410
    %v776 = vunpack.c.l.b16 %v411
    %v777 = vunpack.c.h.b16 %v411
    %v778 = vunpack.c.l.b16 %v412
    %v779 = vunpack.c.h.b16 %v412
    %v780 = vunpack.c.l.b16 %v413
    %v781 = vunpack.c.h.b16 %v413
    %v782 = vunpack.c.l.b16 %v414
    %v783 = vunpack.c.h.b16 %v414
    %v784 = vunpack.c.l.b16 %v415
    %v785 = vunpack.c.h.b16 %v415
    %v786 = vunpack.c.l.b16 %v416
    %v787 = vunpack.c.h.b16 %v416
    %v788 = vunpack.c.l.b16 %v417
    %v789 = vunpack.c.h.b16 %v417
    %v790 = vunpack.c.l.b16 %v418
    %v791 = vunpack.c.h.b16 %v418
    %v792 = vunpack.c.l.b16 %v419
    %v793 = vunpack.c.h.b16 %v419
    %v794 = vunpack.c.l.b16 %v420
    %v795 = vunpack.c.h.b16 %v420
    %v796 = vunpack.c.l.b16 %v421
    %v797 = vunpack.c.h.b16 %v421
    %v798 = vunpack.c.l.b16 %v422
    %v799 = vunpack.c.h.b16 %v422
    %v800 = vunpack.c.l.b16 %v423
    %v801 = vunpack.c.h.b16 %v423
    %v802 = vunpack.c.l.b16 %v424
    %v803 = vunpack.c.h.b16 %v424
    %v804 = vunpack.c.l.b16 %v425
    %v805 = vunpack.c.h.b16 %v425
    %v806 = vunpack.c.l.b16 %v426
    %v807 = vunpack.c.h.b16 %v426
    %v808 = vunpack.c.l.b16 %v427
    %v809 = vunpack.c.h.b16 %v427
    %v810 = vunpack.c.l.b16 %v428
    %v811 = vunpack.c.h.b16 %v428
    %v812 = vunpack.c.l.b16 %v429
    %v813 = vunpack.c.h.b16 %v429
    %v814 = vunpack.c.l.b16 %v430
    %v815 = vunpack.c.h.b16 %v430
    %v816 = vunpack.c.l.b16 %v431
    %v817 = vunpack.c.h.b16 %v431
    %v818 = vunpack.c.l.b16 %v432
    %v819 = vunpack.c.h.b16 %v432
    %v820 = vunpack.c.l.b16 %v433
    %v821 = vunpack.c.h.b16 %v433
    %v822 = vunpack.c.l.b16 %v434
    %v823 = vunpack.c.h.b16 %v434
    %v824 = vunpack.c.l.b16 %v435
    %v825 = vunpack.c.h.b16 %v435
    %v826 = vunpack.c.l.b16 %v436
    %v827 = vunpack.c.h.b16 %v436
    %v828 = vunpack.c.l.b16 %v437
    %v829 = vunpack.c.h.b16 %v437
    %v830 = vunpack.c.l.b16 %v438
    %v831 = vunpack.c.h.b16 %v438
    %v832 = vunpack.c.l.b16 %v439
    %v833 = vunpack.c.h.b16 %v439
    %v834 = vunpack.c.l.b16 %v440
    %v835 = vunpack.c.h.b16 %v440
    %v836 = vunpack.c.l.b16 %v441
    %v837 = vunpack.c.h.b16 %v441
    %v838 = vunpack.c.l.b16 %v442
    %v839 = vunpack.c.h.b16 %v442
    %v840 = vunpack.c.l.b16 %v443
    %v841 = vunpack.c.h.b16 %v443
    %v842 = vunpack.c.l.b16 %v444
    %v843 = vunpack.c.h.b16 %v444
    %v844 = vunpack.c.l.b16 %v445
    %v845 = vunpack.c.h.b16 %v445
    %v846 = vunpack.c.l.b16 %v446
    %v847 = vunpack.c.h.b16 %v446
    %v848 = vunpack.c.l.b16 %v447
    %v849 = vunpack.c.h.b16 %v447
    %v850 = vunpack.c.l.b16 %v448
    %v851 = vunpack.c.h.b16 %v448
    %v852 = vunpack.c.l.b16 %v449
    %v853 = vunpack.c.h.b16 %v449
    %v854 = vunpack.c.l.b16 %v450
    %v855 = vunpack.c.h.b16 %v450
    %v856 = vunpack.c.l.b16 %v451
    %v857 = vunpack.c.h.b16 %v451
    %v858 = vunpack.c.l.b16 %v452
    %v859 = vunpack.c.h.b16 %v452
    %v860 = vunpack.c.l.b16 %v453
    %v861 = vunpack.c.h.b16 %v453
    %v862 = vunpack.c.l.b16 %v454
    %v863 = vunpack.c.h.b16 %v454
    %v864 = vunpack.c.l.b16 %v455
    %v865 = vunpack.c.h.b16 %v455
    %v866 = vunpack.c.l.b16 %v456
    %v867 = vunpack.c.h.b16 %v456
    %v868 = vunpack.c.l.b16 %v457
    %v869 = vunpack.c.h.b16 %v457
    %v870 = vunpack.c.l.b16 %v458
    %v871 = vunpack.c.h.b16 %v458
    %v872 = vunpack.c.l.b16 %v459
    %v873 = vunpack.c.h.b16 %v459
    %v874 = vunpack.c.l.b16 %v460
    %v875 = vunpack.c.h.b16 %v460
    %v876 = vunpack.c.l.b16 %v461
    %v877 = vunpack.c.h.b16 %v461
    %v878 = vunpack.c.l.b16 %v462
    %v879 = vunpack.c.h.b16 %v462
    %v880 = vunpack.c.l.b16 %v463
    %v881 = vunpack.c.h.b16 %v463
    %v882 = vunpack.c.l.b16 %v464
    %v883 = vunpack.c.h.b16 %v464
    %v884 = vunpack.c.l.b16 %v465
    %v885 = vunpack.c.h.b16 %v465
    %v886 = vunpack.c.l.b16 %v466
    %v887 = vunpack.c.h.b16 %v466
    %v888 = vunpack.c.l.b16 %v467
    %v889 = vunpack.c.h.b16 %v467
    %v890 = vunpack.c.l.b16 %v468
    %v891 = vunpack.c.h.b16 %v468
    %v892 = vunpack.c.l.b16 %v469
    %v893 = vunpack.c.h.b16 %v469
    %v894 = vunpack.c.l.b16 %v470
    %v895 = vunpack.c.h.b16 %v470
    %v896 = vunpack.c.l.b16 %v471
    %v897 = vunpack.c.h.b16 %v471
    %v898 = vunpack.c.l.b16 %v472
    %v899 = vunpack.c.h.b16 %v472
    %v900 = vunpack.c.l.b16 %v473
    %v901 = vunpack.c.h.b16 %v473
    %v902 = vpack.c.b16 %v648, %v646
    %v903 = vpack.c.b16 %v649, %v647
    %v904 = vpack.c.b16 %v652, %v650
    %v905 = vpack.c.b16 %v653, %v651
    %v906 = vpack.c.b16 %v656, %v654
    %v907 = vpack.c.b16 %v657, %v655
    %v908 = vpack.c.b16 %v660, %v658
    %v909 = vpack.c.b16 %v661, %v659
    %v910 = vpack.c.b16 %v664, %v662
    %v911 = vpack.c.b16 %v665, %v663
    %v912 = vpack.c.b16 %v668, %v666
    %v913 = vpack.c.b16 %v669, %v667
    %v914 = vpack.c.b16 %v672, %v670
    %v915 = vpack.c.b16 %v673, %v671
    %v916 = vpack.c.b16 %v676, %v674
    %v917 = vpack.c.b16 %v677, %v675
    %v918 = vpack.c.b16 %v680, %v678
    %v919 = vpack.c.b16 %v681, %v679
    %v920 = vpack.c.b16 %v684, %v682
    %v921 = vpack.c.b16 %v685, %v683
    %v922 = vpack.c.b16 %v688, %v686
    %v923 = vpack.c.b16 %v689, %v687
    %v924 = vpack.c.b16 %v692, %v690
    %v925 = vpack.c.b16 %v693, %v691
    %v926 = vpack.c.b16 %v696, %v694
    %v927 = vpack.c.b16 %v697, %v695
    %v928 = vpack.c.b16 %v700, %v698
    %v929 = vpack.c.b16 %v701, %v699
    %v930 = vpack.c.b16 %v704, %v702
    %v931 = vpack.c.b16 %v705, %v703
    %v932 = vpack.c.b16 %v708, %v706
    %v933 = vpack.c.b16 %v709, %v707
    %v934 = vpack.c.b16 %v712, %v710
    %v935 = vpack.c.b16 %v713, %v711
    %v936 = vpack.c.b16 %v716, %v714
    %v937 = vpack.c.b16 %v717, %v715
    %v938 = vpack.c.b16 %v720, %v718
    %v939 = vpack.c.b16 %v721, %v719
    %v940 = vpack.c.b16 %v724, %v722
    %v941 = vpack.c.b16 %v725, %v723
    %v942 = vpack.c.b16 %v728, %v726
    %v943 = vpack.c.b16 %v729, %v727
    %v944 = vpack.c.b16 %v732, %v730
    %v945 = vpack.c.b16 %v733, %v731
    %v946 = vpack.c.b16 %v736, %v734
    %v947 = vpack.c.b16 %v737, %v735
    %v948 = vpack.c.b16 %v740, %v738
    %v949 = vpack.c.b16 %v741, %v739
    %v950 = vpack.c.b16 %v744, %v742
    %v951 = vpack.c.b16 %v745, %v743
    %v952 = vpack.c.b16 %v748, %v746
    %v953 = vpack.c.b16 %v749, %v747
    %v954 = vpack.c.b16 %v752, %v750
    %v955 = vpack.c.b16 %v753, %v751
    %v956 = vpack.c.b16 %v756, %v754
    %v957 = vpack.c.b16 %v757, %v755
    %v958 = vpack.c.b16 %v760, %v758
    %v959 = vpack.c.b16 %v761, %v759
    %v960 = vpack.c.b16 %v764, %v762
    %v961 = vpack.c.b16 %v765, %v763
    %v962 = vpack.c.b16 %v768, %v766
    %v963 = vpack.c.b16 %v769, %v767
    %v964 = vpack.c.b16 %v772, %v770
    %v965 = vpack.c.b16 %v773, %v771
    %v966 = vpack.c.b16 %v776, %v774
    %v967 = vpack.c.b16 %v777, %v775
    %v968 = vpack.c.b16 %v780, %v778
    %v969 = vpack.c.b16 %v781, %v779
    %v970 = vpack.c.b16 %v784, %v782
    %v971 = vpack.c.b16 %v785, %v783
    %v972 = vpack.c.b16 %v788, %v786
    %v973 = vpack.c.b16 %v789, %v787
    %v974 = vpack.c.b16 %v792, %v790
    %v975 = vpack.c.b16 %v793, %v791
    %v976 = vpack.c.b16 %v796, %v794
    %v977 = vpack.c.b16 %v797, %v795
    %v978 = vpack.c.b16 %v800, %v798
    %v979 = vpack.c.b16 %v801, %v799
    %v980 = vpack.c.b16 %v804, %v802
    %v981 = vpack.c.b16 %v805, %v803
    %v982 = vpack.c.b16 %v808, %v806
    %v983 = vpack.c.b16 %v809, %v807
    %v984 = vpack.c.b16 %v812, %v810
    %v985 = vpack.c.b16 %v813, %v811
    %v986 = vpack.c.b16 %v816, %v814
    %v987 = vpack.c.b16 %v817, %v815
    %v988 = vpack.c.b16 %v820, %v818
    %v989 = vpack.c.b16 %v821, %v819
    %v990 = vpack.c.b16 %v824, %v822
    %v991 = vpack.c.b16 %v825, %v823
    %v992 = vpack.c.b16 %v828, %v826
    %v993 = vpack.c.b16 %v829, %v827
    %v994 = vpack.c.b16 %v832, %v830
    %v995 = vpack.c.b16 %v833, %v831
    %v996 = vpack.c.b16 %v836, %v834
    %v997 = vpack.c.b16 %v837, %v835
    %v998 = vpack.c.b16 %v840, %v838
    %v999 = vpack.c.b16 %v841, %v839
    %v1000 = vpack.c.b16 %v844, %v842
    %v1001 = vpack.c.b16 %v845, %v843
    %v1002 = vpack.c.b16 %v848, %v846
    %v1003 = vpack.c.b16 %v849, %v847
    %v1004 = vpack.c.b16 %v852, %v850
    %v1005 = vpack.c.b16 %v853, %v851
    %v1006 = vpack.c.b16 %v856, %v854
    %v1007 = vpack.c.b16 %v857, %v855
    %v1008 = vpack.c.b16 %v860, %v858
    %v1009 = vpack.c.b16 %v861, %v859
    %v1010 = vpack.c.b16 %v864, %v862
    %v1011 = vpack.c.b16 %v865, %v863
    %v1012 = vpack.c.b16 %v868, %v866
    %v1013 = vpack.c.b16 %v869, %v867
    %v1014 = vpack.c.b16 %v872, %v870
    %v1015 = vpack.c.b16 %v873, %v871
    %v1016 = vpack.c.b16 %v876, %v874
    %v1017 = vpack.c.b16 %v877, %v875
    %v1018 = vpack.c.b16 %v880, %v878
    %v1019 = vpack.c.b16 %v881, %v879
    %v1020 = vpack.c.b16 %v884, %v882
    %v1021 = vpack.c.b16 %v885, %v883
    %v1022 = vpack.c.b16 %v888, %v886
    %v1023 = vpack.c.b16 %v889, %v887
    %v1024 = vpack.c.b16 %v892, %v890
    %v1025 = vpack.c.b16 %v893, %v891
    %v1026 = vpack.c.b16 %v896, %v894
    %v1027 = vpack.c.b16 %v897, %v895
    %v1028 = vpack.c.b16 %v900, %v898
    %v1029 = vpack.c.b16 %v901, %v899
    %1158 = vmatprep.subr.bf16.mxu0 %v903
    %1159 = vmatpush1.bf16.msra.mxu0 %v902
    %1160 = vmatprep.subr.bf16.mxu0 %v905
    %1161 = vmatpush1.bf16.msra.mxu0 %v904
    %1162 = vmatprep.subr.bf16.mxu0 %v907
    %1163 = vmatpush1.bf16.msra.mxu0 %v906
    %1164 = vmatprep.subr.bf16.mxu0 %v909
    %1165 = vmatpush1.bf16.msra.mxu0 %v908
    %1166 = vmatprep.subr.bf16.mxu0 %v911
    %1167 = vmatpush1.bf16.msra.mxu0 %v910
    %1168 = vmatprep.subr.bf16.mxu0 %v913
    %1169 = vmatpush1.bf16.msra.mxu0 %v912
    %1170 = vmatprep.subr.bf16.mxu0 %v915
    %1171 = vmatpush1.bf16.msra.mxu0 %v914
    %1172 = vmatprep.subr.bf16.mxu0 %v917
    %1173 = vmatpush1.bf16.msra.mxu0 %v916
    %1174 = vmatprep.subr.bf16.mxu0 %v919
    %1175 = vmatpush1.bf16.msra.mxu0 %v918
    %1176 = vmatprep.subr.bf16.mxu0 %v921
    %1177 = vmatpush1.bf16.msra.mxu0 %v920
    %1178 = vmatprep.subr.bf16.mxu0 %v923
    %1179 = vmatpush1.bf16.msra.mxu0 %v922
    %1180 = vmatprep.subr.bf16.mxu0 %v925
    %1181 = vmatpush1.bf16.msra.mxu0 %v924
    %1182 = vmatprep.subr.bf16.mxu0 %v927
    %1183 = vmatpush1.bf16.msra.mxu0 %v926
    %1184 = vmatprep.subr.bf16.mxu0 %v929
    %1185 = vmatpush1.bf16.msra.mxu0 %v928
    %1186 = vmatprep.subr.bf16.mxu0 %v931
    %1187 = vmatpush1.bf16.msra.mxu0 %v930
    %1188 = vmatprep.subr.bf16.mxu0 %v933
    %1189 = vmatpush1.bf16.msra.mxu0 %v932
    %1190 = vmatprep.mubr.bf16.mxu0 %v491
    %1191 = vmatmul.mubr.bf16.gmra.mrb[0].mxu0 %v483
    %v1192 = vpop.f32.mrb[0].mxu0
    %v1193 = vadd.f32 0.0, %v1192
    %v1194 = vpop.f32.mrb[0].mxu0
    %v1195 = vadd.f32 0.0, %v1194
    %v1196 = vpop.f32.mrb[0].mxu0
    %v1197 = vpop.f32.mrb[0].mxu0
    %1198 = vdwg.mxu0
    %1199 = vmatprep.subr.bf16.mxu0 %v935
    %1200 = vmatpush1.bf16.msra.mxu0 %v934
    %1201 = vmatprep.subr.bf16.mxu0 %v937
    %1202 = vmatpush1.bf16.msra.mxu0 %v936
    %1203 = vmatprep.subr.bf16.mxu0 %v939
    %1204 = vmatpush1.bf16.msra.mxu0 %v938
    %1205 = vmatprep.subr.bf16.mxu0 %v941
    %1206 = vmatpush1.bf16.msra.mxu0 %v940
    %1207 = vmatprep.subr.bf16.mxu0 %v943
    %1208 = vmatpush1.bf16.msra.mxu0 %v942
    %1209 = vmatprep.subr.bf16.mxu0 %v945
    %1210 = vmatpush1.bf16.msra.mxu0 %v944
    %1211 = vmatprep.subr.bf16.mxu0 %v947
    %1212 = vmatpush1.bf16.msra.mxu0 %v946
    %1213 = vmatprep.subr.bf16.mxu0 %v949
    %1214 = vmatpush1.bf16.msra.mxu0 %v948
    %1215 = vmatprep.subr.bf16.mxu0 %v951
    %1216 = vmatpush1.bf16.msra.mxu0 %v950
    %1217 = vmatprep.subr.bf16.mxu0 %v953
    %1218 = vmatpush1.bf16.msra.mxu0 %v952
    %1219 = vmatprep.subr.bf16.mxu0 %v955
    %1220 = vmatpush1.bf16.msra.mxu0 %v954
    %1221 = vmatprep.subr.bf16.mxu0 %v957
    %1222 = vmatpush1.bf16.msra.mxu0 %v956
    %1223 = vmatprep.subr.bf16.mxu0 %v959
    %1224 = vmatpush1.bf16.msra.mxu0 %v958
    %1225 = vmatprep.subr.bf16.mxu0 %v961
    %1226 = vmatpush1.bf16.msra.mxu0 %v960
    %1227 = vmatprep.subr.bf16.mxu0 %v963
    %1228 = vmatpush1.bf16.msra.mxu0 %v962
    %1229 = vmatprep.subr.bf16.mxu0 %v965
    %1230 = vmatpush1.bf16.msra.mxu0 %v964
    %1231 = vmatprep.mubr.bf16.mxu0 %v492
    %1232 = vmatmul.mubr.bf16.gmra.mrb[0].mxu0 %v490
    %v1233 = vpop.f32.mrb[0].mxu0
    %v1234 = vadd.f32 %v1193, %v1233
    %v1235 = vpop.f32.mrb[0].mxu0
    %v1236 = vadd.f32 %v1195, %v1235
    %v1237 = vpop.f32.mrb[0].mxu0
    %v1238 = vpop.f32.mrb[0].mxu0
    %1239 = vdwg.mxu0
    %1240 = vmatprep.subr.bf16.mxu0 %v967
    %1241 = vmatpush1.bf16.msra.mxu0 %v966
    %1242 = vmatprep.subr.bf16.mxu0 %v969
    %1243 = vmatpush1.bf16.msra.mxu0 %v968
    %1244 = vmatprep.subr.bf16.mxu0 %v971
    %1245 = vmatpush1.bf16.msra.mxu0 %v970
    %1246 = vmatprep.subr.bf16.mxu0 %v973
    %1247 = vmatpush1.bf16.msra.mxu0 %v972
    %1248 = vmatprep.subr.bf16.mxu0 %v975
    %1249 = vmatpush1.bf16.msra.mxu0 %v974
    %1250 = vmatprep.subr.bf16.mxu0 %v977
    %1251 = vmatpush1.bf16.msra.mxu0 %v976
    %1252 = vmatprep.subr.bf16.mxu0 %v979
    %1253 = vmatpush1.bf16.msra.mxu0 %v978
    %1254 = vmatprep.subr.bf16.mxu0 %v981
    %1255 = vmatpush1.bf16.msra.mxu0 %v980
    %1256 = vmatprep.subr.bf16.mxu0 %v983
    %1257 = vmatpush1.bf16.msra.mxu0 %v982
    %1258 = vmatprep.subr.bf16.mxu0 %v985
    %1259 = vmatpush1.bf16.msra.mxu0 %v984
    %1260 = vmatprep.subr.bf16.mxu0 %v987
    %1261 = vmatpush1.bf16.msra.mxu0 %v986
    %1262 = vmatprep.subr.bf16.mxu0 %v989
    %1263 = vmatpush1.bf16.msra.mxu0 %v988
    %1264 = vmatprep.subr.bf16.mxu0 %v991
    %1265 = vmatpush1.bf16.msra.mxu0 %v990
    %1266 = vmatprep.subr.bf16.mxu0 %v993
    %1267 = vmatpush1.bf16.msra.mxu0 %v992
    %1268 = vmatprep.subr.bf16.mxu0 %v995
    %1269 = vmatpush1.bf16.msra.mxu0 %v994
    %1270 = vmatprep.subr.bf16.mxu0 %v997
    %1271 = vmatpush1.bf16.msra.mxu0 %v996
    %1272 = vmatprep.mubr.bf16.mxu0 %v508
    %1273 = vmatmul.mubr.bf16.gmra.mrb[0].mxu0 %v500
    %v1274 = vpop.f32.mrb[0].mxu0
    %v1275 = vadd.f32 %v1234, %v1274
    %v1276 = vpop.f32.mrb[0].mxu0
    %v1277 = vadd.f32 %v1236, %v1276
    %v1278 = vpop.f32.mrb[0].mxu0
    %v1279 = vpop.f32.mrb[0].mxu0
    %1280 = vdwg.mxu0
    %1281 = vmatprep.subr.bf16.mxu0 %v999
    %1282 = vmatpush1.bf16.msra.mxu0 %v998
    %1283 = vmatprep.subr.bf16.mxu0 %v1001
    %1284 = vmatpush1.bf16.msra.mxu0 %v1000
    %1285 = vmatprep.subr.bf16.mxu0 %v1003
    %1286 = vmatpush1.bf16.msra.mxu0 %v1002
    %1287 = vmatprep.subr.bf16.mxu0 %v1005
    %1288 = vmatpush1.bf16.msra.mxu0 %v1004
    %1289 = vmatprep.subr.bf16.mxu0 %v1007
    %1290 = vmatpush1.bf16.msra.mxu0 %v1006
    %1291 = vmatprep.subr.bf16.mxu0 %v1009
    %1292 = vmatpush1.bf16.msra.mxu0 %v1008
    %1293 = vmatprep.subr.bf16.mxu0 %v1011
    %1294 = vmatpush1.bf16.msra.mxu0 %v1010
    %1295 = vmatprep.subr.bf16.mxu0 %v1013
    %1296 = vmatpush1.bf16.msra.mxu0 %v1012
    %1297 = vmatprep.subr.bf16.mxu0 %v1015
    %1298 = vmatpush1.bf16.msra.mxu0 %v1014
    %1299 = vmatprep.subr.bf16.mxu0 %v1017
    %1300 = vmatpush1.bf16.msra.mxu0 %v1016
    %1301 = vmatprep.subr.bf16.mxu0 %v1019
    %1302 = vmatpush1.bf16.msra.mxu0 %v1018
    %1303 = vmatprep.subr.bf16.mxu0 %v1021
    %1304 = vmatpush1.bf16.msra.mxu0 %v1020
    %1305 = vmatprep.subr.bf16.mxu0 %v1023
    %1306 = vmatpush1.bf16.msra.mxu0 %v1022
    %1307 = vmatprep.subr.bf16.mxu0 %v1025
    %1308 = vmatpush1.bf16.msra.mxu0 %v1024
    %1309 = vmatprep.subr.bf16.mxu0 %v1027
    %1310 = vmatpush1.bf16.msra.mxu0 %v1026
    %1311 = vmatprep.subr.bf16.mxu0 %v1029
    %1312 = vmatpush1.bf16.msra.mxu0 %v1028
    %1313 = vmatprep.mubr.bf16.mxu0 %v509
    %1314 = vmatmul.mubr.bf16.gmra.mrb[0].mxu0 %v507
    %v1315 = vpop.f32.mrb[0].mxu0
    %v1316 = vadd.f32 %v1275, %v1315
    %v1317 = vpop.f32.mrb[0].mxu0
    %v1318 = vadd.f32 %v1277, %v1317
    %v1319 = vpop.f32.mrb[0].mxu0
    %v1320 = vpop.f32.mrb[0].mxu0
    %1321 = vdwg.mxu0
    %v1322 = vmax.f32 %v1316, 0.0
    %v1323 = vmax.f32 %v1318, 0.0
    %v1324 = vpack.c.bf16 %v1322, %v1322
    %v1325 = vpack.c.bf16 %v1323, %v1323
    %v1326 = vld [vmem:[#allocation5] sm:$0xf]
    %v1327 = vld [vmem:[#allocation5 + $0x4] sm:$0xf]
    %v1328 = vld [vmem:[#allocation5 + $0x8] sm:$0xf]
    %v1329 = vld [vmem:[#allocation5 + $0xc] sm:$0xf]
    %v1330 = vld [vmem:[#allocation5 + $0x10] sm:$0xf]
    %v1331 = vld [vmem:[#allocation5 + $0x14] sm:$0xf]
    %v1332 = vld [vmem:[#allocation5 + $0x18] sm:$0xf]
    %v1333 = vld [vmem:[#allocation5 + $0x1c] sm:$0xf]
    %v1334 = vld [vmem:[#allocation5 + $0x20] sm:$0xf]
    %v1335 = vld [vmem:[#allocation5 + $0x24] sm:$0xf]
    %v1336 = vld [vmem:[#allocation5 + $0x28] sm:$0xf]
    %v1337 = vld [vmem:[#allocation5 + $0x2c] sm:$0xf]
    %v1338 = vld [vmem:[#allocation5 + $0x30] sm:$0xf]
    %v1339 = vld [vmem:[#allocation5 + $0x34] sm:$0xf]
    %v1340 = vld [vmem:[#allocation5 + $0x38] sm:$0xf]
    %v1341 = vld [vmem:[#allocation5 + $0x3c] sm:$0xf]
    %v1342 = vld [vmem:[#allocation5 + $0x40] sm:$0xf]
    %v1343 = vld [vmem:[#allocation5 + $0x44] sm:$0xf]
    %v1344 = vld [vmem:[#allocation5 + $0x48] sm:$0xf]
    %v1345 = vld [vmem:[#allocation5 + $0x4c] sm:$0xf]
    %v1346 = vld [vmem:[#allocation5 + $0x50] sm:$0xf]
    %v1347 = vld [vmem:[#allocation5 + $0x54] sm:$0xf]
    %v1348 = vld [vmem:[#allocation5 + $0x58] sm:$0xf]
    %v1349 = vld [vmem:[#allocation5 + $0x5c] sm:$0xf]
    %v1350 = vld [vmem:[#allocation5 + $0x60] sm:$0xf]
    %v1351 = vld [vmem:[#allocation5 + $0x64] sm:$0xf]
    %v1352 = vld [vmem:[#allocation5 + $0x68] sm:$0xf]
    %v1353 = vld [vmem:[#allocation5 + $0x6c] sm:$0xf]
    %v1354 = vld [vmem:[#allocation5 + $0x70] sm:$0xf]
    %v1355 = vld [vmem:[#allocation5 + $0x74] sm:$0xf]
    %v1356 = vld [vmem:[#allocation5 + $0x78] sm:$0xf]
    %v1357 = vld [vmem:[#allocation5 + $0x7c] sm:$0xf]
    %v1358 = vld [vmem:[%s4] sm:$0x1]
    %v1360 = vlaneseq
    %v1361 = vshrl.u32 %v1360, 7
    %v1362 = vsub.s32 0, %v1361
    %v1363 = vrot.slane %v1358, %v1362
    %v1397 = vunpack.c.l.b16 %v1326
    %v1398 = vunpack.c.l.b16 %v1327
    %v1399 = vunpack.c.l.b16 %v1328
    %v1400 = vunpack.c.l.b16 %v1329
    %v1401 = vunpack.c.l.b16 %v1330
    %v1402 = vunpack.c.l.b16 %v1331
    %v1403 = vunpack.c.l.b16 %v1332
    %v1404 = vunpack.c.l.b16 %v1333
    %v1405 = vunpack.c.l.b16 %v1334
    %v1406 = vunpack.c.l.b16 %v1335
    %v1407 = vunpack.c.l.b16 %v1336
    %v1408 = vunpack.c.l.b16 %v1337
    %v1409 = vunpack.c.l.b16 %v1338
    %v1410 = vunpack.c.l.b16 %v1339
    %v1411 = vunpack.c.l.b16 %v1340
    %v1412 = vunpack.c.l.b16 %v1341
    %v1413 = vunpack.c.l.b16 %v1342
    %v1414 = vunpack.c.l.b16 %v1343
    %v1415 = vunpack.c.l.b16 %v1344
    %v1416 = vunpack.c.l.b16 %v1345
    %v1417 = vunpack.c.l.b16 %v1346
    %v1418 = vunpack.c.l.b16 %v1347
    %v1419 = vunpack.c.l.b16 %v1348
    %v1420 = vunpack.c.l.b16 %v1349
    %v1421 = vunpack.c.l.b16 %v1350
    %v1422 = vunpack.c.l.b16 %v1351
    %v1423 = vunpack.c.l.b16 %v1352
    %v1424 = vunpack.c.l.b16 %v1353
    %v1425 = vunpack.c.l.b16 %v1354
    %v1426 = vunpack.c.l.b16 %v1355
    %v1427 = vunpack.c.l.b16 %v1356
    %v1428 = vunpack.c.l.b16 %v1357
    %v1429 = vpack.c.b16 %v1398, %v1397
    %v1430 = vpack.c.b16 %v1400, %v1399
    %v1431 = vpack.c.b16 %v1402, %v1401
    %v1432 = vpack.c.b16 %v1404, %v1403
    %v1433 = vpack.c.b16 %v1406, %v1405
    %v1434 = vpack.c.b16 %v1408, %v1407
    %v1435 = vpack.c.b16 %v1410, %v1409
    %v1436 = vpack.c.b16 %v1412, %v1411
    %v1437 = vpack.c.b16 %v1414, %v1413
    %v1438 = vpack.c.b16 %v1416, %v1415
    %v1439 = vpack.c.b16 %v1418, %v1417
    %v1440 = vpack.c.b16 %v1420, %v1419
    %v1441 = vpack.c.b16 %v1422, %v1421
    %v1442 = vpack.c.b16 %v1424, %v1423
    %v1443 = vpack.c.b16 %v1426, %v1425
    %v1444 = vpack.c.b16 %v1428, %v1427
    %1461 = vmatprep.subr.bf16.mxu0 0
    %1462 = vmatpush1.bf16.msra.mxu0 %v1429
    %1463 = vmatprep.subr.bf16.mxu0 0
    %1464 = vmatpush1.bf16.msra.mxu0 %v1430
    %1465 = vmatprep.subr.bf16.mxu0 0
    %1466 = vmatpush1.bf16.msra.mxu0 %v1431
    %1467 = vmatprep.subr.bf16.mxu0 0
    %1468 = vmatpush1.bf16.msra.mxu0 %v1432
    %1469 = vmatprep.subr.bf16.mxu0 0
    %1470 = vmatpush1.bf16.msra.mxu0 %v1433
    %1471 = vmatprep.subr.bf16.mxu0 0
    %1472 = vmatpush1.bf16.msra.mxu0 %v1434
    %1473 = vmatprep.subr.bf16.mxu0 0
    %1474 = vmatpush1.bf16.msra.mxu0 %v1435
    %1475 = vmatprep.subr.bf16.mxu0 0
    %1476 = vmatpush1.bf16.msra.mxu0 %v1436
    %1477 = vmatprep.subr.bf16.mxu0 0
    %1478 = vmatpush1.bf16.msra.mxu0 %v1437
    %1479 = vmatprep.subr.bf16.mxu0 0
    %1480 = vmatpush1.bf16.msra.mxu0 %v1438
    %1481 = vmatprep.subr.bf16.mxu0 0
    %1482 = vmatpush1.bf16.msra.mxu0 %v1439
    %1483 = vmatprep.subr.bf16.mxu0 0
    %1484 = vmatpush1.bf16.msra.mxu0 %v1440
    %1485 = vmatprep.subr.bf16.mxu0 0
    %1486 = vmatpush1.bf16.msra.mxu0 %v1441
    %1487 = vmatprep.subr.bf16.mxu0 0
    %1488 = vmatpush1.bf16.msra.mxu0 %v1442
    %1489 = vmatprep.subr.bf16.mxu0 0
    %1490 = vmatpush1.bf16.msra.mxu0 %v1443
    %1491 = vmatprep.subr.bf16.mxu0 0
    %1492 = vmatpush1.bf16.msra.mxu0 %v1444
    %1493 = vmatprep.mubr.bf16.mxu0 %v1325
    %1494 = vmatmul.mubr.bf16.gmra.mrb[0].mxu0 %v1324
    %v1495 = vpop.f32.mrb[0].mxu0
    %v1496 = vadd.f32 %v1363, %v1495
    %v1497 = vpop.f32.mrb[0].mxu0
    %v1498 = vpop.f32.mrb[0].mxu0
    %v1499 = vpop.f32.mrb[0].mxu0
    %1500 = vdwg.mxu0
    %1501 = vst [vmem:[%s17] sm:$0xf] %v1496
    %v1502 = vld [vmem:[%s5] sm:$0xff]
    %v1503 = vld [vmem:[%s5 + $0x8] sm:$0xff]
    %v1504 = vld [vmem:[%s5 + $0x10] sm:$0xff]
    %v1505 = vld [vmem:[%s5 + $0x18] sm:$0xff]
    %v1506 = vld [vmem:[%s5 + $0x20] sm:$0xff]
    %v1507 = vld [vmem:[%s5 + $0x28] sm:$0xff]
    %v1508 = vld [vmem:[%s5 + $0x30] sm:$0xff]
    %v1509 = vld [vmem:[%s5 + $0x38] sm:$0xff]
    %v1510 = vld [vmem:[%s5 + $0x40] sm:$0xff]
    %v1511 = vld [vmem:[%s5 + $0x48] sm:$0xff]
    %v1512 = vld [vmem:[%s5 + $0x50] sm:$0xff]
    %v1513 = vld [vmem:[%s5 + $0x58] sm:$0xff]
    %v1514 = vld [vmem:[%s5 + $0x60] sm:$0xff]
    %v1515 = vld [vmem:[%s5 + $0x68] sm:$0xff]
    %v1516 = vld [vmem:[%s5 + $0x70] sm:$0xff]
    %v1517 = vld [vmem:[%s5 + $0x78] sm:$0xff]
    %v1518 = vld [vmem:[%s5 + $0x80] sm:$0xff]
    %v1519 = vld [vmem:[%s5 + $0x88] sm:$0xff]
    %v1520 = vld [vmem:[%s5 + $0x90] sm:$0xff]
    %v1521 = vld [vmem:[%s5 + $0x98] sm:$0xff]
    %v1522 = vld [vmem:[%s5 + $0xa0] sm:$0xff]
    %v1523 = vld [vmem:[%s5 + $0xa8] sm:$0xff]
    %v1524 = vld [vmem:[%s5 + $0xb0] sm:$0xff]
    %v1525 = vld [vmem:[%s5 + $0xb8] sm:$0xff]
    %v1526 = vld [vmem:[%s5 + $0xc0] sm:$0xff]
    %v1527 = vld [vmem:[%s5 + $0xc8] sm:$0xff]
    %v1528 = vld [vmem:[%s5 + $0xd0] sm:$0xff]
    %v1529 = vld [vmem:[%s5 + $0xd8] sm:$0xff]
    %v1530 = vld [vmem:[%s5 + $0xe0] sm:$0xff]
    %v1531 = vld [vmem:[%s5 + $0xe8] sm:$0xff]
    %v1532 = vld [vmem:[%s5 + $0xf0] sm:$0xff]
    %v1533 = vld [vmem:[%s5 + $0xf8] sm:$0xff]
    %v1566 = vunpack.c.l.b16 %v1502
    %v1567 = vunpack.c.h.b16 %v1502
    %v1568 = vunpack.c.l.b16 %v1503
    %v1569 = vunpack.c.h.b16 %v1503
    %v1570 = vunpack.c.l.b16 %v1504
    %v1571 = vunpack.c.h.b16 %v1504
    %v1572 = vunpack.c.l.b16 %v1505
    %v1573 = vunpack.c.h.b16 %v1505
    %v1574 = vunpack.c.l.b16 %v1506
    %v1575 = vunpack.c.h.b16 %v1506
    %v1576 = vunpack.c.l.b16 %v1507
    %v1577 = vunpack.c.h.b16 %v1507
    %v1578 = vunpack.c.l.b16 %v1508
    %v1579 = vunpack.c.h.b16 %v1508
    %v1580 = vunpack.c.l.b16 %v1509
    %v1581 = vunpack.c.h.b16 %v1509
    %v1582 = vunpack.c.l.b16 %v1510
    %v1583 = vunpack.c.h.b16 %v1510
    %v1584 = vunpack.c.l.b16 %v1511
    %v1585 = vunpack.c.h.b16 %v1511
    %v1586 = vunpack.c.l.b16 %v1512
    %v1587 = vunpack.c.h.b16 %v1512
    %v1588 = vunpack.c.l.b16 %v1513
    %v1589 = vunpack.c.h.b16 %v1513
    %v1590 = vunpack.c.l.b16 %v1514
    %v1591 = vunpack.c.h.b16 %v1514
    %v1592 = vunpack.c.l.b16 %v1515
    %v1593 = vunpack.c.h.b16 %v1515
    %v1594 = vunpack.c.l.b16 %v1516
    %v1595 = vunpack.c.h.b16 %v1516
    %v1596 = vunpack.c.l.b16 %v1517
    %v1597 = vunpack.c.h.b16 %v1517
    %v1598 = vunpack.c.l.b16 %v1518
    %v1599 = vunpack.c.h.b16 %v1518
    %v1600 = vunpack.c.l.b16 %v1519
    %v1601 = vunpack.c.h.b16 %v1519
    %v1602 = vunpack.c.l.b16 %v1520
    %v1603 = vunpack.c.h.b16 %v1520
    %v1604 = vunpack.c.l.b16 %v1521
    %v1605 = vunpack.c.h.b16 %v1521
    %v1606 = vunpack.c.l.b16 %v1522
    %v1607 = vunpack.c.h.b16 %v1522
    %v1608 = vunpack.c.l.b16 %v1523
    %v1609 = vunpack.c.h.b16 %v1523
    %v1610 = vunpack.c.l.b16 %v1524
    %v1611 = vunpack.c.h.b16 %v1524
    %v1612 = vunpack.c.l.b16 %v1525
    %v1613 = vunpack.c.h.b16 %v1525
    %v1614 = vunpack.c.l.b16 %v1526
    %v1615 = vunpack.c.h.b16 %v1526
    %v1616 = vunpack.c.l.b16 %v1527
    %v1617 = vunpack.c.h.b16 %v1527
    %v1618 = vunpack.c.l.b16 %v1528
    %v1619 = vunpack.c.h.b16 %v1528
    %v1620 = vunpack.c.l.b16 %v1529
    %v1621 = vunpack.c.h.b16 %v1529
    %v1622 = vunpack.c.l.b16 %v1530
    %v1623 = vunpack.c.h.b16 %v1530
    %v1624 = vunpack.c.l.b16 %v1531
    %v1625 = vunpack.c.h.b16 %v1531
    %v1626 = vunpack.c.l.b16 %v1532
    %v1627 = vunpack.c.h.b16 %v1532
    %v1628 = vunpack.c.l.b16 %v1533
    %v1629 = vunpack.c.h.b16 %v1533
    %v1630 = vpack.c.b16 %v1568, %v1566
    %v1631 = vpack.c.b16 %v1569, %v1567
    %v1632 = vpack.c.b16 %v1572, %v1570
    %v1633 = vpack.c.b16 %v1573, %v1571
    %v1634 = vpack.c.b16 %v1576, %v1574
    %v1635 = vpack.c.b16 %v1577, %v1575
    %v1636 = vpack.c.b16 %v1580, %v1578
    %v1637 = vpack.c.b16 %v1581, %v1579
    %v1638 = vpack.c.b16 %v1584, %v1582
    %v1639 = vpack.c.b16 %v1585, %v1583
    %v1640 = vpack.c.b16 %v1588, %v1586
    %v1641 = vpack.c.b16 %v1589, %v1587
    %v1642 = vpack.c.b16 %v1592, %v1590
    %v1643 = vpack.c.b16 %v1593, %v1591
    %v1644 = vpack.c.b16 %v1596, %v1594
    %v1645 = vpack.c.b16 %v1597, %v1595
    %v1646 = vpack.c.b16 %v1600, %v1598
    %v1647 = vpack.c.b16 %v1601, %v1599
    %v1648 = vpack.c.b16 %v1604, %v1602
    %v1649 = vpack.c.b16 %v1605, %v1603
    %v1650 = vpack.c.b16 %v1608, %v1606
    %v1651 = vpack.c.b16 %v1609, %v1607
    %v1652 = vpack.c.b16 %v1612, %v1610
    %v1653 = vpack.c.b16 %v1613, %v1611
    %v1654 = vpack.c.b16 %v1616, %v1614
    %v1655 = vpack.c.b16 %v1617, %v1615
    %v1656 = vpack.c.b16 %v1620, %v1618
    %v1657 = vpack.c.b16 %v1621, %v1619
    %v1658 = vpack.c.b16 %v1624, %v1622
    %v1659 = vpack.c.b16 %v1625, %v1623
    %v1660 = vpack.c.b16 %v1628, %v1626
    %v1661 = vpack.c.b16 %v1629, %v1627
    %1694 = vmatprep.subr.bf16.mxu0 %v1631
    %1695 = vmatpush1.bf16.msra.mxu0 %v1630
    %1696 = vmatprep.subr.bf16.mxu0 %v1633
    %1697 = vmatpush1.bf16.msra.mxu0 %v1632
    %1698 = vmatprep.subr.bf16.mxu0 %v1635
    %1699 = vmatpush1.bf16.msra.mxu0 %v1634
    %1700 = vmatprep.subr.bf16.mxu0 %v1637
    %1701 = vmatpush1.bf16.msra.mxu0 %v1636
    %1702 = vmatprep.subr.bf16.mxu0 %v1639
    %1703 = vmatpush1.bf16.msra.mxu0 %v1638
    %1704 = vmatprep.subr.bf16.mxu0 %v1641
    %1705 = vmatpush1.bf16.msra.mxu0 %v1640
    %1706 = vmatprep.subr.bf16.mxu0 %v1643
    %1707 = vmatpush1.bf16.msra.mxu0 %v1642
    %1708 = vmatprep.subr.bf16.mxu0 %v1645
    %1709 = vmatpush1.bf16.msra.mxu0 %v1644
    %1710 = vmatprep.subr.bf16.mxu0 %v1647
    %1711 = vmatpush1.bf16.msra.mxu0 %v1646
    %1712 = vmatprep.subr.bf16.mxu0 %v1649
    %1713 = vmatpush1.bf16.msra.mxu0 %v1648
    %1714 = vmatprep.subr.bf16.mxu0 %v1651
    %1715 = vmatpush1.bf16.msra.mxu0 %v1650
    %1716 = vmatprep.subr.bf16.mxu0 %v1653
    %1717 = vmatpush1.bf16.msra.mxu0 %v1652
    %1718 = vmatprep.subr.bf16.mxu0 %v1655
    %1719 = vmatpush1.bf16.msra.mxu0 %v1654
    %1720 = vmatprep.subr.bf16.mxu0 %v1657
    %1721 = vmatpush1.bf16.msra.mxu0 %v1656
    %1722 = vmatprep.subr.bf16.mxu0 %v1659
    %1723 = vmatpush1.bf16.msra.mxu0 %v1658
    %1724 = vmatprep.subr.bf16.mxu0 %v1661
    %1725 = vmatpush1.bf16.msra.mxu0 %v1660
    %1726 = vmatprep.mubr.bf16.mxu0 %v1325
    %1727 = vmatmul.mubr.bf16.gmra.mrb[0].mxu0 %v1324
    %v1728 = vpop.f32.mrb[0].mxu0
    %v1729 = vadd.f32 0.0, %v1728
    %v1730 = vpop.f32.mrb[0].mxu0
    %v1731 = vadd.f32 0.0, %v1730
    %v1732 = vpop.f32.mrb[0].mxu0
    %v1733 = vpop.f32.mrb[0].mxu0
    %1734 = vdwg.mxu0
    %v1735 = vld [vmem:[%s6] sm:$0x3]
    %v1736 = vld [vmem:[%s7] sm:$0x3]
    %vm1737 = vcmask 1041408
    %v1738 = vsel %vm1737, %v1729, 0.0
    %v1739 = vrot.slane %v1738, 4
    %v1740 = vadd.f32 %v1738, %v1739
    %v1741 = vrot.slane %v1740, 2
    %v1742 = vadd.f32 %v1740, %v1741
    %v1743 = vrot.slane %v1742, 1
    %v1744 = vadd.f32 %v1742, %v1743
    %v1745 = vsel %vm1737, %v1731, 0.0
    %v1746 = vrot.slane %v1745, 4
    %v1747 = vadd.f32 %v1745, %v1746
    %v1748 = vrot.slane %v1747, 2
    %v1749 = vadd.f32 %v1747, %v1748
    %v1750 = vrot.slane %v1749, 1
    %v1751 = vadd.f32 %v1749, %v1750
    %v1752 = vmul.f32 %v1744, 0.5
    %v1753 = vmul.f32 %v1751, 0.5
    %v1754 = vmul.f32 %v1729, %v1729
    %v1755 = vmul.f32 %v1731, %v1731
    %v1756 = vsel %vm1737, %v1754, 0.0
    %v1757 = vrot.slane %v1756, 4
    %v1758 = vadd.f32 %v1756, %v1757
    %v1759 = vrot.slane %v1758, 2
    %v1760 = vadd.f32 %v1758, %v1759
    %v1761 = vrot.slane %v1760, 1
    %v1762 = vadd.f32 %v1760, %v1761
    %v1763 = vsel %vm1737, %v1755, 0.0
    %v1764 = vrot.slane %v1763, 4
    %v1765 = vadd.f32 %v1763, %v1764
    %v1766 = vrot.slane %v1765, 2
    %v1767 = vadd.f32 %v1765, %v1766
    %v1768 = vrot.slane %v1767, 1
    %v1769 = vadd.f32 %v1767, %v1768
    %v1770 = vmul.f32 %v1762, 0.5
    %v1771 = vmul.f32 %v1769, 0.5
    %v1772 = vmul.f32 %v1752, %v1752
    %v1773 = vmul.f32 %v1753, %v1753
    %v1774 = vsub.f32 %v1770, %v1772
    %v1775 = vsub.f32 %v1771, %v1773
    %v1776 = vmax.f32 %v1774, 0.0
    %v1777 = vmax.f32 %v1775, 0.0
    %v1780 = vrot.slane %v1729, 2
    %v1781 = vrot.slane %v1731, 2
    %v1784 = vsel %vm1737, %v1780, 0.0
    %v1785 = vrot.slane %v1784, 4
    %v1786 = vadd.f32 %v1784, %v1785
    %v1787 = vrot.slane %v1786, 2
    %v1788 = vadd.f32 %v1786, %v1787
    %v1789 = vrot.slane %v1788, 1
    %v1790 = vadd.f32 %v1788, %v1789
    %v1791 = vsel %vm1737, %v1781, 0.0
    %v1792 = vrot.slane %v1791, 4
    %v1793 = vadd.f32 %v1791, %v1792
    %v1794 = vrot.slane %v1793, 2
    %v1795 = vadd.f32 %v1793, %v1794
    %v1796 = vrot.slane %v1795, 1
    %v1797 = vadd.f32 %v1795, %v1796
    %v1798 = vmul.f32 %v1790, 0.5
    %v1799 = vmul.f32 %v1797, 0.5
    %v1802 = vrot.slane %v1754, 2
    %v1803 = vrot.slane %v1755, 2
    %v1806 = vsel %vm1737, %v1802, 0.0
    %v1807 = vrot.slane %v1806, 4
    %v1808 = vadd.f32 %v1806, %v1807
    %v1809 = vrot.slane %v1808, 2
    %v1810 = vadd.f32 %v1808, %v1809
    %v1811 = vrot.slane %v1810, 1
    %v1812 = vadd.f32 %v1810, %v1811
    %v1813 = vsel %vm1737, %v1803, 0.0
    %v1814 = vrot.slane %v1813, 4
    %v1815 = vadd.f32 %v1813, %v1814
    %v1816 = vrot.slane %v1815, 2
    %v1817 = vadd.f32 %v1815, %v1816
    %v1818 = vrot.slane %v1817, 1
    %v1819 = vadd.f32 %v1817, %v1818
    %v1820 = vmul.f32 %v1812, 0.5
    %v1821 = vmul.f32 %v1819, 0.5
    %v1822 = vmul.f32 %v1798, %v1798
    %v1823 = vmul.f32 %v1799, %v1799
    %v1824 = vsub.f32 %v1820, %v1822
    %v1825 = vsub.f32 %v1821, %v1823
    %v1826 = vmax.f32 %v1824, 0.0
    %v1827 = vmax.f32 %v1825, 0.0
    %v1828 = vlaneseq
    %v1829 = vshrl.u32 %v1828, 7
    %vm1830 = vcmp.ge.s32.totalorder %v1829, 2
    %v1831 = vsel %vm1830, 1, 0
    %vm1832 = vcmp.eq.s32.totalorder %v1831, 1
    %v1833 = vsel %vm1832, %v1798, %v1752
    %v1834 = vsel %vm1832, %v1799, %v1753
    %v1835 = vsel %vm1832, %v1826, %v1776
    %v1836 = vsel %vm1832, %v1827, %v1777
    %v1837 = vadd.f32 %v1835, 1e-05
    %v1838 = vadd.f32 %v1836, 1e-05
    %v1839 = vrsqrt.pop %v1837
    %v1840 = vrsqrt.pop %v1838
    %v1842 = vlaneseq
    %v1843 = vshrl.u32 %v1842, 7
    %v1844 = vsub.s32 0, %v1843
    %v1845 = vrot.slane %v1735, %v1844
    %v1846 = vlaneseq
    %v1847 = vshrl.u32 %v1846, 7
    %v1848 = vsub.s32 1, %v1847
    %v1849 = vrot.slane %v1735, %v1848
    %v1852 = vmul.f32 %v1839, %v1845
    %v1853 = vmul.f32 %v1840, %v1849
    %v1854 = vsub.f32 %v1729, %v1833
    %v1855 = vsub.f32 %v1731, %v1834
    %v1856 = vmul.f32 %v1854, %v1852
    %v1857 = vmul.f32 %v1855, %v1853
    %v1859 = vlaneseq
    %v1860 = vshrl.u32 %v1859, 7
    %v1861 = vsub.s32 0, %v1860
    %v1862 = vrot.slane %v1736, %v1861
    %v1863 = vlaneseq
    %v1864 = vshrl.u32 %v1863, 7
    %v1865 = vsub.s32 1, %v1864
    %v1866 = vrot.slane %v1736, %v1865
    %v1869 = vadd.f32 %v1856, %v1862
    %v1870 = vadd.f32 %v1857, %v1866
    %v1871 = vmax.f32 %v1869, 0.0
    %v1872 = vmax.f32 %v1870, 0.0
    %v1873 = vpack.c.bf16 %v1871, %v1871
    %v1874 = vpack.c.bf16 %v1872, %v1872
    %v1875 = vld [vmem:[#allocation7] sm:$0xff]
    %v1876 = vld [vmem:[#allocation7 + $0x8] sm:$0xff]
    %v1877 = vld [vmem:[#allocation7 + $0x10] sm:$0xff]
    %v1878 = vld [vmem:[#allocation7 + $0x18] sm:$0xff]
    %v1879 = vld [vmem:[#allocation7 + $0x20] sm:$0xff]
    %v1880 = vld [vmem:[#allocation7 + $0x28] sm:$0xff]
    %v1881 = vld [vmem:[#allocation7 + $0x30] sm:$0xff]
    %v1882 = vld [vmem:[#allocation7 + $0x38] sm:$0xff]
    %v1883 = vld [vmem:[#allocation7 + $0x40] sm:$0xff]
    %v1884 = vld [vmem:[#allocation7 + $0x48] sm:$0xff]
    %v1885 = vld [vmem:[#allocation7 + $0x50] sm:$0xff]
    %v1886 = vld [vmem:[#allocation7 + $0x58] sm:$0xff]
    %v1887 = vld [vmem:[#allocation7 + $0x60] sm:$0xff]
    %v1888 = vld [vmem:[#allocation7 + $0x68] sm:$0xff]
    %v1889 = vld [vmem:[#allocation7 + $0x70] sm:$0xff]
    %v1890 = vld [vmem:[#allocation7 + $0x78] sm:$0xff]
    %v1891 = vld [vmem:[#allocation7 + $0x80] sm:$0xff]
    %v1892 = vld [vmem:[#allocation7 + $0x88] sm:$0xff]
    %v1893 = vld [vmem:[#allocation7 + $0x90] sm:$0xff]
    %v1894 = vld [vmem:[#allocation7 + $0x98] sm:$0xff]
    %v1895 = vld [vmem:[#allocation7 + $0xa0] sm:$0xff]
    %v1896 = vld [vmem:[#allocation7 + $0xa8] sm:$0xff]
    %v1897 = vld [vmem:[#allocation7 + $0xb0] sm:$0xff]
    %v1898 = vld [vmem:[#allocation7 + $0xb8] sm:$0xff]
    %v1899 = vld [vmem:[#allocation7 + $0xc0] sm:$0xff]
    %v1900 = vld [vmem:[#allocation7 + $0xc8] sm:$0xff]
    %v1901 = vld [vmem:[#allocation7 + $0xd0] sm:$0xff]
    %v1902 = vld [vmem:[#allocation7 + $0xd8] sm:$0xff]
    %v1903 = vld [vmem:[#allocation7 + $0xe0] sm:$0xff]
    %v1904 = vld [vmem:[#allocation7 + $0xe8] sm:$0xff]
    %v1905 = vld [vmem:[#allocation7 + $0xf0] sm:$0xff]
    %v1906 = vld [vmem:[#allocation7 + $0xf8] sm:$0xff]
    %v1939 = vunpack.c.l.b16 %v1875
    %v1940 = vunpack.c.h.b16 %v1875
    %v1941 = vunpack.c.l.b16 %v1876
    %v1942 = vunpack.c.h.b16 %v1876
    %v1943 = vunpack.c.l.b16 %v1877
    %v1944 = vunpack.c.h.b16 %v1877
    %v1945 = vunpack.c.l.b16 %v1878
    %v1946 = vunpack.c.h.b16 %v1878
    %v1947 = vunpack.c.l.b16 %v1879
    %v1948 = vunpack.c.h.b16 %v1879
    %v1949 = vunpack.c.l.b16 %v1880
    %v1950 = vunpack.c.h.b16 %v1880
    %v1951 = vunpack.c.l.b16 %v1881
    %v1952 = vunpack.c.h.b16 %v1881
    %v1953 = vunpack.c.l.b16 %v1882
    %v1954 = vunpack.c.h.b16 %v1882
    %v1955 = vunpack.c.l.b16 %v1883
    %v1956 = vunpack.c.h.b16 %v1883
    %v1957 = vunpack.c.l.b16 %v1884
    %v1958 = vunpack.c.h.b16 %v1884
    %v1959 = vunpack.c.l.b16 %v1885
    %v1960 = vunpack.c.h.b16 %v1885
    %v1961 = vunpack.c.l.b16 %v1886
    %v1962 = vunpack.c.h.b16 %v1886
    %v1963 = vunpack.c.l.b16 %v1887
    %v1964 = vunpack.c.h.b16 %v1887
    %v1965 = vunpack.c.l.b16 %v1888
    %v1966 = vunpack.c.h.b16 %v1888
    %v1967 = vunpack.c.l.b16 %v1889
    %v1968 = vunpack.c.h.b16 %v1889
    %v1969 = vunpack.c.l.b16 %v1890
    %v1970 = vunpack.c.h.b16 %v1890
    %v1971 = vunpack.c.l.b16 %v1891
    %v1972 = vunpack.c.h.b16 %v1891
    %v1973 = vunpack.c.l.b16 %v1892
    %v1974 = vunpack.c.h.b16 %v1892
    %v1975 = vunpack.c.l.b16 %v1893
    %v1976 = vunpack.c.h.b16 %v1893
    %v1977 = vunpack.c.l.b16 %v1894
    %v1978 = vunpack.c.h.b16 %v1894
    %v1979 = vunpack.c.l.b16 %v1895
    %v1980 = vunpack.c.h.b16 %v1895
    %v1981 = vunpack.c.l.b16 %v1896
    %v1982 = vunpack.c.h.b16 %v1896
    %v1983 = vunpack.c.l.b16 %v1897
    %v1984 = vunpack.c.h.b16 %v1897
    %v1985 = vunpack.c.l.b16 %v1898
    %v1986 = vunpack.c.h.b16 %v1898
    %v1987 = vunpack.c.l.b16 %v1899
    %v1988 = vunpack.c.h.b16 %v1899
    %v1989 = vunpack.c.l.b16 %v1900
    %v1990 = vunpack.c.h.b16 %v1900
    %v1991 = vunpack.c.l.b16 %v1901
    %v1992 = vunpack.c.h.b16 %v1901
    %v1993 = vunpack.c.l.b16 %v1902
    %v1994 = vunpack.c.h.b16 %v1902
    %v1995 = vunpack.c.l.b16 %v1903
    %v1996 = vunpack.c.h.b16 %v1903
    %v1997 = vunpack.c.l.b16 %v1904
    %v1998 = vunpack.c.h.b16 %v1904
    %v1999 = vunpack.c.l.b16 %v1905
    %v2000 = vunpack.c.h.b16 %v1905
    %v2001 = vunpack.c.l.b16 %v1906
    %v2002 = vunpack.c.h.b16 %v1906
    %v2003 = vpack.c.b16 %v1941, %v1939
    %v2004 = vpack.c.b16 %v1942, %v1940
    %v2005 = vpack.c.b16 %v1945, %v1943
    %v2006 = vpack.c.b16 %v1946, %v1944
    %v2007 = vpack.c.b16 %v1949, %v1947
    %v2008 = vpack.c.b16 %v1950, %v1948
    %v2009 = vpack.c.b16 %v1953, %v1951
    %v2010 = vpack.c.b16 %v1954, %v1952
    %v2011 = vpack.c.b16 %v1957, %v1955
    %v2012 = vpack.c.b16 %v1958, %v1956
    %v2013 = vpack.c.b16 %v1961, %v1959
    %v2014 = vpack.c.b16 %v1962, %v1960
    %v2015 = vpack.c.b16 %v1965, %v1963
    %v2016 = vpack.c.b16 %v1966, %v1964
    %v2017 = vpack.c.b16 %v1969, %v1967
    %v2018 = vpack.c.b16 %v1970, %v1968
    %v2019 = vpack.c.b16 %v1973, %v1971
    %v2020 = vpack.c.b16 %v1974, %v1972
    %v2021 = vpack.c.b16 %v1977, %v1975
    %v2022 = vpack.c.b16 %v1978, %v1976
    %v2023 = vpack.c.b16 %v1981, %v1979
    %v2024 = vpack.c.b16 %v1982, %v1980
    %v2025 = vpack.c.b16 %v1985, %v1983
    %v2026 = vpack.c.b16 %v1986, %v1984
    %v2027 = vpack.c.b16 %v1989, %v1987
    %v2028 = vpack.c.b16 %v1990, %v1988
    %v2029 = vpack.c.b16 %v1993, %v1991
    %v2030 = vpack.c.b16 %v1994, %v1992
    %v2031 = vpack.c.b16 %v1997, %v1995
    %v2032 = vpack.c.b16 %v1998, %v1996
    %v2033 = vpack.c.b16 %v2001, %v1999
    %v2034 = vpack.c.b16 %v2002, %v2000
    %2067 = vmatprep.subr.bf16.mxu0 %v2004
    %2068 = vmatpush1.bf16.msra.mxu0 %v2003
    %2069 = vmatprep.subr.bf16.mxu0 %v2006
    %2070 = vmatpush1.bf16.msra.mxu0 %v2005
    %2071 = vmatprep.subr.bf16.mxu0 %v2008
    %2072 = vmatpush1.bf16.msra.mxu0 %v2007
    %2073 = vmatprep.subr.bf16.mxu0 %v2010
    %2074 = vmatpush1.bf16.msra.mxu0 %v2009
    %2075 = vmatprep.subr.bf16.mxu0 %v2012
    %2076 = vmatpush1.bf16.msra.mxu0 %v2011
    %2077 = vmatprep.subr.bf16.mxu0 %v2014
    %2078 = vmatpush1.bf16.msra.mxu0 %v2013
    %2079 = vmatprep.subr.bf16.mxu0 %v2016
    %2080 = vmatpush1.bf16.msra.mxu0 %v2015
    %2081 = vmatprep.subr.bf16.mxu0 %v2018
    %2082 = vmatpush1.bf16.msra.mxu0 %v2017
    %2083 = vmatprep.subr.bf16.mxu0 %v2020
    %2084 = vmatpush1.bf16.msra.mxu0 %v2019
    %2085 = vmatprep.subr.bf16.mxu0 %v2022
    %2086 = vmatpush1.bf16.msra.mxu0 %v2021
    %2087 = vmatprep.subr.bf16.mxu0 %v2024
    %2088 = vmatpush1.bf16.msra.mxu0 %v2023
    %2089 = vmatprep.subr.bf16.mxu0 %v2026
    %2090 = vmatpush1.bf16.msra.mxu0 %v2025
    %2091 = vmatprep.subr.bf16.mxu0 %v2028
    %2092 = vmatpush1.bf16.msra.mxu0 %v2027
    %2093 = vmatprep.subr.bf16.mxu0 %v2030
    %2094 = vmatpush1.bf16.msra.mxu0 %v2029
    %2095 = vmatprep.subr.bf16.mxu0 %v2032
    %2096 = vmatpush1.bf16.msra.mxu0 %v2031
    %2097 = vmatprep.subr.bf16.mxu0 %v2034
    %2098 = vmatpush1.bf16.msra.mxu0 %v2033
    %2099 = vmatprep.mubr.bf16.mxu0 %v1874
    %2100 = vmatmul.mubr.bf16.gmra.mrb[0].mxu0 %v1873
    %v2101 = vpop.f32.mrb[0].mxu0
    %v2102 = vadd.f32 0.0, %v2101
    %v2103 = vpop.f32.mrb[0].mxu0
    %v2104 = vadd.f32 0.0, %v2103
    %v2105 = vpop.f32.mrb[0].mxu0
    %v2106 = vpop.f32.mrb[0].mxu0
    %2107 = vdwg.mxu0
    %v2108 = vld [vmem:[%s9] sm:$0x3]
    %v2109 = vld [vmem:[%s10] sm:$0x3]
    %v2110 = vsel %vm1737, %v2102, 0.0
    %v2111 = vrot.slane %v2110, 4
    %v2112 = vadd.f32 %v2110, %v2111
    %v2113 = vrot.slane %v2112, 2
    %v2114 = vadd.f32 %v2112, %v2113
    %v2115 = vrot.slane %v2114, 1
    %v2116 = vadd.f32 %v2114, %v2115
    %v2117 = vsel %vm1737, %v2104, 0.0
    %v2118 = vrot.slane %v2117, 4
    %v2119 = vadd.f32 %v2117, %v2118
    %v2120 = vrot.slane %v2119, 2
    %v2121 = vadd.f32 %v2119, %v2120
    %v2122 = vrot.slane %v2121, 1
    %v2123 = vadd.f32 %v2121, %v2122
    %v2124 = vmul.f32 %v2116, 0.5
    %v2125 = vmul.f32 %v2123, 0.5
    %v2126 = vmul.f32 %v2102, %v2102
    %v2127 = vmul.f32 %v2104, %v2104
    %v2128 = vsel %vm1737, %v2126, 0.0
    %v2129 = vrot.slane %v2128, 4
    %v2130 = vadd.f32 %v2128, %v2129
    %v2131 = vrot.slane %v2130, 2
    %v2132 = vadd.f32 %v2130, %v2131
    %v2133 = vrot.slane %v2132, 1
    %v2134 = vadd.f32 %v2132, %v2133
    %v2135 = vsel %vm1737, %v2127, 0.0
    %v2136 = vrot.slane %v2135, 4
    %v2137 = vadd.f32 %v2135, %v2136
    %v2138 = vrot.slane %v2137, 2
    %v2139 = vadd.f32 %v2137, %v2138
    %v2140 = vrot.slane %v2139, 1
    %v2141 = vadd.f32 %v2139, %v2140
    %v2142 = vmul.f32 %v2134, 0.5
    %v2143 = vmul.f32 %v2141, 0.5
    %v2144 = vmul.f32 %v2124, %v2124
    %v2145 = vmul.f32 %v2125, %v2125
    %v2146 = vsub.f32 %v2142, %v2144
    %v2147 = vsub.f32 %v2143, %v2145
    %v2148 = vmax.f32 %v2146, 0.0
    %v2149 = vmax.f32 %v2147, 0.0
    %v2152 = vrot.slane %v2102, 2
    %v2153 = vrot.slane %v2104, 2
    %v2156 = vsel %vm1737, %v2152, 0.0
    %v2157 = vrot.slane %v2156, 4
    %v2158 = vadd.f32 %v2156, %v2157
    %v2159 = vrot.slane %v2158, 2
    %v2160 = vadd.f32 %v2158, %v2159
    %v2161 = vrot.slane %v2160, 1
    %v2162 = vadd.f32 %v2160, %v2161
    %v2163 = vsel %vm1737, %v2153, 0.0
    %v2164 = vrot.slane %v2163, 4
    %v2165 = vadd.f32 %v2163, %v2164
    %v2166 = vrot.slane %v2165, 2
    %v2167 = vadd.f32 %v2165, %v2166
    %v2168 = vrot.slane %v2167, 1
    %v2169 = vadd.f32 %v2167, %v2168
    %v2170 = vmul.f32 %v2162, 0.5
    %v2171 = vmul.f32 %v2169, 0.5
    %v2174 = vrot.slane %v2126, 2
    %v2175 = vrot.slane %v2127, 2
    %v2178 = vsel %vm1737, %v2174, 0.0
    %v2179 = vrot.slane %v2178, 4
    %v2180 = vadd.f32 %v2178, %v2179
    %v2181 = vrot.slane %v2180, 2
    %v2182 = vadd.f32 %v2180, %v2181
    %v2183 = vrot.slane %v2182, 1
    %v2184 = vadd.f32 %v2182, %v2183
    %v2185 = vsel %vm1737, %v2175, 0.0
    %v2186 = vrot.slane %v2185, 4
    %v2187 = vadd.f32 %v2185, %v2186
    %v2188 = vrot.slane %v2187, 2
    %v2189 = vadd.f32 %v2187, %v2188
    %v2190 = vrot.slane %v2189, 1
    %v2191 = vadd.f32 %v2189, %v2190
    %v2192 = vmul.f32 %v2184, 0.5
    %v2193 = vmul.f32 %v2191, 0.5
    %v2194 = vmul.f32 %v2170, %v2170
    %v2195 = vmul.f32 %v2171, %v2171
    %v2196 = vsub.f32 %v2192, %v2194
    %v2197 = vsub.f32 %v2193, %v2195
    %v2198 = vmax.f32 %v2196, 0.0
    %v2199 = vmax.f32 %v2197, 0.0
    %v2200 = vsel %vm1832, %v2170, %v2124
    %v2201 = vsel %vm1832, %v2171, %v2125
    %v2202 = vsel %vm1832, %v2198, %v2148
    %v2203 = vsel %vm1832, %v2199, %v2149
    %v2204 = vadd.f32 %v2202, 1e-05
    %v2205 = vadd.f32 %v2203, 1e-05
    %v2206 = vrsqrt.pop %v2204
    %v2207 = vrsqrt.pop %v2205
    %v2209 = vlaneseq
    %v2210 = vshrl.u32 %v2209, 7
    %v2211 = vsub.s32 0, %v2210
    %v2212 = vrot.slane %v2108, %v2211
    %v2213 = vlaneseq
    %v2214 = vshrl.u32 %v2213, 7
    %v2215 = vsub.s32 1, %v2214
    %v2216 = vrot.slane %v2108, %v2215
    %v2219 = vmul.f32 %v2206, %v2212
    %v2220 = vmul.f32 %v2207, %v2216
    %v2221 = vsub.f32 %v2102, %v2200
    %v2222 = vsub.f32 %v2104, %v2201
    %v2223 = vmul.f32 %v2221, %v2219
    %v2224 = vmul.f32 %v2222, %v2220
    %v2226 = vlaneseq
    %v2227 = vshrl.u32 %v2226, 7
    %v2228 = vsub.s32 0, %v2227
    %v2229 = vrot.slane %v2109, %v2228
    %v2230 = vlaneseq
    %v2231 = vshrl.u32 %v2230, 7
    %v2232 = vsub.s32 1, %v2231
    %v2233 = vrot.slane %v2109, %v2232
    %v2236 = vadd.f32 %v2223, %v2229
    %v2237 = vadd.f32 %v2224, %v2233
    %v2238 = vmax.f32 %v2236, 0.0
    %v2239 = vmax.f32 %v2237, 0.0
    %v2240 = vpack.c.bf16 %v2238, %v2238
    %v2241 = vpack.c.bf16 %v2239, %v2239
    %v2242 = vld [vmem:[#allocation8] sm:$0xff]
    %v2243 = vld [vmem:[#allocation8 + $0x8] sm:$0xff]
    %v2244 = vld [vmem:[#allocation8 + $0x10] sm:$0xff]
    %v2245 = vld [vmem:[#allocation8 + $0x18] sm:$0xff]
    %v2246 = vld [vmem:[#allocation8 + $0x20] sm:$0xff]
    %v2247 = vld [vmem:[#allocation8 + $0x28] sm:$0xff]
    %v2248 = vld [vmem:[#allocation8 + $0x30] sm:$0xff]
    %v2249 = vld [vmem:[#allocation8 + $0x38] sm:$0xff]
    %v2250 = vld [vmem:[#allocation8 + $0x40] sm:$0xff]
    %v2251 = vld [vmem:[#allocation8 + $0x48] sm:$0xff]
    %v2252 = vld [vmem:[#allocation8 + $0x50] sm:$0xff]
    %v2253 = vld [vmem:[#allocation8 + $0x58] sm:$0xff]
    %v2254 = vld [vmem:[#allocation8 + $0x60] sm:$0xff]
    %v2255 = vld [vmem:[#allocation8 + $0x68] sm:$0xff]
    %v2256 = vld [vmem:[#allocation8 + $0x70] sm:$0xff]
    %v2257 = vld [vmem:[#allocation8 + $0x78] sm:$0xff]
    %v2258 = vld [vmem:[#allocation8 + $0x80] sm:$0xff]
    %v2259 = vld [vmem:[#allocation8 + $0x88] sm:$0xff]
    %v2260 = vld [vmem:[#allocation8 + $0x90] sm:$0xff]
    %v2261 = vld [vmem:[#allocation8 + $0x98] sm:$0xff]
    %v2262 = vld [vmem:[#allocation8 + $0xa0] sm:$0xff]
    %v2263 = vld [vmem:[#allocation8 + $0xa8] sm:$0xff]
    %v2264 = vld [vmem:[#allocation8 + $0xb0] sm:$0xff]
    %v2265 = vld [vmem:[#allocation8 + $0xb8] sm:$0xff]
    %v2266 = vld [vmem:[#allocation8 + $0xc0] sm:$0xff]
    %v2267 = vld [vmem:[#allocation8 + $0xc8] sm:$0xff]
    %v2268 = vld [vmem:[#allocation8 + $0xd0] sm:$0xff]
    %v2269 = vld [vmem:[#allocation8 + $0xd8] sm:$0xff]
    %v2270 = vld [vmem:[#allocation8 + $0xe0] sm:$0xff]
    %v2271 = vld [vmem:[#allocation8 + $0xe8] sm:$0xff]
    %v2272 = vld [vmem:[#allocation8 + $0xf0] sm:$0xff]
    %v2273 = vld [vmem:[#allocation8 + $0xf8] sm:$0xff]
    %v2306 = vunpack.c.l.b16 %v2242
    %v2307 = vunpack.c.h.b16 %v2242
    %v2308 = vunpack.c.l.b16 %v2243
    %v2309 = vunpack.c.h.b16 %v2243
    %v2310 = vunpack.c.l.b16 %v2244
    %v2311 = vunpack.c.h.b16 %v2244
    %v2312 = vunpack.c.l.b16 %v2245
    %v2313 = vunpack.c.h.b16 %v2245
    %v2314 = vunpack.c.l.b16 %v2246
    %v2315 = vunpack.c.h.b16 %v2246
    %v2316 = vunpack.c.l.b16 %v2247
    %v2317 = vunpack.c.h.b16 %v2247
    %v2318 = vunpack.c.l.b16 %v2248
    %v2319 = vunpack.c.h.b16 %v2248
    %v2320 = vunpack.c.l.b16 %v2249
    %v2321 = vunpack.c.h.b16 %v2249
    %v2322 = vunpack.c.l.b16 %v2250
    %v2323 = vunpack.c.h.b16 %v2250
    %v2324 = vunpack.c.l.b16 %v2251
    %v2325 = vunpack.c.h.b16 %v2251
    %v2326 = vunpack.c.l.b16 %v2252
    %v2327 = vunpack.c.h.b16 %v2252
    %v2328 = vunpack.c.l.b16 %v2253
    %v2329 = vunpack.c.h.b16 %v2253
    %v2330 = vunpack.c.l.b16 %v2254
    %v2331 = vunpack.c.h.b16 %v2254
    %v2332 = vunpack.c.l.b16 %v2255
    %v2333 = vunpack.c.h.b16 %v2255
    %v2334 = vunpack.c.l.b16 %v2256
    %v2335 = vunpack.c.h.b16 %v2256
    %v2336 = vunpack.c.l.b16 %v2257
    %v2337 = vunpack.c.h.b16 %v2257
    %v2338 = vunpack.c.l.b16 %v2258
    %v2339 = vunpack.c.h.b16 %v2258
    %v2340 = vunpack.c.l.b16 %v2259
    %v2341 = vunpack.c.h.b16 %v2259
    %v2342 = vunpack.c.l.b16 %v2260
    %v2343 = vunpack.c.h.b16 %v2260
    %v2344 = vunpack.c.l.b16 %v2261
    %v2345 = vunpack.c.h.b16 %v2261
    %v2346 = vunpack.c.l.b16 %v2262
    %v2347 = vunpack.c.h.b16 %v2262
    %v2348 = vunpack.c.l.b16 %v2263
    %v2349 = vunpack.c.h.b16 %v2263
    %v2350 = vunpack.c.l.b16 %v2264
    %v2351 = vunpack.c.h.b16 %v2264
    %v2352 = vunpack.c.l.b16 %v2265
    %v2353 = vunpack.c.h.b16 %v2265
    %v2354 = vunpack.c.l.b16 %v2266
    %v2355 = vunpack.c.h.b16 %v2266
    %v2356 = vunpack.c.l.b16 %v2267
    %v2357 = vunpack.c.h.b16 %v2267
    %v2358 = vunpack.c.l.b16 %v2268
    %v2359 = vunpack.c.h.b16 %v2268
    %v2360 = vunpack.c.l.b16 %v2269
    %v2361 = vunpack.c.h.b16 %v2269
    %v2362 = vunpack.c.l.b16 %v2270
    %v2363 = vunpack.c.h.b16 %v2270
    %v2364 = vunpack.c.l.b16 %v2271
    %v2365 = vunpack.c.h.b16 %v2271
    %v2366 = vunpack.c.l.b16 %v2272
    %v2367 = vunpack.c.h.b16 %v2272
    %v2368 = vunpack.c.l.b16 %v2273
    %v2369 = vunpack.c.h.b16 %v2273
    %v2370 = vpack.c.b16 %v2308, %v2306
    %v2371 = vpack.c.b16 %v2309, %v2307
    %v2372 = vpack.c.b16 %v2312, %v2310
    %v2373 = vpack.c.b16 %v2313, %v2311
    %v2374 = vpack.c.b16 %v2316, %v2314
    %v2375 = vpack.c.b16 %v2317, %v2315
    %v2376 = vpack.c.b16 %v2320, %v2318
    %v2377 = vpack.c.b16 %v2321, %v2319
    %v2378 = vpack.c.b16 %v2324, %v2322
    %v2379 = vpack.c.b16 %v2325, %v2323
    %v2380 = vpack.c.b16 %v2328, %v2326
    %v2381 = vpack.c.b16 %v2329, %v2327
    %v2382 = vpack.c.b16 %v2332, %v2330
    %v2383 = vpack.c.b16 %v2333, %v2331
    %v2384 = vpack.c.b16 %v2336, %v2334
    %v2385 = vpack.c.b16 %v2337, %v2335
    %v2386 = vpack.c.b16 %v2340, %v2338
    %v2387 = vpack.c.b16 %v2341, %v2339
    %v2388 = vpack.c.b16 %v2344, %v2342
    %v2389 = vpack.c.b16 %v2345, %v2343
    %v2390 = vpack.c.b16 %v2348, %v2346
    %v2391 = vpack.c.b16 %v2349, %v2347
    %v2392 = vpack.c.b16 %v2352, %v2350
    %v2393 = vpack.c.b16 %v2353, %v2351
    %v2394 = vpack.c.b16 %v2356, %v2354
    %v2395 = vpack.c.b16 %v2357, %v2355
    %v2396 = vpack.c.b16 %v2360, %v2358
    %v2397 = vpack.c.b16 %v2361, %v2359
    %v2398 = vpack.c.b16 %v2364, %v2362
    %v2399 = vpack.c.b16 %v2365, %v2363
    %v2400 = vpack.c.b16 %v2368, %v2366
    %v2401 = vpack.c.b16 %v2369, %v2367
    %2434 = vmatprep.subr.bf16.mxu0 %v2371
    %2435 = vmatpush1.bf16.msra.mxu0 %v2370
    %2436 = vmatprep.subr.bf16.mxu0 %v2373
    %2437 = vmatpush1.bf16.msra.mxu0 %v2372
    %2438 = vmatprep.subr.bf16.mxu0 %v2375
    %2439 = vmatpush1.bf16.msra.mxu0 %v2374
    %2440 = vmatprep.subr.bf16.mxu0 %v2377
    %2441 = vmatpush1.bf16.msra.mxu0 %v2376
    %2442 = vmatprep.subr.bf16.mxu0 %v2379
    %2443 = vmatpush1.bf16.msra.mxu0 %v2378
    %2444 = vmatprep.subr.bf16.mxu0 %v2381
    %2445 = vmatpush1.bf16.msra.mxu0 %v2380
    %2446 = vmatprep.subr.bf16.mxu0 %v2383
    %2447 = vmatpush1.bf16.msra.mxu0 %v2382
    %2448 = vmatprep.subr.bf16.mxu0 %v2385
    %2449 = vmatpush1.bf16.msra.mxu0 %v2384
    %2450 = vmatprep.subr.bf16.mxu0 %v2387
    %2451 = vmatpush1.bf16.msra.mxu0 %v2386
    %2452 = vmatprep.subr.bf16.mxu0 %v2389
    %2453 = vmatpush1.bf16.msra.mxu0 %v2388
    %2454 = vmatprep.subr.bf16.mxu0 %v2391
    %2455 = vmatpush1.bf16.msra.mxu0 %v2390
    %2456 = vmatprep.subr.bf16.mxu0 %v2393
    %2457 = vmatpush1.bf16.msra.mxu0 %v2392
    %2458 = vmatprep.subr.bf16.mxu0 %v2395
    %2459 = vmatpush1.bf16.msra.mxu0 %v2394
    %2460 = vmatprep.subr.bf16.mxu0 %v2397
    %2461 = vmatpush1.bf16.msra.mxu0 %v2396
    %2462 = vmatprep.subr.bf16.mxu0 %v2399
    %2463 = vmatpush1.bf16.msra.mxu0 %v2398
    %2464 = vmatprep.subr.bf16.mxu0 %v2401
    %2465 = vmatpush1.bf16.msra.mxu0 %v2400
    %2466 = vmatprep.mubr.bf16.mxu0 %v2241
    %2467 = vmatmul.mubr.bf16.gmra.mrb[0].mxu0 %v2240
    %v2468 = vpop.f32.mrb[0].mxu0
    %v2469 = vadd.f32 0.0, %v2468
    %v2470 = vpop.f32.mrb[0].mxu0
    %v2471 = vadd.f32 0.0, %v2470
    %v2472 = vpop.f32.mrb[0].mxu0
    %v2473 = vpop.f32.mrb[0].mxu0
    %2474 = vdwg.mxu0
    %v2475 = vsel %vm1737, %v2469, 0.0
    %v2476 = vrot.slane %v2475, 4
    %v2477 = vadd.f32 %v2475, %v2476
    %v2478 = vrot.slane %v2477, 2
    %v2479 = vadd.f32 %v2477, %v2478
    %v2480 = vrot.slane %v2479, 1
    %v2481 = vadd.f32 %v2479, %v2480
    %v2482 = vsel %vm1737, %v2471, 0.0
    %v2483 = vrot.slane %v2482, 4
    %v2484 = vadd.f32 %v2482, %v2483
    %v2485 = vrot.slane %v2484, 2
    %v2486 = vadd.f32 %v2484, %v2485
    %v2487 = vrot.slane %v2486, 1
    %v2488 = vadd.f32 %v2486, %v2487
    %v2489 = vmul.f32 %v2481, 0.5
    %v2490 = vmul.f32 %v2488, 0.5
    %v2491 = vmul.f32 %v2469, %v2469
    %v2492 = vmul.f32 %v2471, %v2471
    %v2493 = vsel %vm1737, %v2491, 0.0
    %v2494 = vrot.slane %v2493, 4
    %v2495 = vadd.f32 %v2493, %v2494
    %v2496 = vrot.slane %v2495, 2
    %v2497 = vadd.f32 %v2495, %v2496
    %v2498 = vrot.slane %v2497, 1
    %v2499 = vadd.f32 %v2497, %v2498
    %v2500 = vsel %vm1737, %v2492, 0.0
    %v2501 = vrot.slane %v2500, 4
    %v2502 = vadd.f32 %v2500, %v2501
    %v2503 = vrot.slane %v2502, 2
    %v2504 = vadd.f32 %v2502, %v2503
    %v2505 = vrot.slane %v2504, 1
    %v2506 = vadd.f32 %v2504, %v2505
    %v2507 = vmul.f32 %v2499, 0.5
    %v2508 = vmul.f32 %v2506, 0.5
    %v2509 = vmul.f32 %v2489, %v2489
    %v2510 = vmul.f32 %v2490, %v2490
    %v2511 = vsub.f32 %v2507, %v2509
    %v2512 = vsub.f32 %v2508, %v2510
    %v2513 = vmax.f32 %v2511, 0.0
    %v2514 = vmax.f32 %v2512, 0.0
    %v2517 = vrot.slane %v2469, 2
    %v2518 = vrot.slane %v2471, 2
    %v2521 = vsel %vm1737, %v2517, 0.0
    %v2522 = vrot.slane %v2521, 4
    %v2523 = vadd.f32 %v2521, %v2522
    %v2524 = vrot.slane %v2523, 2
    %v2525 = vadd.f32 %v2523, %v2524
    %v2526 = vrot.slane %v2525, 1
    %v2527 = vadd.f32 %v2525, %v2526
    %v2528 = vsel %vm1737, %v2518, 0.0
    %v2529 = vrot.slane %v2528, 4
    %v2530 = vadd.f32 %v2528, %v2529
    %v2531 = vrot.slane %v2530, 2
    %v2532 = vadd.f32 %v2530, %v2531
    %v2533 = vrot.slane %v2532, 1
    %v2534 = vadd.f32 %v2532, %v2533
    %v2535 = vmul.f32 %v2527, 0.5
    %v2536 = vmul.f32 %v2534, 0.5
    %v2539 = vrot.slane %v2491, 2
    %v2540 = vrot.slane %v2492, 2
    %v2543 = vsel %vm1737, %v2539, 0.0
    %v2544 = vrot.slane %v2543, 4
    %v2545 = vadd.f32 %v2543, %v2544
    %v2546 = vrot.slane %v2545, 2
    %v2547 = vadd.f32 %v2545, %v2546
    %v2548 = vrot.slane %v2547, 1
    %v2549 = vadd.f32 %v2547, %v2548
    %v2550 = vsel %vm1737, %v2540, 0.0
    %v2551 = vrot.slane %v2550, 4
    %v2552 = vadd.f32 %v2550, %v2551
    %v2553 = vrot.slane %v2552, 2
    %v2554 = vadd.f32 %v2552, %v2553
    %v2555 = vrot.slane %v2554, 1
    %v2556 = vadd.f32 %v2554, %v2555
    %v2557 = vmul.f32 %v2549, 0.5
    %v2558 = vmul.f32 %v2556, 0.5
    %v2559 = vmul.f32 %v2535, %v2535
    %v2560 = vmul.f32 %v2536, %v2536
    %v2561 = vsub.f32 %v2557, %v2559
    %v2562 = vsub.f32 %v2558, %v2560
    %v2563 = vmax.f32 %v2561, 0.0
    %v2564 = vmax.f32 %v2562, 0.0
    %v2565 = vsel %vm1832, %v2535, %v2489
    %v2566 = vsel %vm1832, %v2536, %v2490
    %v2567 = vsel %vm1832, %v2563, %v2513
    %v2568 = vsel %vm1832, %v2564, %v2514
    %v2569 = vadd.f32 %v2567, 1e-05
    %v2570 = vadd.f32 %v2568, 1e-05
    %v2571 = vrsqrt.pop %v2569
    %v2572 = vrsqrt.pop %v2570
    %v2573 = vsub.f32 %v2469, %v2565
    %v2574 = vsub.f32 %v2471, %v2566
    %v2575 = vmul.f32 %v2573, %v2571
    %v2576 = vmul.f32 %v2574, %v2572
    %v2577 = vpack.c.bf16 %v2575, %v2575
    %v2578 = vpack.c.bf16 %v2576, %v2576
    %v2581 = vcombine.low %v2577, %v2578
    %v2583 = vunpack.c.l.s4 1983009808
    %v2584 = vunpack.c.0.s8 %v2583
    %v2585 = vlaneseq
    %v2586 = vshrl.u32 %v2585, 7
    %v2587 = vsub.s32 %v2584, %v2586
    %v2588 = vrot.slane %v2581, %v2587
    %2590 = vst [vmem:[%s19] sm:$0xf] %v2588
    %v2591 = vld [vmem:[#allocation10] sm:$0xff]
    %v2592 = vld [vmem:[#allocation10 + $0x8] sm:$0xff]
    %v2593 = vld [vmem:[#allocation10 + $0x10] sm:$0xff]
    %v2594 = vld [vmem:[#allocation10 + $0x18] sm:$0xff]
    %v2595 = vld [vmem:[#allocation10 + $0x20] sm:$0xff]
    %v2596 = vld [vmem:[#allocation10 + $0x28] sm:$0xff]
    %v2597 = vld [vmem:[#allocation10 + $0x30] sm:$0xff]
    %v2598 = vld [vmem:[#allocation10 + $0x38] sm:$0xff]
    %v2599 = vld [vmem:[#allocation10 + $0x40] sm:$0xff]
    %v2600 = vld [vmem:[#allocation10 + $0x48] sm:$0xff]
    %v2601 = vld [vmem:[#allocation10 + $0x50] sm:$0xff]
    %v2602 = vld [vmem:[#allocation10 + $0x58] sm:$0xff]
    %v2603 = vld [vmem:[#allocation10 + $0x60] sm:$0xff]
    %v2604 = vld [vmem:[#allocation10 + $0x68] sm:$0xff]
    %v2605 = vld [vmem:[#allocation10 + $0x70] sm:$0xff]
    %v2606 = vld [vmem:[#allocation10 + $0x78] sm:$0xff]
    %v2607 = vld [vmem:[#allocation10 + $0x80] sm:$0xff]
    %v2608 = vld [vmem:[#allocation10 + $0x88] sm:$0xff]
    %v2609 = vld [vmem:[#allocation10 + $0x90] sm:$0xff]
    %v2610 = vld [vmem:[#allocation10 + $0x98] sm:$0xff]
    %v2611 = vld [vmem:[#allocation10 + $0xa0] sm:$0xff]
    %v2612 = vld [vmem:[#allocation10 + $0xa8] sm:$0xff]
    %v2613 = vld [vmem:[#allocation10 + $0xb0] sm:$0xff]
    %v2614 = vld [vmem:[#allocation10 + $0xb8] sm:$0xff]
    %v2615 = vld [vmem:[#allocation10 + $0xc0] sm:$0xff]
    %v2616 = vld [vmem:[#allocation10 + $0xc8] sm:$0xff]
    %v2617 = vld [vmem:[#allocation10 + $0xd0] sm:$0xff]
    %v2618 = vld [vmem:[#allocation10 + $0xd8] sm:$0xff]
    %v2619 = vld [vmem:[#allocation10 + $0xe0] sm:$0xff]
    %v2620 = vld [vmem:[#allocation10 + $0xe8] sm:$0xff]
    %v2621 = vld [vmem:[#allocation10 + $0xf0] sm:$0xff]
    %v2622 = vld [vmem:[#allocation10 + $0xf8] sm:$0xff]
    %v2655 = vunpack.c.l.b16 %v2591
    %v2656 = vunpack.c.h.b16 %v2591
    %v2657 = vunpack.c.l.b16 %v2592
    %v2658 = vunpack.c.h.b16 %v2592
    %v2659 = vunpack.c.l.b16 %v2593
    %v2660 = vunpack.c.h.b16 %v2593
    %v2661 = vunpack.c.l.b16 %v2594
    %v2662 = vunpack.c.h.b16 %v2594
    %v2663 = vunpack.c.l.b16 %v2595
    %v2664 = vunpack.c.h.b16 %v2595
    %v2665 = vunpack.c.l.b16 %v2596
    %v2666 = vunpack.c.h.b16 %v2596
    %v2667 = vunpack.c.l.b16 %v2597
    %v2668 = vunpack.c.h.b16 %v2597
    %v2669 = vunpack.c.l.b16 %v2598
    %v2670 = vunpack.c.h.b16 %v2598
    %v2671 = vunpack.c.l.b16 %v2599
    %v2672 = vunpack.c.h.b16 %v2599
    %v2673 = vunpack.c.l.b16 %v2600
    %v2674 = vunpack.c.h.b16 %v2600
    %v2675 = vunpack.c.l.b16 %v2601
    %v2676 = vunpack.c.h.b16 %v2601
    %v2677 = vunpack.c.l.b16 %v2602
    %v2678 = vunpack.c.h.b16 %v2602
    %v2679 = vunpack.c.l.b16 %v2603
    %v2680 = vunpack.c.h.b16 %v2603
    %v2681 = vunpack.c.l.b16 %v2604
    %v2682 = vunpack.c.h.b16 %v2604
    %v2683 = vunpack.c.l.b16 %v2605
    %v2684 = vunpack.c.h.b16 %v2605
    %v2685 = vunpack.c.l.b16 %v2606
    %v2686 = vunpack.c.h.b16 %v2606
    %v2687 = vunpack.c.l.b16 %v2607
    %v2688 = vunpack.c.h.b16 %v2607
    %v2689 = vunpack.c.l.b16 %v2608
    %v2690 = vunpack.c.h.b16 %v2608
    %v2691 = vunpack.c.l.b16 %v2609
    %v2692 = vunpack.c.h.b16 %v2609
    %v2693 = vunpack.c.l.b16 %v2610
    %v2694 = vunpack.c.h.b16 %v2610
    %v2695 = vunpack.c.l.b16 %v2611
    %v2696 = vunpack.c.h.b16 %v2611
    %v2697 = vunpack.c.l.b16 %v2612
    %v2698 = vunpack.c.h.b16 %v2612
    %v2699 = vunpack.c.l.b16 %v2613
    %v2700 = vunpack.c.h.b16 %v2613
    %v2701 = vunpack.c.l.b16 %v2614
    %v2702 = vunpack.c.h.b16 %v2614
    %v2703 = vunpack.c.l.b16 %v2615
    %v2704 = vunpack.c.h.b16 %v2615
    %v2705 = vunpack.c.l.b16 %v2616
    %v2706 = vunpack.c.h.b16 %v2616
    %v2707 = vunpack.c.l.b16 %v2617
    %v2708 = vunpack.c.h.b16 %v2617
    %v2709 = vunpack.c.l.b16 %v2618
    %v2710 = vunpack.c.h.b16 %v2618
    %v2711 = vunpack.c.l.b16 %v2619
    %v2712 = vunpack.c.h.b16 %v2619
    %v2713 = vunpack.c.l.b16 %v2620
    %v2714 = vunpack.c.h.b16 %v2620
    %v2715 = vunpack.c.l.b16 %v2621
    %v2716 = vunpack.c.h.b16 %v2621
    %v2717 = vunpack.c.l.b16 %v2622
    %v2718 = vunpack.c.h.b16 %v2622
    %v2719 = vpack.c.b16 %v2657, %v2655
    %v2720 = vpack.c.b16 %v2658, %v2656
    %v2721 = vpack.c.b16 %v2661, %v2659
    %v2722 = vpack.c.b16 %v2662, %v2660
    %v2723 = vpack.c.b16 %v2665, %v2663
    %v2724 = vpack.c.b16 %v2666, %v2664
    %v2725 = vpack.c.b16 %v2669, %v2667
    %v2726 = vpack.c.b16 %v2670, %v2668
    %v2727 = vpack.c.b16 %v2673, %v2671
    %v2728 = vpack.c.b16 %v2674, %v2672
    %v2729 = vpack.c.b16 %v2677, %v2675
    %v2730 = vpack.c.b16 %v2678, %v2676
    %v2731 = vpack.c.b16 %v2681, %v2679
    %v2732 = vpack.c.b16 %v2682, %v2680
    %v2733 = vpack.c.b16 %v2685, %v2683
    %v2734 = vpack.c.b16 %v2686, %v2684
    %v2735 = vpack.c.b16 %v2689, %v2687
    %v2736 = vpack.c.b16 %v2690, %v2688
    %v2737 = vpack.c.b16 %v2693, %v2691
    %v2738 = vpack.c.b16 %v2694, %v2692
    %v2739 = vpack.c.b16 %v2697, %v2695
    %v2740 = vpack.c.b16 %v2698, %v2696
    %v2741 = vpack.c.b16 %v2701, %v2699
    %v2742 = vpack.c.b16 %v2702, %v2700
    %v2743 = vpack.c.b16 %v2705, %v2703
    %v2744 = vpack.c.b16 %v2706, %v2704
    %v2745 = vpack.c.b16 %v2709, %v2707
    %v2746 = vpack.c.b16 %v2710, %v2708
    %v2747 = vpack.c.b16 %v2713, %v2711
    %v2748 = vpack.c.b16 %v2714, %v2712
    %v2749 = vpack.c.b16 %v2717, %v2715
    %v2750 = vpack.c.b16 %v2718, %v2716
    %2783 = vmatprep.subr.bf16.mxu0 %v2720
    %2784 = vmatpush1.bf16.msra.mxu0 %v2719
    %2785 = vmatprep.subr.bf16.mxu0 %v2722
    %2786 = vmatpush1.bf16.msra.mxu0 %v2721
    %2787 = vmatprep.subr.bf16.mxu0 %v2724
    %2788 = vmatpush1.bf16.msra.mxu0 %v2723
    %2789 = vmatprep.subr.bf16.mxu0 %v2726
    %2790 = vmatpush1.bf16.msra.mxu0 %v2725
    %2791 = vmatprep.subr.bf16.mxu0 %v2728
    %2792 = vmatpush1.bf16.msra.mxu0 %v2727
    %2793 = vmatprep.subr.bf16.mxu0 %v2730
    %2794 = vmatpush1.bf16.msra.mxu0 %v2729
    %2795 = vmatprep.subr.bf16.mxu0 %v2732
    %2796 = vmatpush1.bf16.msra.mxu0 %v2731
    %2797 = vmatprep.subr.bf16.mxu0 %v2734
    %2798 = vmatpush1.bf16.msra.mxu0 %v2733
    %2799 = vmatprep.subr.bf16.mxu0 %v2736
    %2800 = vmatpush1.bf16.msra.mxu0 %v2735
    %2801 = vmatprep.subr.bf16.mxu0 %v2738
    %2802 = vmatpush1.bf16.msra.mxu0 %v2737
    %2803 = vmatprep.subr.bf16.mxu0 %v2740
    %2804 = vmatpush1.bf16.msra.mxu0 %v2739
    %2805 = vmatprep.subr.bf16.mxu0 %v2742
    %2806 = vmatpush1.bf16.msra.mxu0 %v2741
    %2807 = vmatprep.subr.bf16.mxu0 %v2744
    %2808 = vmatpush1.bf16.msra.mxu0 %v2743
    %2809 = vmatprep.subr.bf16.mxu0 %v2746
    %2810 = vmatpush1.bf16.msra.mxu0 %v2745
    %2811 = vmatprep.subr.bf16.mxu0 %v2748
    %2812 = vmatpush1.bf16.msra.mxu0 %v2747
    %2813 = vmatprep.subr.bf16.mxu0 %v2750
    %2814 = vmatpush1.bf16.msra.mxu0 %v2749
    %2815 = vmatprep.mubr.bf16.mxu0 %v2578
    %2816 = vmatmul.mubr.bf16.gmra.mrb[0].mxu0 %v2577
    %v2817 = vpop.f32.mrb[0].mxu0
    %v2818 = vadd.f32 0.0, %v2817
    %v2819 = vpop.f32.mrb[0].mxu0
    %v2820 = vadd.f32 0.0, %v2819
    %v2821 = vpop.f32.mrb[0].mxu0
    %v2822 = vpop.f32.mrb[0].mxu0
    %2823 = vdwg.mxu0
    %v2824 = vld [vmem:[%s13] sm:$0x3]
    %v2825 = vld [vmem:[%s14] sm:$0x3]
    %v2826 = vsel %vm1737, %v2818, 0.0
    %v2827 = vrot.slane %v2826, 4
    %v2828 = vadd.f32 %v2826, %v2827
    %v2829 = vrot.slane %v2828, 2
    %v2830 = vadd.f32 %v2828, %v2829
    %v2831 = vrot.slane %v2830, 1
    %v2832 = vadd.f32 %v2830, %v2831
    %v2833 = vsel %vm1737, %v2820, 0.0
    %v2834 = vrot.slane %v2833, 4
    %v2835 = vadd.f32 %v2833, %v2834
    %v2836 = vrot.slane %v2835, 2
    %v2837 = vadd.f32 %v2835, %v2836
    %v2838 = vrot.slane %v2837, 1
    %v2839 = vadd.f32 %v2837, %v2838
    %v2840 = vmul.f32 %v2832, 0.5
    %v2841 = vmul.f32 %v2839, 0.5
    %v2842 = vmul.f32 %v2818, %v2818
    %v2843 = vmul.f32 %v2820, %v2820
    %v2844 = vsel %vm1737, %v2842, 0.0
    %v2845 = vrot.slane %v2844, 4
    %v2846 = vadd.f32 %v2844, %v2845
    %v2847 = vrot.slane %v2846, 2
    %v2848 = vadd.f32 %v2846, %v2847
    %v2849 = vrot.slane %v2848, 1
    %v2850 = vadd.f32 %v2848, %v2849
    %v2851 = vsel %vm1737, %v2843, 0.0
    %v2852 = vrot.slane %v2851, 4
    %v2853 = vadd.f32 %v2851, %v2852
    %v2854 = vrot.slane %v2853, 2
    %v2855 = vadd.f32 %v2853, %v2854
    %v2856 = vrot.slane %v2855, 1
    %v2857 = vadd.f32 %v2855, %v2856
    %v2858 = vmul.f32 %v2850, 0.5
    %v2859 = vmul.f32 %v2857, 0.5
    %v2860 = vmul.f32 %v2840, %v2840
    %v2861 = vmul.f32 %v2841, %v2841
    %v2862 = vsub.f32 %v2858, %v2860
    %v2863 = vsub.f32 %v2859, %v2861
    %v2864 = vmax.f32 %v2862, 0.0
    %v2865 = vmax.f32 %v2863, 0.0
    %v2868 = vrot.slane %v2818, 2
    %v2869 = vrot.slane %v2820, 2
    %v2872 = vsel %vm1737, %v2868, 0.0
    %v2873 = vrot.slane %v2872, 4
    %v2874 = vadd.f32 %v2872, %v2873
    %v2875 = vrot.slane %v2874, 2
    %v2876 = vadd.f32 %v2874, %v2875
    %v2877 = vrot.slane %v2876, 1
    %v2878 = vadd.f32 %v2876, %v2877
    %v2879 = vsel %vm1737, %v2869, 0.0
    %v2880 = vrot.slane %v2879, 4
    %v2881 = vadd.f32 %v2879, %v2880
    %v2882 = vrot.slane %v2881, 2
    %v2883 = vadd.f32 %v2881, %v2882
    %v2884 = vrot.slane %v2883, 1
    %v2885 = vadd.f32 %v2883, %v2884
    %v2886 = vmul.f32 %v2878, 0.5
    %v2887 = vmul.f32 %v2885, 0.5
    %v2890 = vrot.slane %v2842, 2
    %v2891 = vrot.slane %v2843, 2
    %v2894 = vsel %vm1737, %v2890, 0.0
    %v2895 = vrot.slane %v2894, 4
    %v2896 = vadd.f32 %v2894, %v2895
    %v2897 = vrot.slane %v2896, 2
    %v2898 = vadd.f32 %v2896, %v2897
    %v2899 = vrot.slane %v2898, 1
    %v2900 = vadd.f32 %v2898, %v2899
    %v2901 = vsel %vm1737, %v2891, 0.0
    %v2902 = vrot.slane %v2901, 4
    %v2903 = vadd.f32 %v2901, %v2902
    %v2904 = vrot.slane %v2903, 2
    %v2905 = vadd.f32 %v2903, %v2904
    %v2906 = vrot.slane %v2905, 1
    %v2907 = vadd.f32 %v2905, %v2906
    %v2908 = vmul.f32 %v2900, 0.5
    %v2909 = vmul.f32 %v2907, 0.5
    %v2910 = vmul.f32 %v2886, %v2886
    %v2911 = vmul.f32 %v2887, %v2887
    %v2912 = vsub.f32 %v2908, %v2910
    %v2913 = vsub.f32 %v2909, %v2911
    %v2914 = vmax.f32 %v2912, 0.0
    %v2915 = vmax.f32 %v2913, 0.0
    %v2916 = vsel %vm1832, %v2886, %v2840
    %v2917 = vsel %vm1832, %v2887, %v2841
    %v2918 = vsel %vm1832, %v2914, %v2864
    %v2919 = vsel %vm1832, %v2915, %v2865
    %v2920 = vadd.f32 %v2918, 1e-05
    %v2921 = vadd.f32 %v2919, 1e-05
    %v2922 = vrsqrt.pop %v2920
    %v2923 = vrsqrt.pop %v2921
    %v2925 = vlaneseq
    %v2926 = vshrl.u32 %v2925, 7
    %v2927 = vsub.s32 0, %v2926
    %v2928 = vrot.slane %v2824, %v2927
    %v2929 = vlaneseq
    %v2930 = vshrl.u32 %v2929, 7
    %v2931 = vsub.s32 1, %v2930
    %v2932 = vrot.slane %v2824, %v2931
    %v2935 = vmul.f32 %v2922, %v2928
    %v2936 = vmul.f32 %v2923, %v2932
    %v2937 = vsub.f32 %v2818, %v2916
    %v2938 = vsub.f32 %v2820, %v2917
    %v2939 = vmul.f32 %v2937, %v2935
    %v2940 = vmul.f32 %v2938, %v2936
    %v2942 = vlaneseq
    %v2943 = vshrl.u32 %v2942, 7
    %v2944 = vsub.s32 0, %v2943
    %v2945 = vrot.slane %v2825, %v2944
    %v2946 = vlaneseq
    %v2947 = vshrl.u32 %v2946, 7
    %v2948 = vsub.s32 1, %v2947
    %v2949 = vrot.slane %v2825, %v2948
    %v2952 = vadd.f32 %v2939, %v2945
    %v2953 = vadd.f32 %v2940, %v2949
    %v2954 = vmax.f32 %v2952, 0.0
    %v2955 = vmax.f32 %v2953, 0.0
    %v2956 = vpack.c.bf16 %v2954, %v2954
    %v2957 = vpack.c.bf16 %v2955, %v2955
    %v2958 = vld [vmem:[#allocation11] sm:$0xff]
    %v2959 = vld [vmem:[#allocation11 + $0x8] sm:$0xff]
    %v2960 = vld [vmem:[#allocation11 + $0x10] sm:$0xff]
    %v2961 = vld [vmem:[#allocation11 + $0x18] sm:$0xff]
    %v2962 = vld [vmem:[#allocation11 + $0x20] sm:$0xff]
    %v2963 = vld [vmem:[#allocation11 + $0x28] sm:$0xff]
    %v2964 = vld [vmem:[#allocation11 + $0x30] sm:$0xff]
    %v2965 = vld [vmem:[#allocation11 + $0x38] sm:$0xff]
    %v2966 = vld [vmem:[#allocation11 + $0x40] sm:$0xff]
    %v2967 = vld [vmem:[#allocation11 + $0x48] sm:$0xff]
    %v2968 = vld [vmem:[#allocation11 + $0x50] sm:$0xff]
    %v2969 = vld [vmem:[#allocation11 + $0x58] sm:$0xff]
    %v2970 = vld [vmem:[#allocation11 + $0x60] sm:$0xff]
    %v2971 = vld [vmem:[#allocation11 + $0x68] sm:$0xff]
    %v2972 = vld [vmem:[#allocation11 + $0x70] sm:$0xff]
    %v2973 = vld [vmem:[#allocation11 + $0x78] sm:$0xff]
    %v2974 = vld [vmem:[#allocation11 + $0x80] sm:$0xff]
    %v2975 = vld [vmem:[#allocation11 + $0x88] sm:$0xff]
    %v2976 = vld [vmem:[#allocation11 + $0x90] sm:$0xff]
    %v2977 = vld [vmem:[#allocation11 + $0x98] sm:$0xff]
    %v2978 = vld [vmem:[#allocation11 + $0xa0] sm:$0xff]
    %v2979 = vld [vmem:[#allocation11 + $0xa8] sm:$0xff]
    %v2980 = vld [vmem:[#allocation11 + $0xb0] sm:$0xff]
    %v2981 = vld [vmem:[#allocation11 + $0xb8] sm:$0xff]
    %v2982 = vld [vmem:[#allocation11 + $0xc0] sm:$0xff]
    %v2983 = vld [vmem:[#allocation11 + $0xc8] sm:$0xff]
    %v2984 = vld [vmem:[#allocation11 + $0xd0] sm:$0xff]
    %v2985 = vld [vmem:[#allocation11 + $0xd8] sm:$0xff]
    %v2986 = vld [vmem:[#allocation11 + $0xe0] sm:$0xff]
    %v2987 = vld [vmem:[#allocation11 + $0xe8] sm:$0xff]
    %v2988 = vld [vmem:[#allocation11 + $0xf0] sm:$0xff]
    %v2989 = vld [vmem:[#allocation11 + $0xf8] sm:$0xff]
    %v2990 = vld [vmem:[%s16] sm:$0x3]
    %v2992 = vlaneseq
    %v2993 = vshrl.u32 %v2992, 7
    %v2994 = vsub.s32 0, %v2993
    %v2995 = vrot.slane %v2990, %v2994
    %v2996 = vlaneseq
    %v2997 = vshrl.u32 %v2996, 7
    %v2998 = vsub.s32 1, %v2997
    %v2999 = vrot.slane %v2990, %v2998
    %v3034 = vunpack.c.l.b16 %v2958
    %v3035 = vunpack.c.h.b16 %v2958
    %v3036 = vunpack.c.l.b16 %v2959
    %v3037 = vunpack.c.h.b16 %v2959
    %v3038 = vunpack.c.l.b16 %v2960
    %v3039 = vunpack.c.h.b16 %v2960
    %v3040 = vunpack.c.l.b16 %v2961
    %v3041 = vunpack.c.h.b16 %v2961
    %v3042 = vunpack.c.l.b16 %v2962
    %v3043 = vunpack.c.h.b16 %v2962
    %v3044 = vunpack.c.l.b16 %v2963
    %v3045 = vunpack.c.h.b16 %v2963
    %v3046 = vunpack.c.l.b16 %v2964
    %v3047 = vunpack.c.h.b16 %v2964
    %v3048 = vunpack.c.l.b16 %v2965
    %v3049 = vunpack.c.h.b16 %v2965
    %v3050 = vunpack.c.l.b16 %v2966
    %v3051 = vunpack.c.h.b16 %v2966
    %v3052 = vunpack.c.l.b16 %v2967
    %v3053 = vunpack.c.h.b16 %v2967
    %v3054 = vunpack.c.l.b16 %v2968
    %v3055 = vunpack.c.h.b16 %v2968
    %v3056 = vunpack.c.l.b16 %v2969
    %v3057 = vunpack.c.h.b16 %v2969
    %v3058 = vunpack.c.l.b16 %v2970
    %v3059 = vunpack.c.h.b16 %v2970
    %v3060 = vunpack.c.l.b16 %v2971
    %v3061 = vunpack.c.h.b16 %v2971
    %v3062 = vunpack.c.l.b16 %v2972
    %v3063 = vunpack.c.h.b16 %v2972
    %v3064 = vunpack.c.l.b16 %v2973
    %v3065 = vunpack.c.h.b16 %v2973
    %v3066 = vunpack.c.l.b16 %v2974
    %v3067 = vunpack.c.h.b16 %v2974
    %v3068 = vunpack.c.l.b16 %v2975
    %v3069 = vunpack.c.h.b16 %v2975
    %v3070 = vunpack.c.l.b16 %v2976
    %v3071 = vunpack.c.h.b16 %v2976
    %v3072 = vunpack.c.l.b16 %v2977
    %v3073 = vunpack.c.h.b16 %v2977
    %v3074 = vunpack.c.l.b16 %v2978
    %v3075 = vunpack.c.h.b16 %v2978
    %v3076 = vunpack.c.l.b16 %v2979
    %v3077 = vunpack.c.h.b16 %v2979
    %v3078 = vunpack.c.l.b16 %v2980
    %v3079 = vunpack.c.h.b16 %v2980
    %v3080 = vunpack.c.l.b16 %v2981
    %v3081 = vunpack.c.h.b16 %v2981
    %v3082 = vunpack.c.l.b16 %v2982
    %v3083 = vunpack.c.h.b16 %v2982
    %v3084 = vunpack.c.l.b16 %v2983
    %v3085 = vunpack.c.h.b16 %v2983
    %v3086 = vunpack.c.l.b16 %v2984
    %v3087 = vunpack.c.h.b16 %v2984
    %v3088 = vunpack.c.l.b16 %v2985
    %v3089 = vunpack.c.h.b16 %v2985
    %v3090 = vunpack.c.l.b16 %v2986
    %v3091 = vunpack.c.h.b16 %v2986
    %v3092 = vunpack.c.l.b16 %v2987
    %v3093 = vunpack.c.h.b16 %v2987
    %v3094 = vunpack.c.l.b16 %v2988
    %v3095 = vunpack.c.h.b16 %v2988
    %v3096 = vunpack.c.l.b16 %v2989
    %v3097 = vunpack.c.h.b16 %v2989
    %v3098 = vpack.c.b16 %v3036, %v3034
    %v3099 = vpack.c.b16 %v3037, %v3035
    %v3100 = vpack.c.b16 %v3040, %v3038
    %v3101 = vpack.c.b16 %v3041, %v3039
    %v3102 = vpack.c.b16 %v3044, %v3042
    %v3103 = vpack.c.b16 %v3045, %v3043
    %v3104 = vpack.c.b16 %v3048, %v3046
    %v3105 = vpack.c.b16 %v3049, %v3047
    %v3106 = vpack.c.b16 %v3052, %v3050
    %v3107 = vpack.c.b16 %v3053, %v3051
    %v3108 = vpack.c.b16 %v3056, %v3054
    %v3109 = vpack.c.b16 %v3057, %v3055
    %v3110 = vpack.c.b16 %v3060, %v3058
    %v3111 = vpack.c.b16 %v3061, %v3059
    %v3112 = vpack.c.b16 %v3064, %v3062
    %v3113 = vpack.c.b16 %v3065, %v3063
    %v3114 = vpack.c.b16 %v3068, %v3066
    %v3115 = vpack.c.b16 %v3069, %v3067
    %v3116 = vpack.c.b16 %v3072, %v3070
    %v3117 = vpack.c.b16 %v3073, %v3071
    %v3118 = vpack.c.b16 %v3076, %v3074
    %v3119 = vpack.c.b16 %v3077, %v3075
    %v3120 = vpack.c.b16 %v3080, %v3078
    %v3121 = vpack.c.b16 %v3081, %v3079
    %v3122 = vpack.c.b16 %v3084, %v3082
    %v3123 = vpack.c.b16 %v3085, %v3083
    %v3124 = vpack.c.b16 %v3088, %v3086
    %v3125 = vpack.c.b16 %v3089, %v3087
    %v3126 = vpack.c.b16 %v3092, %v3090
    %v3127 = vpack.c.b16 %v3093, %v3091
    %v3128 = vpack.c.b16 %v3096, %v3094
    %v3129 = vpack.c.b16 %v3097, %v3095
    %3162 = vmatprep.subr.bf16.mxu0 %v3099
    %3163 = vmatpush1.bf16.msra.mxu0 %v3098
    %3164 = vmatprep.subr.bf16.mxu0 %v3101
    %3165 = vmatpush1.bf16.msra.mxu0 %v3100
    %3166 = vmatprep.subr.bf16.mxu0 %v3103
    %3167 = vmatpush1.bf16.msra.mxu0 %v3102
    %3168 = vmatprep.subr.bf16.mxu0 %v3105
    %3169 = vmatpush1.bf16.msra.mxu0 %v3104
    %3170 = vmatprep.subr.bf16.mxu0 %v3107
    %3171 = vmatpush1.bf16.msra.mxu0 %v3106
    %3172 = vmatprep.subr.bf16.mxu0 %v3109
    %3173 = vmatpush1.bf16.msra.mxu0 %v3108
    %3174 = vmatprep.subr.bf16.mxu0 %v3111
    %3175 = vmatpush1.bf16.msra.mxu0 %v3110
    %3176 = vmatprep.subr.bf16.mxu0 %v3113
    %3177 = vmatpush1.bf16.msra.mxu0 %v3112
    %3178 = vmatprep.subr.bf16.mxu0 %v3115
    %3179 = vmatpush1.bf16.msra.mxu0 %v3114
    %3180 = vmatprep.subr.bf16.mxu0 %v3117
    %3181 = vmatpush1.bf16.msra.mxu0 %v3116
    %3182 = vmatprep.subr.bf16.mxu0 %v3119
    %3183 = vmatpush1.bf16.msra.mxu0 %v3118
    %3184 = vmatprep.subr.bf16.mxu0 %v3121
    %3185 = vmatpush1.bf16.msra.mxu0 %v3120
    %3186 = vmatprep.subr.bf16.mxu0 %v3123
    %3187 = vmatpush1.bf16.msra.mxu0 %v3122
    %3188 = vmatprep.subr.bf16.mxu0 %v3125
    %3189 = vmatpush1.bf16.msra.mxu0 %v3124
    %3190 = vmatprep.subr.bf16.mxu0 %v3127
    %3191 = vmatpush1.bf16.msra.mxu0 %v3126
    %3192 = vmatprep.subr.bf16.mxu0 %v3129
    %3193 = vmatpush1.bf16.msra.mxu0 %v3128
    %3194 = vmatprep.mubr.bf16.mxu0 %v2957
    %3195 = vmatmul.mubr.bf16.gmra.mrb[0].mxu0 %v2956
    %v3196 = vpop.f32.mrb[0].mxu0
    %v3197 = vadd.f32 %v2995, %v3196
    %v3198 = vpop.f32.mrb[0].mxu0
    %v3199 = vadd.f32 %v2999, %v3198
    %v3200 = vpop.f32.mrb[0].mxu0
    %v3201 = vpop.f32.mrb[0].mxu0
    %3202 = vdwg.mxu0
    %v3205 = vcombine.low %v3197, %v3199
    %3207 = vst [vmem:[%s18] sm:$0xff] %v3205
    // Predicated region
    $region94: #{simsiam_forward.1} parent=1 // pred_check
      _
    $region95: #{simsiam_forward.1} parent=1 // pred_check_branch
      %3209 = sbr.rel (0) target = $region97
    $region96: #{simsiam_forward.1} parent=1 // pred_region
      _
    $region97: #{simsiam_forward.1} parent=1 // pred_fallthru
      _
    // Predicated region
    $region98: #{simsiam_forward.1} parent=1 // pred_check
      _
    $region99: #{simsiam_forward.1} parent=1 // pred_check_branch
      %3211 = sbr.rel (0) target = $region101
    $region100: #{simsiam_forward.1} parent=1 // pred_region
      _
    $region101: #{simsiam_forward.1} parent=1 // pred_fallthru
      _
    // Predicated region
    $region102: #{simsiam_forward.1} parent=1 // pred_check
      _
    $region103: #{simsiam_forward.1} parent=1 // pred_check_branch
      %3213 = sbr.rel (0) target = $region105
    $region104: #{simsiam_forward.1} parent=1 // pred_region
      _
    $region105: #{simsiam_forward.1} parent=1 // pred_fallthru
      _
    // Predicated region
    $region106: #{simsiam_forward.1} parent=1 // pred_check
      _
    $region107: #{simsiam_forward.1} parent=1 // pred_check_branch
      %3215 = sbr.rel (0) target = $region109
    $region108: #{simsiam_forward.1} parent=1 // pred_region
      _
    $region109: #{simsiam_forward.1} parent=1 // pred_fallthru
      _
    // Predicated region
    $region110: #{simsiam_forward.1} parent=1 // pred_check
      _
    $region111: #{simsiam_forward.1} parent=1 // pred_check_branch
      %3217 = sbr.rel (0) target = $region113
    $region112: #{simsiam_forward.1} parent=1 // pred_region
      _
    $region113: #{simsiam_forward.1} parent=1 // pred_fallthru
      _
    // Predicated region
    $region114: #{simsiam_forward.1} parent=1 // pred_check
      _
    $region115: #{simsiam_forward.1} parent=1 // pred_check_branch
      %3219 = sbr.rel (0) target = $region117
    $region116: #{simsiam_forward.1} parent=1 // pred_region
      _
    $region117: #{simsiam_forward.1} parent=1 // pred_fallthru
      _
    %3220 = vsyncpa [#allocation4], 1
    %3221 = vsyncpa [#allocation6], 1
    %3222 = vsyncpa [#allocation9], 1
    %3223 = vsyncpa [#allocation12], 1

</llo_original>
